<compile_context>
chip_gen: v5e
topology: v5e:2x2
jax: 0.10.0
libtpu: 0.0.40
codegen_flags: <defaults>
</compile_context>

<pallas_src>
import jax
import jax.numpy as jnp
from jax.experimental import pallas as pl
from jax.experimental.pallas import tpu as pltpu


# ----------------------------------------------------------------------------
# Conv (im2col matmul, lane-dense transposed layout) + bias + ReLU
# ----------------------------------------------------------------------------
def conv_kernel(xcolT_ref, w_ref, b_ref, o_ref):
    # xcolT: (27, OH*OW), w: (32, 27), b: (32, 1)  ->  o: (32, OH*OW)
    acc = jnp.dot(w_ref[...], xcolT_ref[...],
                  preferred_element_type=jnp.float32)
    o_ref[...] = jnp.maximum(acc + b_ref[...], 0.0).astype(o_ref.dtype)


def conv_relu(xcolT, w, b):
    # xcolT: (B, C_in*9, OH*OW), w: (C_out, C_in*9), b: (C_out, 1)
    B, K, M = xcolT.shape
    C = w.shape[0]
    return pl.pallas_call(
        conv_kernel,
        out_shape=jax.ShapeDtypeStruct((B, C, M), jnp.float32),
        grid_spec=pltpu.PrefetchScalarGridSpec(
            num_scalar_prefetch=0,
            grid=(B,),
            in_specs=[
                pl.BlockSpec((None, K, M), lambda bi: (bi, 0, 0)),
                pl.BlockSpec((C, K), lambda bi: (0, 0)),
                pl.BlockSpec((C, 1), lambda bi: (0, 0)),
            ],
            out_specs=pl.BlockSpec((None, C, M), lambda bi: (bi, 0, 0)),
        ),
        compiler_params=pltpu.CompilerParams(
            dimension_semantics=("parallel",)),
    )(xcolT, w, b)


# ----------------------------------------------------------------------------
# Fused fc1 (+ReLU) + fc2 kernel, tiled over fc1's contraction dimension
# ----------------------------------------------------------------------------
def fc_kernel(x_ref, w1_ref, b1_ref, w2_ref, b2_ref, o_ref, acc_ref):
    k = pl.program_id(0)

    @pl.when(k == 0)
    def _():
        acc_ref[...] = jnp.zeros_like(acc_ref)

    acc_ref[...] += jnp.dot(x_ref[...], w1_ref[...],
                            preferred_element_type=jnp.float32)

    @pl.when(k == pl.num_programs(0) - 1)
    def _():
        h = jnp.maximum(acc_ref[...] + b1_ref[...], 0.0)                 # fc1 + ReLU
        out = jnp.dot(h, w2_ref[...],
                      preferred_element_type=jnp.float32) + b2_ref[...]  # fc2
        o_ref[...] = out.astype(o_ref.dtype)


def fc_forward(x, w1t, b1, w2t, b2, *, tk=9600):
    B, K = x.shape          # (B, 28800)
    H = w1t.shape[1]        # 128
    N = w2t.shape[1]        # 10
    assert K % tk == 0, (K, tk)
    cost = pl.CostEstimate(
        flops=2 * B * K * H + 2 * B * H * N,
        transcendentals=0,
        bytes_accessed=4 * (B * K + K * H + H + H * N + N + B * N),
    )
    return pl.pallas_call(
        fc_kernel,
        out_shape=jax.ShapeDtypeStruct((B, N), jnp.float32),
        grid_spec=pltpu.PrefetchScalarGridSpec(
            num_scalar_prefetch=0,
            grid=(K // tk,),
            in_specs=[
                pl.BlockSpec((B, tk), lambda k: (0, k)),
                pl.BlockSpec((tk, H), lambda k: (k, 0)),
                pl.BlockSpec((1, H), lambda k: (0, 0)),
                pl.BlockSpec((H, N), lambda k: (0, 0)),
                pl.BlockSpec((1, N), lambda k: (0, 0)),
            ],
            out_specs=pl.BlockSpec((B, N), lambda k: (0, 0)),
            scratch_shapes=[pltpu.VMEM((B, H), jnp.float32)],
        ),
        compiler_params=pltpu.CompilerParams(
            dimension_semantics=("arbitrary",),
            vmem_limit_bytes=32 * 1024 * 1024),
        cost_estimate=cost,
    )(x, w1t, b1, w2t, b2)


# ----------------------------------------------------------------------------
# Full Net forward
# ----------------------------------------------------------------------------
def im2col_3x3_T(x):
    """x: (B, C, H, W) NCHW -> (B, C*9, OH*OW) with row order (c, kh, kw),
    matching conv_w.reshape(C_out, -1)."""
    B, C, H, W = x.shape
    OH, OW = H - 2, W - 2
    rows = []
    for c in range(C):
        for i in range(3):
            for j in range(3):
                rows.append(x[:, c, i:i + OH, j:j + OW].reshape(B, OH * OW))
    return jnp.stack(rows, axis=1), (OH, OW)     # (B, C*9, OH*OW)


def prepare_params(params):
    """One-time (outside the jitted forward) weight re-layout."""
    conv_w, conv_b, fc1_w, fc1_b, fc2_w, fc2_b = params
    return (
        jnp.asarray(conv_w.reshape(32, -1)),     # (32, 27), (c, kh, kw) order
        jnp.asarray(conv_b.reshape(32, 1)),      # (32, 1)
        jnp.asarray(fc1_w.T),                    # (28800, 128)
        jnp.asarray(fc1_b.reshape(1, -1)),       # (1, 128)
        jnp.asarray(fc2_w.T),                    # (128, 10)
        jnp.asarray(fc2_b.reshape(1, -1)),       # (1, 10)
    )


@jax.jit
def net_forward(x, prepared):
    conv_w, conv_b, w1t, b1, w2t, b2 = prepared
    B = x.shape[0]

    # ---- conv1 + ReLU ----
    xcolT, _ = im2col_3x3_T(x)                   # (B, 27, 900)
    y = conv_relu(xcolT, conv_w, conv_b)         # (B, 32, 900)  (c, oh, ow)

    # PyTorch flatten x.view(-1, 32*30*30): (c, oh, ow) is already y's layout,
    # so this is a contiguous reshape (no transpose).
    y = y.reshape(B, -1)                         # (B, 28800)

    # ---- fc1 + ReLU, fc2 (fused) ----
    return fc_forward(y, w1t, b1, w2t, b2)       # (B, 10)


def net_reference(x, params):
    """Pure-JAX reference (same math, no Pallas) for a numerics check."""
    conv_w, conv_b, fc1_w, fc1_b, fc2_w, fc2_b = params
    B = x.shape[0]
    y = jax.lax.conv_general_dilated(
        x, conv_w, window_strides=(1, 1), padding="VALID",
        dimension_numbers=("NCHW", "OIHW", "NCHW"))
    y = jnp.maximum(y + conv_b.reshape(1, -1, 1, 1), 0.0)
    y = y.reshape(B, -1)
    h = jnp.maximum(y @ fc1_w.T + fc1_b, 0.0)
    return h @ fc2_w.T + fc2_b


def init_params(key):
    """Deterministic parameter init matching the PyTorch module's shapes."""
    ks = jax.random.split(key, 6)
    conv_w = jax.random.normal(ks[0], (32, 3, 3, 3), jnp.float32) * 0.1
    conv_b = jax.random.normal(ks[1], (32,), jnp.float32) * 0.1
    fc1_w = jax.random.normal(ks[2], (128, 32 * 30 * 30), jnp.float32) * 0.01
    fc1_b = jax.random.normal(ks[3], (128,), jnp.float32) * 0.1
    fc2_w = jax.random.normal(ks[4], (10, 128), jnp.float32) * 0.1
    fc2_b = jax.random.normal(ks[5], (10,), jnp.float32) * 0.1
    return conv_w, conv_b, fc1_w, fc1_b, fc2_w, fc2_b


if __name__ == "__main__":
    key = jax.random.PRNGKey(0)
    k_x, k_p = jax.random.split(key)
    # Spatial/channel sizes are fixed by fc1's 32*30*30 input: NCHW (B,3,32,32).
    x = jax.random.normal(k_x, (2, 3, 32, 32), jnp.float32)
    params = init_params(k_p)

    prepared = jax.block_until_ready(prepare_params(params))  # one-time re-layout
    out = jax.block_until_ready(net_forward(x, prepared))
    assert out.shape == (2, 10) and out.dtype == jnp.float32

    ref = jax.block_until_ready(net_reference(x, params))
    assert jnp.allclose(out, ref, rtol=1e-4, atol=1e-4), (
        float(jnp.max(jnp.abs(out - ref))))
    print("KERNEL_OK")
</pallas_src>

<mosaic_0001>
module attributes {stable_mosaic.version = 11 : i64} {
  func.func @conv_kernel(%arg0: i32, %arg1: memref<1x27x900xf32, #tpu.memory_space<vmem>>, %arg2: memref<32x27xf32, #tpu.memory_space<vmem>>, %arg3: memref<32x1xf32, #tpu.memory_space<vmem>>, %arg4: memref<1x32x900xf32, #tpu.memory_space<vmem>>) attributes {dimension_semantics = [#tpu.dimension_semantics<parallel>], iteration_bounds = array<i64: 2>, scalar_prefetch = 0 : i64, scratch_operands = 0 : i64, tpu.core_type = #tpu.core_type<tc>, window_params = [{transform_indices = @transform_0, window_bounds = array<i64: 1, 27, 900>}, {pipeline_mode = #tpu.pipeline_mode<synchronous>, transform_indices = @transform_1, window_bounds = array<i64: 32, 27>}, {pipeline_mode = #tpu.pipeline_mode<synchronous>, transform_indices = @transform_2, window_bounds = array<i64: 32, 1>}, {transform_indices = @transform_3, window_bounds = array<i64: 1, 32, 900>}]} {
    %c0 = arith.constant 0 : index
    %c0_0 = arith.constant 0 : index
    %0 = vector.load %arg2[%c0, %c0_0] : memref<32x27xf32, #tpu.memory_space<vmem>>, vector<32x27xf32>
    %c0_1 = arith.constant 0 : index
    %c0_2 = arith.constant 0 : index
    %c0_3 = arith.constant 0 : index
    %1 = vector.load %arg1[%c0_1, %c0_2, %c0_3] : memref<1x27x900xf32, #tpu.memory_space<vmem>>, vector<1x27x900xf32>
    %2 = vector.shape_cast %1 : vector<1x27x900xf32> to vector<27x900xf32>
    %cst = arith.constant dense<0.000000e+00> : vector<32x900xf32>
    %3 = tpu.matmul %0, %2, %cst {dimension_numbers = #tpu.dot_dimension_numbers<[1], [0], [0], [1], [0, 0, 1, 1], [], []>} : vector<32x27xf32>, vector<27x900xf32>, vector<32x900xf32> -> vector<32x900xf32>
    %c0_4 = arith.constant 0 : index
    %c0_5 = arith.constant 0 : index
    %4 = vector.load %arg3[%c0_4, %c0_5] : memref<32x1xf32, #tpu.memory_space<vmem>>, vector<32x1xf32>
    %5 = vector.broadcast %4 : vector<32x1xf32> to vector<32x900xf32>
    %6 = arith.addf %3, %5 : vector<32x900xf32>
    %cst_6 = arith.constant 0.000000e+00 : f32
    %7 = vector.broadcast %cst_6 : f32 to vector<32x900xf32>
    %8 = arith.maximumf %6, %7 : vector<32x900xf32>
    %c0_7 = arith.constant 0 : index
    %c0_8 = arith.constant 0 : index
    %c0_9 = arith.constant 0 : index
    %9 = vector.load %arg4[%c0_7, %c0_8, %c0_9] : memref<1x32x900xf32, #tpu.memory_space<vmem>>, vector<1x32x900xf32>
    %10 = vector.shape_cast %9 : vector<1x32x900xf32> to vector<32x900xf32>
    %11 = vector.shape_cast %8 : vector<32x900xf32> to vector<1x32x900xf32>
    tpu.vector_store %arg4[%c0_7, %c0_8, %c0_9], %11 {strides = array<i32>} : memref<1x32x900xf32, #tpu.memory_space<vmem>>, vector<1x32x900xf32>,
    return
  }
  func.func @transform_0(%arg0: i32) -> (i32, i32, i32) {
    %c0_i32 = arith.constant 0 : i32
    %c0_i32_0 = arith.constant 0 : i32
    %c0_i32_1 = arith.constant 0 : i32
    return %arg0, %c0_i32, %c0_i32_0 : i32, i32, i32
  }
  func.func @transform_1(%arg0: i32) -> (i32, i32) {
    %c0_i32 = arith.constant 0 : i32
    %c0_i32_0 = arith.constant 0 : i32
    %c0_i32_1 = arith.constant 0 : i32
    return %c0_i32, %c0_i32_0 : i32, i32
  }
  func.func @transform_2(%arg0: i32) -> (i32, i32) {
    %c0_i32 = arith.constant 0 : i32
    %c0_i32_0 = arith.constant 0 : i32
    %c0_i32_1 = arith.constant 0 : i32
    return %c0_i32, %c0_i32_0 : i32, i32
  }
  func.func @transform_3(%arg0: i32) -> (i32, i32, i32) {
    %c0_i32 = arith.constant 0 : i32
    %c0_i32_0 = arith.constant 0 : i32
    %c0_i32_1 = arith.constant 0 : i32
    return %arg0, %c0_i32, %c0_i32_0 : i32, i32, i32
  }
}

module attributes {stable_mosaic.version = 11 : i64} {
  func.func @fc_kernel(%arg0: i32, %arg1: memref<2x9600xf32, #tpu.memory_space<vmem>>, %arg2: memref<9600x128xf32, #tpu.memory_space<vmem>>, %arg3: memref<1x128xf32, #tpu.memory_space<vmem>>, %arg4: memref<128x10xf32, #tpu.memory_space<vmem>>, %arg5: memref<1x10xf32, #tpu.memory_space<vmem>>, %arg6: memref<2x10xf32, #tpu.memory_space<vmem>>, %arg7: memref<2x128xf32, #tpu.memory_space<vmem>>) attributes {dimension_semantics = [#tpu.dimension_semantics<arbitrary>], iteration_bounds = array<i64: 3>, scalar_prefetch = 0 : i64, scratch_operands = 1 : i64, tpu.core_type = #tpu.core_type<tc>, window_params = [{transform_indices = @transform_0, window_bounds = array<i64: 2, 9600>}, {transform_indices = @transform_1, window_bounds = array<i64: 9600, 128>}, {pipeline_mode = #tpu.pipeline_mode<synchronous>, transform_indices = @transform_2, window_bounds = array<i64: 1, 128>}, {pipeline_mode = #tpu.pipeline_mode<synchronous>, transform_indices = @transform_3, window_bounds = array<i64: 128, 10>}, {pipeline_mode = #tpu.pipeline_mode<synchronous>, transform_indices = @transform_4, window_bounds = array<i64: 1, 10>}, {pipeline_mode = #tpu.pipeline_mode<synchronous>, transform_indices = @transform_5, window_bounds = array<i64: 2, 10>}]} {
    %c0_i32 = arith.constant 0 : i32
    %0 = arith.cmpi eq, %arg0, %c0_i32 : i32
    %1 = arith.extui %0 : i1 to i32
    %c0_i32_0 = arith.constant 0 : i32
    %2 = arith.cmpi ne, %1, %c0_i32_0 : i32
    scf.if %2 {
      %cst_9 = arith.constant 0.000000e+00 : f32
      %12 = vector.broadcast %cst_9 : f32 to vector<2x128xf32>
      %c0_10 = arith.constant 0 : index
      %c0_11 = arith.constant 0 : index
      %13 = vector.load %arg7[%c0_10, %c0_11] : memref<2x128xf32, #tpu.memory_space<vmem>>, vector<2x128xf32>
      tpu.vector_store %arg7[%c0_10, %c0_11], %12 {strides = array<i32>} : memref<2x128xf32, #tpu.memory_space<vmem>>, vector<2x128xf32>,
    } else {
    }
    %c0 = arith.constant 0 : index
    %c0_1 = arith.constant 0 : index
    %3 = vector.load %arg7[%c0, %c0_1] : memref<2x128xf32, #tpu.memory_space<vmem>>, vector<2x128xf32>
    %c0_2 = arith.constant 0 : index
    %c0_3 = arith.constant 0 : index
    %4 = vector.load %arg1[%c0_2, %c0_3] : memref<2x9600xf32, #tpu.memory_space<vmem>>, vector<2x9600xf32>
    %c0_4 = arith.constant 0 : index
    %c0_5 = arith.constant 0 : index
    %5 = vector.load %arg2[%c0_4, %c0_5] : memref<9600x128xf32, #tpu.memory_space<vmem>>, vector<9600x128xf32>
    %cst = arith.constant dense<0.000000e+00> : vector<2x128xf32>
    %6 = tpu.matmul %4, %5, %cst {dimension_numbers = #tpu.dot_dimension_numbers<[1], [0], [0], [1], [0, 0, 1, 1], [], []>} : vector<2x9600xf32>, vector<9600x128xf32>, vector<2x128xf32> -> vector<2x128xf32>
    %7 = arith.addf %3, %6 : vector<2x128xf32>
    %c0_6 = arith.constant 0 : index
    %c0_7 = arith.constant 0 : index
    %8 = vector.load %arg7[%c0_6, %c0_7] : memref<2x128xf32, #tpu.memory_space<vmem>>, vector<2x128xf32>
    tpu.vector_store %arg7[%c0_6, %c0_7], %7 {strides = array<i32>} : memref<2x128xf32, #tpu.memory_space<vmem>>, vector<2x128xf32>,
    %c2_i32 = arith.constant 2 : i32
    %9 = arith.cmpi eq, %arg0, %c2_i32 : i32
    %10 = arith.extui %9 : i1 to i32
    %c0_i32_8 = arith.constant 0 : i32
    %11 = arith.cmpi ne, %10, %c0_i32_8 : i32
    scf.if %11 {
      %c0_9 = arith.constant 0 : index
      %c0_10 = arith.constant 0 : index
      %12 = vector.load %arg7[%c0_9, %c0_10] : memref<2x128xf32, #tpu.memory_space<vmem>>, vector<2x128xf32>
      %c0_11 = arith.constant 0 : index
      %c0_12 = arith.constant 0 : index
      %13 = vector.load %arg3[%c0_11, %c0_12] : memref<1x128xf32, #tpu.memory_space<vmem>>, vector<1x128xf32>
      %14 = vector.broadcast %13 : vector<1x128xf32> to vector<2x128xf32>
      %15 = arith.addf %12, %14 : vector<2x128xf32>
      %cst_13 = arith.constant 0.000000e+00 : f32
      %16 = vector.broadcast %cst_13 : f32 to vector<2x128xf32>
      %17 = arith.maximumf %15, %16 : vector<2x128xf32>
      %c0_14 = arith.constant 0 : index
      %c0_15 = arith.constant 0 : index
      %18 = vector.load %arg4[%c0_14, %c0_15] : memref<128x10xf32, #tpu.memory_space<vmem>>, vector<128x10xf32>
      %cst_16 = arith.constant dense<0.000000e+00> : vector<2x10xf32>
      %19 = tpu.matmul %17, %18, %cst_16 {dimension_numbers = #tpu.dot_dimension_numbers<[1], [0], [0], [1], [0, 0, 1, 1], [], []>} : vector<2x128xf32>, vector<128x10xf32>, vector<2x10xf32> -> vector<2x10xf32>
      %c0_17 = arith.constant 0 : index
      %c0_18 = arith.constant 0 : index
      %20 = vector.load %arg5[%c0_17, %c0_18] : memref<1x10xf32, #tpu.memory_space<vmem>>, vector<1x10xf32>
      %21 = vector.broadcast %20 : vector<1x10xf32> to vector<2x10xf32>
      %22 = arith.addf %19, %21 : vector<2x10xf32>
      %c0_19 = arith.constant 0 : index
      %c0_20 = arith.constant 0 : index
      %23 = vector.load %arg6[%c0_19, %c0_20] : memref<2x10xf32, #tpu.memory_space<vmem>>, vector<2x10xf32>
      tpu.vector_store %arg6[%c0_19, %c0_20], %22 {strides = array<i32>} : memref<2x10xf32, #tpu.memory_space<vmem>>, vector<2x10xf32>,
    } else {
    }
    return
  }
  func.func @transform_0(%arg0: i32) -> (i32, i32) {
    %c0_i32 = arith.constant 0 : i32
    %c0_i32_0 = arith.constant 0 : i32
    return %c0_i32, %arg0 : i32, i32
  }
  func.func @transform_1(%arg0: i32) -> (i32, i32) {
    %c0_i32 = arith.constant 0 : i32
    %c0_i32_0 = arith.constant 0 : i32
    return %arg0, %c0_i32 : i32, i32
  }
  func.func @transform_2(%arg0: i32) -> (i32, i32) {
    %c0_i32 = arith.constant 0 : i32
    %c0_i32_0 = arith.constant 0 : i32
    %c0_i32_1 = arith.constant 0 : i32
    return %c0_i32, %c0_i32_0 : i32, i32
  }
  func.func @transform_3(%arg0: i32) -> (i32, i32) {
    %c0_i32 = arith.constant 0 : i32
    %c0_i32_0 = arith.constant 0 : i32
    %c0_i32_1 = arith.constant 0 : i32
    return %c0_i32, %c0_i32_0 : i32, i32
  }
  func.func @transform_4(%arg0: i32) -> (i32, i32) {
    %c0_i32 = arith.constant 0 : i32
    %c0_i32_0 = arith.constant 0 : i32
    %c0_i32_1 = arith.constant 0 : i32
    return %c0_i32, %c0_i32_0 : i32, i32
  }
  func.func @transform_5(%arg0: i32) -> (i32, i32) {
    %c0_i32 = arith.constant 0 : i32
    %c0_i32_0 = arith.constant 0 : i32
    %c0_i32_1 = arith.constant 0 : i32
    return %c0_i32, %c0_i32_0 : i32, i32
  }
}

</mosaic_0001>

<llo_original>
// kernel: squeeze.35
$region0: #{squeeze.35}
  %s0 = inlined_call_operand.vmem [shape: f32[2,1,30,30], index: 0, kind: input, shape index: {}]
  %s1 = inlined_call_operand.vmem [shape: f32[2,1,900], index: 1, kind: output, shape index: {}]
  $region1: #{squeeze.35} parent=0
    #allocation0 [shape = 'u8[65536]{0}', space=vmem, size = 0x10000, scoped, tag = 'scoped mem for output reshape']
    %v2 = vld [vmem:[%s0] sm:$0x1]
    %s3 = scalar_lea.vmem %s0, 31
    %v4 = vld [vmem:[%s3] sm:$0x2]
    %vm5 = vcmask 1041409
    %v6 = vsel %vm5, %v4, %v2
    %vm7 = vcmask 244736
    %8 = vst.msk [vmem:[#allocation0] sm:$0x1] %vm7, %v6
    %s9 = scalar_lea.vmem [#allocation0], 63
    %10 = vst.msk [vmem:[%s9] sm:$0x2] %vm7, %v6
    %s11 = scalar_lea.vmem %s0, 17
    %v12 = vld [vmem:[%s11] sm:$0x1]
    %s13 = scalar_lea.vmem %s0, 48
    %v14 = vld [vmem:[%s13] sm:$0x2]
    %vm15 = vcmask 1041409
    %v16 = vsel %vm15, %v14, %v12
    %s17 = scalar_lea.vmem %s0, 17
    %v18 = vld [vmem:[%s17] sm:$0x1]
    %s19 = scalar_lea.vmem %s0, 48
    %v20 = vld [vmem:[%s19] sm:$0x2]
    %vm21 = vcmask 1041409
    %v22 = vsel %vm21, %v20, %v18
    %vm23 = vcmask 15360
    %v24 = vsel %vm23, %v22, %v16
    %25 = vrot.lane.b32.xlu0 %v24, 126
    %v26 = vpop.permute.xlu0 %25
    %vm27 = vcmask 228352
    %s28 = scalar_lea.vmem [#allocation0], 32
    %29 = vst.msk [vmem:[%s28] sm:$0x1] %vm27, %v26
    %s30 = scalar_lea.vmem [#allocation0], 95
    %31 = vst.msk [vmem:[%s30] sm:$0x2] %vm27, %v26
    %vm32 = vcmask 1048560
    %s33 = scalar_lea.vmem [#allocation0], 24
    %34 = vst.msk [vmem:[%s33] sm:$0x1] %vm32, %v26
    %s35 = scalar_lea.vmem [#allocation0], 87
    %36 = vst.msk [vmem:[%s35] sm:$0x2] %vm32, %v26
    %s37 = scalar_lea.vmem %s0, 4
    %v38 = vld [vmem:[%s37] sm:$0x1]
    %s39 = scalar_lea.vmem %s0, 35
    %v40 = vld [vmem:[%s39] sm:$0x2]
    %vm41 = vcmask 1041409
    %v42 = vsel %vm41, %v40, %v38
    %s43 = scalar_lea.vmem %s0, 4
    %v44 = vld [vmem:[%s43] sm:$0x1]
    %s45 = scalar_lea.vmem %s0, 35
    %v46 = vld [vmem:[%s45] sm:$0x2]
    %vm47 = vcmask 1041409
    %v48 = vsel %vm47, %v46, %v44
    %vm49 = vcmask 64512
    %v50 = vsel %vm49, %v48, %v42
    %51 = vrot.lane.b32.xlu0 %v50, 120
    %v52 = vpop.permute.xlu0 %51
    %vm53 = vcmask 179200
    %s54 = scalar_lea.vmem [#allocation0], 8
    %55 = vst.msk [vmem:[%s54] sm:$0x1] %vm53, %v52
    %s56 = scalar_lea.vmem [#allocation0], 71
    %57 = vst.msk [vmem:[%s56] sm:$0x2] %vm53, %v52
    %vm58 = vcmask 1048512
    %59 = vst.msk [vmem:[#allocation0] sm:$0x1] %vm58, %v52
    %s60 = scalar_lea.vmem [#allocation0], 63
    %61 = vst.msk [vmem:[%s60] sm:$0x2] %vm58, %v52
    %s62 = scalar_lea.vmem %s0, 21
    %v63 = vld [vmem:[%s62] sm:$0x1]
    %s64 = scalar_lea.vmem %s0, 52
    %v65 = vld [vmem:[%s64] sm:$0x2]
    %vm66 = vcmask 1041409
    %v67 = vsel %vm66, %v65, %v63
    %s68 = scalar_lea.vmem %s0, 21
    %v69 = vld [vmem:[%s68] sm:$0x1]
    %s70 = scalar_lea.vmem %s0, 52
    %v71 = vld [vmem:[%s70] sm:$0x2]
    %vm72 = vcmask 1041409
    %v73 = vsel %vm72, %v71, %v69
    %vm74 = vcmask 80896
    %v75 = vsel %vm74, %v73, %v67
    %76 = vrot.lane.b32.xlu0 %v75, 118
    %v77 = vpop.permute.xlu0 %76
    %vm78 = vcmask 162816
    %s79 = scalar_lea.vmem [#allocation0], 40
    %80 = vst.msk [vmem:[%s79] sm:$0x1] %vm78, %v77
    %s81 = scalar_lea.vmem [#allocation0], 103
    %82 = vst.msk [vmem:[%s81] sm:$0x2] %vm78, %v77
    %vm83 = vcmask 1048496
    %s84 = scalar_lea.vmem [#allocation0], 32
    %85 = vst.msk [vmem:[%s84] sm:$0x1] %vm83, %v77
    %s86 = scalar_lea.vmem [#allocation0], 95
    %87 = vst.msk [vmem:[%s86] sm:$0x2] %vm83, %v77
    %s88 = scalar_lea.vmem %s0, 8
    %v89 = vld [vmem:[%s88] sm:$0x1]
    %s90 = scalar_lea.vmem %s0, 39
    %v91 = vld [vmem:[%s90] sm:$0x2]
    %vm92 = vcmask 1041409
    %v93 = vsel %vm92, %v91, %v89
    %s94 = scalar_lea.vmem %s0, 8
    %v95 = vld [vmem:[%s94] sm:$0x1]
    %s96 = scalar_lea.vmem %s0, 39
    %v97 = vld [vmem:[%s96] sm:$0x2]
    %vm98 = vcmask 1041409
    %v99 = vsel %vm98, %v97, %v95
    %vm100 = vcmask 130048
    %v101 = vsel %vm100, %v99, %v93
    %102 = vrot.lane.b32.xlu0 %v101, 112
    %v103 = vpop.permute.xlu0 %102
    %vm104 = vcmask 113664
    %s105 = scalar_lea.vmem [#allocation0], 16
    %106 = vst.msk [vmem:[%s105] sm:$0x1] %vm104, %v103
    %s107 = scalar_lea.vmem [#allocation0], 79
    %108 = vst.msk [vmem:[%s107] sm:$0x2] %vm104, %v103
    %vm109 = vcmask 1048448
    %s110 = scalar_lea.vmem [#allocation0], 8
    %111 = vst.msk [vmem:[%s110] sm:$0x1] %vm109, %v103
    %s112 = scalar_lea.vmem [#allocation0], 71
    %113 = vst.msk [vmem:[%s112] sm:$0x2] %vm109, %v103
    %s114 = scalar_lea.vmem %s0, 25
    %v115 = vld [vmem:[%s114] sm:$0x1]
    %s116 = scalar_lea.vmem %s0, 56
    %v117 = vld [vmem:[%s116] sm:$0x2]
    %vm118 = vcmask 1041409
    %v119 = vsel %vm118, %v117, %v115
    %s120 = scalar_lea.vmem %s0, 25
    %v121 = vld [vmem:[%s120] sm:$0x1]
    %s122 = scalar_lea.vmem %s0, 56
    %v123 = vld [vmem:[%s122] sm:$0x2]
    %vm124 = vcmask 1041409
    %v125 = vsel %vm124, %v123, %v121
    %vm126 = vcmask 146432
    %v127 = vsel %vm126, %v125, %v119
    %128 = vrot.lane.b32.xlu0 %v127, 110
    %v129 = vpop.permute.xlu0 %128
    %vm130 = vcmask 97280
    %s131 = scalar_lea.vmem [#allocation0], 48
    %132 = vst.msk [vmem:[%s131] sm:$0x1] %vm130, %v129
    %s133 = scalar_lea.vmem [#allocation0], 111
    %134 = vst.msk [vmem:[%s133] sm:$0x2] %vm130, %v129
    %vm135 = vcmask 1048432
    %s136 = scalar_lea.vmem [#allocation0], 40
    %137 = vst.msk [vmem:[%s136] sm:$0x1] %vm135, %v129
    %s138 = scalar_lea.vmem [#allocation0], 103
    %139 = vst.msk [vmem:[%s138] sm:$0x2] %vm135, %v129
    %s140 = scalar_lea.vmem %s0, 12
    %v141 = vld [vmem:[%s140] sm:$0x1]
    %s142 = scalar_lea.vmem %s0, 43
    %v143 = vld [vmem:[%s142] sm:$0x2]
    %vm144 = vcmask 1041409
    %v145 = vsel %vm144, %v143, %v141
    %s146 = scalar_lea.vmem %s0, 12
    %v147 = vld [vmem:[%s146] sm:$0x1]
    %s148 = scalar_lea.vmem %s0, 43
    %v149 = vld [vmem:[%s148] sm:$0x2]
    %vm150 = vcmask 1041409
    %v151 = vsel %vm150, %v149, %v147
    %vm152 = vcmask 195584
    %v153 = vsel %vm152, %v151, %v145
    %154 = vrot.lane.b32.xlu0 %v153, 104
    %v155 = vpop.permute.xlu0 %154
    %vm156 = vcmask 48128
    %s157 = scalar_lea.vmem [#allocation0], 24
    %158 = vst.msk [vmem:[%s157] sm:$0x1] %vm156, %v155
    %s159 = scalar_lea.vmem [#allocation0], 87
    %160 = vst.msk [vmem:[%s159] sm:$0x2] %vm156, %v155
    %vm161 = vcmask 1048384
    %s162 = scalar_lea.vmem [#allocation0], 16
    %163 = vst.msk [vmem:[%s162] sm:$0x1] %vm161, %v155
    %s164 = scalar_lea.vmem [#allocation0], 79
    %165 = vst.msk [vmem:[%s164] sm:$0x2] %vm161, %v155
    %s166 = scalar_lea.vmem %s0, 29
    %v167 = vld [vmem:[%s166] sm:$0x1]
    %s168 = scalar_lea.vmem %s0, 60
    %v169 = vld [vmem:[%s168] sm:$0x2]
    %vm170 = vcmask 1041409
    %v171 = vsel %vm170, %v169, %v167
    %s172 = scalar_lea.vmem %s0, 29
    %v173 = vld [vmem:[%s172] sm:$0x1]
    %s174 = scalar_lea.vmem %s0, 60
    %v175 = vld [vmem:[%s174] sm:$0x2]
    %vm176 = vcmask 1041409
    %v177 = vsel %vm176, %v175, %v173
    %vm178 = vcmask 211968
    %v179 = vsel %vm178, %v177, %v171
    %180 = vrot.lane.b32.xlu0 %v179, 102
    %v181 = vpop.permute.xlu0 %180
    %vm182 = vcmask 31744
    %s183 = scalar_lea.vmem [#allocation0], 56
    %184 = vst.msk [vmem:[%s183] sm:$0x1] %vm182, %v181
    %s185 = scalar_lea.vmem [#allocation0], 119
    %186 = vst.msk [vmem:[%s185] sm:$0x2] %vm182, %v181
    %vm187 = vcmask 1048368
    %s188 = scalar_lea.vmem [#allocation0], 48
    %189 = vst.msk [vmem:[%s188] sm:$0x1] %vm187, %v181
    %s190 = scalar_lea.vmem [#allocation0], 111
    %191 = vst.msk [vmem:[%s190] sm:$0x2] %vm187, %v181
    %s192 = scalar_lea.vmem %s0, 16
    %v193 = vld [vmem:[%s192] sm:$0x1]
    %s194 = scalar_lea.vmem %s0, 47
    %v195 = vld [vmem:[%s194] sm:$0x2]
    %vm196 = vcmask 1041409
    %v197 = vsel %vm196, %v195, %v193
    %198 = vrot.lane.b32.xlu0 %v197, 96
    %v199 = vpop.permute.xlu0 %198
    %vm200 = vcmask 1031936
    %s201 = scalar_lea.vmem [#allocation0], 24
    %202 = vst.msk [vmem:[%s201] sm:$0x1] %vm200, %v199
    %s203 = scalar_lea.vmem [#allocation0], 87
    %204 = vst.msk [vmem:[%s203] sm:$0x2] %vm200, %v199
    %s205 = scalar_lea.vmem %s0, 3
    %v206 = vld [vmem:[%s205] sm:$0x1]
    %s207 = scalar_lea.vmem %s0, 34
    %v208 = vld [vmem:[%s207] sm:$0x2]
    %vm209 = vcmask 1041409
    %v210 = vsel %vm209, %v208, %v206
    %211 = vrot.lane.b32.xlu0 %v210, 90
    %v212 = vpop.permute.xlu0 %211
    %vm213 = vcmask 982736
    %214 = vst.msk [vmem:[#allocation0] sm:$0x1] %vm213, %v212
    %s215 = scalar_lea.vmem [#allocation0], 63
    %216 = vst.msk [vmem:[%s215] sm:$0x2] %vm213, %v212
    %s217 = scalar_lea.vmem %s0, 20
    %v218 = vld [vmem:[%s217] sm:$0x1]
    %s219 = scalar_lea.vmem %s0, 51
    %v220 = vld [vmem:[%s219] sm:$0x2]
    %vm221 = vcmask 1041409
    %v222 = vsel %vm221, %v220, %v218
    %223 = vrot.lane.b32.xlu0 %v222, 88
    %v224 = vpop.permute.xlu0 %223
    %vm225 = vcmask 966336
    %s226 = scalar_lea.vmem [#allocation0], 32
    %227 = vst.msk [vmem:[%s226] sm:$0x1] %vm225, %v224
    %s228 = scalar_lea.vmem [#allocation0], 95
    %229 = vst.msk [vmem:[%s228] sm:$0x2] %vm225, %v224
    %s230 = scalar_lea.vmem %s0, 7
    %v231 = vld [vmem:[%s230] sm:$0x1]
    %s232 = scalar_lea.vmem %s0, 38
    %v233 = vld [vmem:[%s232] sm:$0x2]
    %vm234 = vcmask 1041409
    %v235 = vsel %vm234, %v233, %v231
    %236 = vrot.lane.b32.xlu0 %v235, 82
    %v237 = vpop.permute.xlu0 %236
    %vm238 = vcmask 917136
    %s239 = scalar_lea.vmem [#allocation0], 8
    %240 = vst.msk [vmem:[%s239] sm:$0x1] %vm238, %v237
    %s241 = scalar_lea.vmem [#allocation0], 71
    %242 = vst.msk [vmem:[%s241] sm:$0x2] %vm238, %v237
    %s243 = scalar_lea.vmem %s0, 24
    %v244 = vld [vmem:[%s243] sm:$0x1]
    %s245 = scalar_lea.vmem %s0, 55
    %v246 = vld [vmem:[%s245] sm:$0x2]
    %vm247 = vcmask 1041409
    %v248 = vsel %vm247, %v246, %v244
    %249 = vrot.lane.b32.xlu0 %v248, 80
    %v250 = vpop.permute.xlu0 %249
    %vm251 = vcmask 900736
    %s252 = scalar_lea.vmem [#allocation0], 40
    %253 = vst.msk [vmem:[%s252] sm:$0x1] %vm251, %v250
    %s254 = scalar_lea.vmem [#allocation0], 103
    %255 = vst.msk [vmem:[%s254] sm:$0x2] %vm251, %v250
    %s256 = scalar_lea.vmem %s0, 11
    %v257 = vld [vmem:[%s256] sm:$0x1]
    %s258 = scalar_lea.vmem %s0, 42
    %v259 = vld [vmem:[%s258] sm:$0x2]
    %vm260 = vcmask 1041409
    %v261 = vsel %vm260, %v259, %v257
    %262 = vrot.lane.b32.xlu0 %v261, 74
    %v263 = vpop.permute.xlu0 %262
    %vm264 = vcmask 851536
    %s265 = scalar_lea.vmem [#allocation0], 16
    %266 = vst.msk [vmem:[%s265] sm:$0x1] %vm264, %v263
    %s267 = scalar_lea.vmem [#allocation0], 79
    %268 = vst.msk [vmem:[%s267] sm:$0x2] %vm264, %v263
    %s269 = scalar_lea.vmem %s0, 28
    %v270 = vld [vmem:[%s269] sm:$0x1]
    %s271 = scalar_lea.vmem %s0, 59
    %v272 = vld [vmem:[%s271] sm:$0x2]
    %vm273 = vcmask 1041409
    %v274 = vsel %vm273, %v272, %v270
    %275 = vrot.lane.b32.xlu0 %v274, 72
    %v276 = vpop.permute.xlu0 %275
    %vm277 = vcmask 835136
    %s278 = scalar_lea.vmem [#allocation0], 48
    %279 = vst.msk [vmem:[%s278] sm:$0x1] %vm277, %v276
    %s280 = scalar_lea.vmem [#allocation0], 111
    %281 = vst.msk [vmem:[%s280] sm:$0x2] %vm277, %v276
    %s282 = scalar_lea.vmem %s0, 15
    %v283 = vld [vmem:[%s282] sm:$0x1]
    %s284 = scalar_lea.vmem %s0, 46
    %v285 = vld [vmem:[%s284] sm:$0x2]
    %vm286 = vcmask 1041409
    %v287 = vsel %vm286, %v285, %v283
    %288 = vrot.lane.b32.xlu0 %v287, 66
    %v289 = vpop.permute.xlu0 %288
    %vm290 = vcmask 785936
    %s291 = scalar_lea.vmem [#allocation0], 24
    %292 = vst.msk [vmem:[%s291] sm:$0x1] %vm290, %v289
    %s293 = scalar_lea.vmem [#allocation0], 87
    %294 = vst.msk [vmem:[%s293] sm:$0x2] %vm290, %v289
    %s295 = scalar_lea.vmem %s0, 2
    %v296 = vld [vmem:[%s295] sm:$0x1]
    %s297 = scalar_lea.vmem %s0, 33
    %v298 = vld [vmem:[%s297] sm:$0x2]
    %vm299 = vcmask 1041409
    %v300 = vsel %vm299, %v298, %v296
    %301 = vrot.lane.b32.xlu0 %v300, 60
    %v302 = vpop.permute.xlu0 %301
    %vm303 = vcmask 736736
    %304 = vst.msk [vmem:[#allocation0] sm:$0x1] %vm303, %v302
    %s305 = scalar_lea.vmem [#allocation0], 63
    %306 = vst.msk [vmem:[%s305] sm:$0x2] %vm303, %v302
    %s307 = scalar_lea.vmem %s0, 19
    %v308 = vld [vmem:[%s307] sm:$0x1]
    %s309 = scalar_lea.vmem %s0, 50
    %v310 = vld [vmem:[%s309] sm:$0x2]
    %vm311 = vcmask 1041409
    %v312 = vsel %vm311, %v310, %v308
    %313 = vrot.lane.b32.xlu0 %v312, 58
    %v314 = vpop.permute.xlu0 %313
    %vm315 = vcmask 720336
    %s316 = scalar_lea.vmem [#allocation0], 32
    %317 = vst.msk [vmem:[%s316] sm:$0x1] %vm315, %v314
    %s318 = scalar_lea.vmem [#allocation0], 95
    %319 = vst.msk [vmem:[%s318] sm:$0x2] %vm315, %v314
    %s320 = scalar_lea.vmem %s0, 6
    %v321 = vld [vmem:[%s320] sm:$0x1]
    %s322 = scalar_lea.vmem %s0, 37
    %v323 = vld [vmem:[%s322] sm:$0x2]
    %vm324 = vcmask 1041409
    %v325 = vsel %vm324, %v323, %v321
    %326 = vrot.lane.b32.xlu0 %v325, 52
    %v327 = vpop.permute.xlu0 %326
    %vm328 = vcmask 671136
    %s329 = scalar_lea.vmem [#allocation0], 8
    %330 = vst.msk [vmem:[%s329] sm:$0x1] %vm328, %v327
    %s331 = scalar_lea.vmem [#allocation0], 71
    %332 = vst.msk [vmem:[%s331] sm:$0x2] %vm328, %v327
    %s333 = scalar_lea.vmem %s0, 23
    %v334 = vld [vmem:[%s333] sm:$0x1]
    %s335 = scalar_lea.vmem %s0, 54
    %v336 = vld [vmem:[%s335] sm:$0x2]
    %vm337 = vcmask 1041409
    %v338 = vsel %vm337, %v336, %v334
    %339 = vrot.lane.b32.xlu0 %v338, 50
    %v340 = vpop.permute.xlu0 %339
    %vm341 = vcmask 654736
    %s342 = scalar_lea.vmem [#allocation0], 40
    %343 = vst.msk [vmem:[%s342] sm:$0x1] %vm341, %v340
    %s344 = scalar_lea.vmem [#allocation0], 103
    %345 = vst.msk [vmem:[%s344] sm:$0x2] %vm341, %v340
    %s346 = scalar_lea.vmem %s0, 10
    %v347 = vld [vmem:[%s346] sm:$0x1]
    %s348 = scalar_lea.vmem %s0, 41
    %v349 = vld [vmem:[%s348] sm:$0x2]
    %vm350 = vcmask 1041409
    %v351 = vsel %vm350, %v349, %v347
    %352 = vrot.lane.b32.xlu0 %v351, 44
    %v353 = vpop.permute.xlu0 %352
    %vm354 = vcmask 605536
    %s355 = scalar_lea.vmem [#allocation0], 16
    %356 = vst.msk [vmem:[%s355] sm:$0x1] %vm354, %v353
    %s357 = scalar_lea.vmem [#allocation0], 79
    %358 = vst.msk [vmem:[%s357] sm:$0x2] %vm354, %v353
    %s359 = scalar_lea.vmem %s0, 27
    %v360 = vld [vmem:[%s359] sm:$0x1]
    %s361 = scalar_lea.vmem %s0, 58
    %v362 = vld [vmem:[%s361] sm:$0x2]
    %vm363 = vcmask 1041409
    %v364 = vsel %vm363, %v362, %v360
    %365 = vrot.lane.b32.xlu0 %v364, 42
    %v366 = vpop.permute.xlu0 %365
    %vm367 = vcmask 589136
    %s368 = scalar_lea.vmem [#allocation0], 48
    %369 = vst.msk [vmem:[%s368] sm:$0x1] %vm367, %v366
    %s370 = scalar_lea.vmem [#allocation0], 111
    %371 = vst.msk [vmem:[%s370] sm:$0x2] %vm367, %v366
    %s372 = scalar_lea.vmem %s0, 14
    %v373 = vld [vmem:[%s372] sm:$0x1]
    %s374 = scalar_lea.vmem %s0, 45
    %v375 = vld [vmem:[%s374] sm:$0x2]
    %vm376 = vcmask 1041409
    %v377 = vsel %vm376, %v375, %v373
    %378 = vrot.lane.b32.xlu0 %v377, 36
    %v379 = vpop.permute.xlu0 %378
    %vm380 = vcmask 539936
    %s381 = scalar_lea.vmem [#allocation0], 24
    %382 = vst.msk [vmem:[%s381] sm:$0x1] %vm380, %v379
    %s383 = scalar_lea.vmem [#allocation0], 87
    %384 = vst.msk [vmem:[%s383] sm:$0x2] %vm380, %v379
    %s385 = scalar_lea.vmem %s0, 1
    %v386 = vld [vmem:[%s385] sm:$0x1]
    %s387 = scalar_lea.vmem %s0, 32
    %v388 = vld [vmem:[%s387] sm:$0x2]
    %vm389 = vcmask 1041409
    %v390 = vsel %vm389, %v388, %v386
    %391 = vrot.lane.b32.xlu0 %v390, 30
    %v392 = vpop.permute.xlu0 %391
    %vm393 = vcmask 490736
    %394 = vst.msk [vmem:[#allocation0] sm:$0x1] %vm393, %v392
    %s395 = scalar_lea.vmem [#allocation0], 63
    %396 = vst.msk [vmem:[%s395] sm:$0x2] %vm393, %v392
    %s397 = scalar_lea.vmem %s0, 18
    %v398 = vld [vmem:[%s397] sm:$0x1]
    %s399 = scalar_lea.vmem %s0, 49
    %v400 = vld [vmem:[%s399] sm:$0x2]
    %vm401 = vcmask 1041409
    %v402 = vsel %vm401, %v400, %v398
    %403 = vrot.lane.b32.xlu0 %v402, 28
    %v404 = vpop.permute.xlu0 %403
    %vm405 = vcmask 474336
    %s406 = scalar_lea.vmem [#allocation0], 32
    %407 = vst.msk [vmem:[%s406] sm:$0x1] %vm405, %v404
    %s408 = scalar_lea.vmem [#allocation0], 95
    %409 = vst.msk [vmem:[%s408] sm:$0x2] %vm405, %v404
    %s410 = scalar_lea.vmem %s0, 5
    %v411 = vld [vmem:[%s410] sm:$0x1]
    %s412 = scalar_lea.vmem %s0, 36
    %v413 = vld [vmem:[%s412] sm:$0x2]
    %vm414 = vcmask 1041409
    %v415 = vsel %vm414, %v413, %v411
    %416 = vrot.lane.b32.xlu0 %v415, 22
    %v417 = vpop.permute.xlu0 %416
    %vm418 = vcmask 425136
    %s419 = scalar_lea.vmem [#allocation0], 8
    %420 = vst.msk [vmem:[%s419] sm:$0x1] %vm418, %v417
    %s421 = scalar_lea.vmem [#allocation0], 71
    %422 = vst.msk [vmem:[%s421] sm:$0x2] %vm418, %v417
    %s423 = scalar_lea.vmem %s0, 22
    %v424 = vld [vmem:[%s423] sm:$0x1]
    %s425 = scalar_lea.vmem %s0, 53
    %v426 = vld [vmem:[%s425] sm:$0x2]
    %vm427 = vcmask 1041409
    %v428 = vsel %vm427, %v426, %v424
    %429 = vrot.lane.b32.xlu0 %v428, 20
    %v430 = vpop.permute.xlu0 %429
    %vm431 = vcmask 408736
    %s432 = scalar_lea.vmem [#allocation0], 40
    %433 = vst.msk [vmem:[%s432] sm:$0x1] %vm431, %v430
    %s434 = scalar_lea.vmem [#allocation0], 103
    %435 = vst.msk [vmem:[%s434] sm:$0x2] %vm431, %v430
    %s436 = scalar_lea.vmem %s0, 9
    %v437 = vld [vmem:[%s436] sm:$0x1]
    %s438 = scalar_lea.vmem %s0, 40
    %v439 = vld [vmem:[%s438] sm:$0x2]
    %vm440 = vcmask 1041409
    %v441 = vsel %vm440, %v439, %v437
    %442 = vrot.lane.b32.xlu0 %v441, 14
    %v443 = vpop.permute.xlu0 %442
    %vm444 = vcmask 359536
    %s445 = scalar_lea.vmem [#allocation0], 16
    %446 = vst.msk [vmem:[%s445] sm:$0x1] %vm444, %v443
    %s447 = scalar_lea.vmem [#allocation0], 79
    %448 = vst.msk [vmem:[%s447] sm:$0x2] %vm444, %v443
    %s449 = scalar_lea.vmem %s0, 26
    %v450 = vld [vmem:[%s449] sm:$0x1]
    %s451 = scalar_lea.vmem %s0, 57
    %v452 = vld [vmem:[%s451] sm:$0x2]
    %vm453 = vcmask 1041409
    %v454 = vsel %vm453, %v452, %v450
    %455 = vrot.lane.b32.xlu0 %v454, 12
    %v456 = vpop.permute.xlu0 %455
    %vm457 = vcmask 343136
    %s458 = scalar_lea.vmem [#allocation0], 48
    %459 = vst.msk [vmem:[%s458] sm:$0x1] %vm457, %v456
    %s460 = scalar_lea.vmem [#allocation0], 111
    %461 = vst.msk [vmem:[%s460] sm:$0x2] %vm457, %v456
    %s462 = scalar_lea.vmem %s0, 13
    %v463 = vld [vmem:[%s462] sm:$0x1]
    %s464 = scalar_lea.vmem %s0, 44
    %v465 = vld [vmem:[%s464] sm:$0x2]
    %vm466 = vcmask 1041409
    %v467 = vsel %vm466, %v465, %v463
    %468 = vrot.lane.b32.xlu0 %v467, 6
    %v469 = vpop.permute.xlu0 %468
    %vm470 = vcmask 293936
    %s471 = scalar_lea.vmem [#allocation0], 24
    %472 = vst.msk [vmem:[%s471] sm:$0x1] %vm470, %v469
    %s473 = scalar_lea.vmem [#allocation0], 87
    %474 = vst.msk [vmem:[%s473] sm:$0x2] %vm470, %v469
    %s476 = ssub.s32 2, 1
    %v477 = vld [vmem:[#allocation0] sm:%s476]
    %s479 = ssub.s32 2, 1
    %480 = vst [vmem:[%s1] sm:%s479] %v477
    %s481 = scalar_lea.vmem [#allocation0], 8
    %v482 = vld [vmem:[%s481] sm:%s476]
    %s484 = ssub.s32 2, 1
    %s485 = scalar_lea.vmem %s1, 1
    %486 = vst [vmem:[%s485] sm:%s484] %v482
    %s487 = scalar_lea.vmem [#allocation0], 16
    %v488 = vld [vmem:[%s487] sm:%s476]
    %s490 = ssub.s32 2, 1
    %s491 = scalar_lea.vmem %s1, 2
    %492 = vst [vmem:[%s491] sm:%s490] %v488
    %s493 = scalar_lea.vmem [#allocation0], 24
    %v494 = vld [vmem:[%s493] sm:%s476]
    %s496 = ssub.s32 2, 1
    %s497 = scalar_lea.vmem %s1, 3
    %498 = vst [vmem:[%s497] sm:%s496] %v494
    %s499 = scalar_lea.vmem [#allocation0], 32
    %v500 = vld [vmem:[%s499] sm:%s476]
    %s502 = ssub.s32 2, 1
    %s503 = scalar_lea.vmem %s1, 4
    %504 = vst [vmem:[%s503] sm:%s502] %v500
    %s505 = scalar_lea.vmem [#allocation0], 40
    %v506 = vld [vmem:[%s505] sm:%s476]
    %s508 = ssub.s32 2, 1
    %s509 = scalar_lea.vmem %s1, 5
    %510 = vst [vmem:[%s509] sm:%s508] %v506
    %s511 = scalar_lea.vmem [#allocation0], 48
    %v512 = vld [vmem:[%s511] sm:%s476]
    %s514 = ssub.s32 2, 1
    %s515 = scalar_lea.vmem %s1, 6
    %516 = vst [vmem:[%s515] sm:%s514] %v512
    %s517 = scalar_lea.vmem [#allocation0], 56
    %v518 = vld [vmem:[%s517] sm:%s476]
    %s520 = ssub.s32 2, 1
    %s521 = scalar_lea.vmem %s1, 7
    %522 = vst [vmem:[%s521] sm:%s520] %v518
    %s523 = scalar_lea.vmem [#allocation0], 64
    %v524 = vld [vmem:[%s523] sm:%s476]
    %s526 = ssub.s32 2, 1
    %s527 = scalar_lea.vmem %s1, 8
    %528 = vst [vmem:[%s527] sm:%s526] %v524
    %s529 = scalar_lea.vmem [#allocation0], 72
    %v530 = vld [vmem:[%s529] sm:%s476]
    %s532 = ssub.s32 2, 1
    %s533 = scalar_lea.vmem %s1, 9
    %534 = vst [vmem:[%s533] sm:%s532] %v530
    %s535 = scalar_lea.vmem [#allocation0], 80
    %v536 = vld [vmem:[%s535] sm:%s476]
    %s538 = ssub.s32 2, 1
    %s539 = scalar_lea.vmem %s1, 10
    %540 = vst [vmem:[%s539] sm:%s538] %v536
    %s541 = scalar_lea.vmem [#allocation0], 88
    %v542 = vld [vmem:[%s541] sm:%s476]
    %s544 = ssub.s32 2, 1
    %s545 = scalar_lea.vmem %s1, 11
    %546 = vst [vmem:[%s545] sm:%s544] %v542
    %s547 = scalar_lea.vmem [#allocation0], 96
    %v548 = vld [vmem:[%s547] sm:%s476]
    %s550 = ssub.s32 2, 1
    %s551 = scalar_lea.vmem %s1, 12
    %552 = vst [vmem:[%s551] sm:%s550] %v548
    %s553 = scalar_lea.vmem [#allocation0], 104
    %v554 = vld [vmem:[%s553] sm:%s476]
    %s556 = ssub.s32 2, 1
    %s557 = scalar_lea.vmem %s1, 13
    %558 = vst [vmem:[%s557] sm:%s556] %v554
    %s559 = scalar_lea.vmem [#allocation0], 112
    %v560 = vld [vmem:[%s559] sm:%s476]
    %s562 = ssub.s32 2, 1
    %s563 = scalar_lea.vmem %s1, 14
    %564 = vst [vmem:[%s563] sm:%s562] %v560
    %s565 = scalar_lea.vmem [#allocation0], 120
    %v566 = vld [vmem:[%s565] sm:%s476]
    %s568 = ssub.s32 2, 1
    %s569 = scalar_lea.vmem %s1, 15
    %570 = vst [vmem:[%s569] sm:%s568] %v566

// kernel: net_forward.2
$region0: #{net_forward.2}
  #allocation0 [shape = 'u32[]', space=smem, size = 0x4, offset = 0x4, fixed_abs, tag = 'smem constant byte address 0x4 - core index']
  #allocation1 [shape = 'u32[72,128]{1,0:T(1,128)}', space=vmem, size = 0x9000, scoped, tag = 'internal scratch']
  %s0 = inlined_call_operand.vmem [shape: f32[2,27,900], index: 0, kind: input, shape index: {}]
  %s1 = inlined_call_operand.hbm [shape: f32[32,27], index: 1, kind: input, shape index: {}]
  %s2 = inlined_call_operand.vmem [shape: f32[32,1], index: 2, kind: input, shape index: {}]
  %s3 = inlined_call_operand.vmem [shape: f32[2,32,900], index: 3, kind: output, shape index: {}]
  %s4 = sld [smem:[#allocation0]]
  $region49: #{net_forward.2} parent=0
    _
  %s6 = ssub.s32 1, %s4
  %s7 = scalar_select 0, %s6, %s4
  $region1: #{net_forward.2} parent=0
    #allocation2 [shape = 'u8[16384]{0}', space=vmem, size = 0x4000, scoped, tag = 'input window, operand 1, single buffered']
    #allocation3 [shape = 's32[2]{0}', space=sflag, size = 0x8, scoped, tag = 'scoped memory for net_forward.2']
    %8 = vsyncpa [#allocation3], 0
    loop: start=0, step=1, limit=4
    $region2: #{net_forward.2} parent=1 // loop_pre_header
      _
    $region3: #{net_forward.2} parent=1 // loop_header
      %s10 = sphi 0, %s14
      %p11 = scmp.ge.s32.totalorder %s10, 4
      %s20 = sphi 0, %s22
      %s23 = sphi 0, %s20
      %s24 = sphi 0, %s23
      %s40 = sphi 0, %s24
      %s44 = sphi 0, %s44
      %s46 = sphi 0, %s44
      %s47 = sphi 0, %s46
      %s61 = sphi 0, %s47
      %s65 = sphi 0, %s65
      %s67 = sphi 0, %s65
      %s68 = sphi 0, %s67
      %s82 = sphi 0, %s68
      %s88 = sphi 0, %s90
      %s91 = sphi 0, %s88
      %s92 = sphi 0, %s91
      %s108 = sphi 0, %s92
    $region4: #{net_forward.2} parent=1 // loop_header_branch
      %13 = sbr.rel (%p11) target = $region8
    $region5: #{net_forward.2} parent=1 // loop_body
      %s15 = ssub.s32 %s10, 1
      %s16 = ssub.s32 %s10, 2
      %s17 = sadd.s32 %s10, 1
      %s18 = ssub.s32 %s10, %s17
      %p19 = scmp.eq.s32.totalorder %s18, 0
      %s21 = sadd.s32 %s20, 1
      %s22 = scalar_select %p19, %s20, %s21
      %p25 = pneg %p19
      %p26 = scmp.eq.s32.totalorder %s10, 1
      %p27 = por %p25, %p26
      %p28 = scmp.ne.s32.totalorder %s20, %s23
      %p29 = scmp.eq.s32.totalorder %s10, 0
      %p30 = por %p28, %p29
      %p31 = scmp.ne.s32.totalorder %s20, %s23
      %p32 = scmp.eq.s32.totalorder %s15, 1
      %p33 = por %p31, %p32
      %p34 = scmp.ne.s32.totalorder %s23, %s24
      %p35 = scmp.eq.s32.totalorder %s15, 0
      %p36 = por %p34, %p35
      %p37 = scmp.ne.s32.totalorder %s23, %s24
      %p38 = scmp.eq.s32.totalorder %s16, 1
      %p39 = por %p37, %p38
      %p41 = scmp.ne.s32.totalorder %s24, %s40
      %p42 = scmp.eq.s32.totalorder %s16, 0
      %p43 = por %p41, %p42
      %s45 = sadd.s32 %s44, 1
      %p48 = scmp.eq.s32.totalorder %s10, 1
      %p49 = scmp.ne.s32.totalorder %s44, %s46
      %p50 = scmp.eq.s32.totalorder %s10, 0
      %p51 = por %p49, %p50
      %p52 = scmp.ne.s32.totalorder %s44, %s46
      %p53 = scmp.eq.s32.totalorder %s15, 1
      %p54 = por %p52, %p53
      %p55 = scmp.ne.s32.totalorder %s46, %s47
      %p56 = scmp.eq.s32.totalorder %s15, 0
      %p57 = por %p55, %p56
      %p58 = scmp.ne.s32.totalorder %s46, %s47
      %p59 = scmp.eq.s32.totalorder %s16, 1
      %p60 = por %p58, %p59
      %p62 = scmp.ne.s32.totalorder %s47, %s61
      %p63 = scmp.eq.s32.totalorder %s16, 0
      %p64 = por %p62, %p63
      %s66 = sadd.s32 %s65, 1
      %p69 = scmp.eq.s32.totalorder %s10, 1
      %p70 = scmp.ne.s32.totalorder %s65, %s67
      %p71 = scmp.eq.s32.totalorder %s10, 0
      %p72 = por %p70, %p71
      %p73 = scmp.ne.s32.totalorder %s65, %s67
      %p74 = scmp.eq.s32.totalorder %s15, 1
      %p75 = por %p73, %p74
      %p76 = scmp.ne.s32.totalorder %s67, %s68
      %p77 = scmp.eq.s32.totalorder %s15, 0
      %p78 = por %p76, %p77
      %p79 = scmp.ne.s32.totalorder %s67, %s68
      %p80 = scmp.eq.s32.totalorder %s16, 1
      %p81 = por %p79, %p80
      %p83 = scmp.ne.s32.totalorder %s68, %s82
      %p84 = scmp.eq.s32.totalorder %s16, 0
      %p85 = por %p83, %p84
      %s86 = ssub.s32 %s10, %s17
      %p87 = scmp.eq.s32.totalorder %s86, 0
      %s89 = sadd.s32 %s88, 1
      %s90 = scalar_select %p87, %s88, %s89
      %p93 = pneg %p87
      %p94 = scmp.eq.s32.totalorder %s10, 1
      %p95 = por %p93, %p94
      %p96 = scmp.ne.s32.totalorder %s88, %s91
      %p97 = scmp.eq.s32.totalorder %s10, 0
      %p98 = por %p96, %p97
      %p99 = scmp.ne.s32.totalorder %s88, %s91
      %p100 = scmp.eq.s32.totalorder %s15, 1
      %p101 = por %p99, %p100
      %p102 = scmp.ne.s32.totalorder %s91, %s92
      %p103 = scmp.eq.s32.totalorder %s15, 0
      %p104 = por %p102, %p103
      %p105 = scmp.ne.s32.totalorder %s91, %s92
      %p106 = scmp.eq.s32.totalorder %s16, 1
      %p107 = por %p105, %p106
      %p109 = scmp.ne.s32.totalorder %s92, %s108
      %p110 = scmp.eq.s32.totalorder %s16, 0
      %p111 = por %p109, %p110
      %p112 = scmp.le.s32.totalorder 1, %s10
      %p113 = scmp.lt.s32.totalorder %s10, 3
      %p114 = pnand %p112, %p113
      %p115 = pneg %p114
      // Predicated region
      $region9: #{net_forward.2} parent=5 // pred_check
        _
      $region10: #{net_forward.2} parent=5 // pred_check_branch
        %117 = sbr.rel (%p114) target = $region12
      $region11: #{net_forward.2} parent=5 // pred_region
        %s118 = ssub.s32 %s10, 1
        // Predicated region
        $region13: #{net_forward.2} parent=11 // pred_check
          %p119 = pneg %p57
        $region14: #{net_forward.2} parent=11 // pred_check_branch
          %121 = sbr.rel (%p119) target = $region16
        $region15: #{net_forward.2} parent=11 // pred_region
          %123 = vsyncadd [#allocation3], 0
          %s124 = sshll.u32 %s1, 4
          %s125 = int_to_ptr.hbm [resolvable:$true] %s124
          %s126 = sshll.u32 [#allocation2], 4
          %s127 = int_to_ptr.vmem [resolvable:$true] %s126
          %132 = dma.hbm_to_vmem [thread:$0]  %s125, 512, %s127, [#allocation3], 128, 128, 8
        $region16: #{net_forward.2} parent=11 // pred_fallthru
          _
        // Predicated region
        $region17: #{net_forward.2} parent=11 // pred_check
          %p133 = pneg %p78
        $region18: #{net_forward.2} parent=11 // pred_check_branch
          %135 = sbr.rel (%p133) target = $region20
        $region19: #{net_forward.2} parent=11 // pred_region
          _
        $region20: #{net_forward.2} parent=11 // pred_fallthru
          _
      $region12: #{net_forward.2} parent=5 // pred_fallthru
        _
      %p136 = scmp.lt.s32.totalorder %s10, 2
      // Predicated region
      $region21: #{net_forward.2} parent=5 // pred_check
        %p137 = pneg %p136
      $region22: #{net_forward.2} parent=5 // pred_check_branch
        %139 = sbr.rel (%p137) target = $region24
      $region23: #{net_forward.2} parent=5 // pred_region
        // Predicated region
        $region25: #{net_forward.2} parent=23 // pred_check
          %p140 = pneg %p30
        $region26: #{net_forward.2} parent=23 // pred_check_branch
          %142 = sbr.rel (%p140) target = $region28
        $region27: #{net_forward.2} parent=23 // pred_region
          %p143 = scmp.lt.s32.totalorder %s10, 1
          %s144 = scalar_select %p143, %s10, 1
          %s145 = smul.addr %s144, 32
          %s146 = smul.addr %s145, 8
          %s147 = scalar_lea.vmem %s0, %s146
        $region28: #{net_forward.2} parent=23 // pred_fallthru
          _
      $region24: #{net_forward.2} parent=5 // pred_fallthru
        _
      %p148 = scmp.le.s32.totalorder 1, %s10
      %p149 = scmp.lt.s32.totalorder %s10, 3
      %p150 = pnand %p148, %p149
      %p151 = pneg %p150
      // Predicated region
      $region29: #{net_forward.2} parent=5 // pred_check
        _
      $region30: #{net_forward.2} parent=5 // pred_check_branch
        %153 = sbr.rel (%p150) target = $region32
      $region31: #{net_forward.2} parent=5 // pred_region
        %s154 = ssub.s32 %s10, 1
        // Predicated region
        $region33: #{net_forward.2} parent=31 // pred_check
          %p155 = pneg %p57
        $region34: #{net_forward.2} parent=31 // pred_check_branch
          %157 = sbr.rel (%p155) target = $region36
        $region35: #{net_forward.2} parent=31 // pred_region
          %159 = dma.done [#allocation3], 512
        $region36: #{net_forward.2} parent=31 // pred_fallthru
          _
        %p160 = scmp.lt.s32.totalorder %s15, 1
        %s161 = scalar_select %p160, %s15, 1
        %s162 = smul.addr %s161, 32
        %s163 = smul.addr %s162, 8
        %s164 = scalar_lea.vmem %s0, %s163
        %p165 = pneg %p36
        %p166 = pneg %p33
        %p167 = pneg %p57
        %p168 = pneg %p54
        %p169 = pneg %p78
        %p170 = pneg %p75
        %p171 = pneg %p104
        %p172 = pneg %p101
        %p173 = scmp.lt.s32.totalorder %s15, 1
        %s174 = scalar_select %p173, %s15, 1
        %s175 = smul.addr %s174, 32
        %s176 = smul.addr %s175, 8
        %s177 = scalar_lea.vmem %s3, %s176
        %p178 = scmp.lt.s32.totalorder %s15, 1
        %s179 = scalar_select %p178, %s15, 1
        %s180 = smul.addr %s179, 32
        %s181 = smul.addr %s180, 8
        %s182 = scalar_lea.vmem %s0, %s181
        %p183 = scmp.lt.s32.totalorder %s15, 1
        %s184 = scalar_select %p183, %s15, 1
        %s185 = smul.addr %s184, 32
        %s186 = smul.addr %s185, 8
        %s187 = scalar_lea.vmem %s3, %s186
        %v188 = vld [vmem:[#allocation2] sm:$0xff]
        %v189 = vld [vmem:[#allocation2 + $0x8] sm:$0xff]
        %v190 = vld [vmem:[#allocation2 + $0x10] sm:$0xff]
        %v191 = vld [vmem:[#allocation2 + $0x18] sm:$0xff]
        %v192 = vld [vmem:[%s182] sm:$0xff]
        %v193 = vld [vmem:[%s182 + $0x8] sm:$0xff]
        %v194 = vld [vmem:[%s182 + $0x10] sm:$0xff]
        %v195 = vld [vmem:[%s182 + $0x18] sm:$0xff]
        %v196 = vld [vmem:[%s182 + $0x20] sm:$0xff]
        %v197 = vld [vmem:[%s182 + $0x28] sm:$0xff]
        %v198 = vld [vmem:[%s182 + $0x30] sm:$0xff]
        %v199 = vld [vmem:[%s182 + $0x38] sm:$0xff]
        %v200 = vld [vmem:[%s182 + $0x40] sm:$0xff]
        %v201 = vld [vmem:[%s182 + $0x48] sm:$0xff]
        %v202 = vld [vmem:[%s182 + $0x50] sm:$0xff]
        %v203 = vld [vmem:[%s182 + $0x58] sm:$0xff]
        %v204 = vld [vmem:[%s182 + $0x60] sm:$0xff]
        %v205 = vld [vmem:[%s182 + $0x68] sm:$0xff]
        %v206 = vld [vmem:[%s182 + $0x70] sm:$0xff]
        %v207 = vld [vmem:[%s182 + $0x78] sm:$0xff]
        %v208 = vld [vmem:[%s182 + $0x80] sm:$0xff]
        %v209 = vld [vmem:[%s182 + $0x88] sm:$0xff]
        %v210 = vld [vmem:[%s182 + $0x90] sm:$0xff]
        %v211 = vld [vmem:[%s182 + $0x98] sm:$0xff]
        %v212 = vld [vmem:[%s182 + $0xa0] sm:$0xff]
        %v213 = vld [vmem:[%s182 + $0xa8] sm:$0xff]
        %v214 = vld [vmem:[%s182 + $0xb0] sm:$0xff]
        %v215 = vld [vmem:[%s182 + $0xb8] sm:$0xff]
        %v216 = vld [vmem:[%s182 + $0xc0] sm:$0x7]
        %v217 = vld [vmem:[%s182 + $0xc8] sm:$0x7]
        %v218 = vld [vmem:[%s182 + $0xd0] sm:$0x7]
        %v219 = vld [vmem:[%s182 + $0xd8] sm:$0x7]
        %v220 = vld [vmem:[%s182 + $0xe0] sm:$0x7]
        %v221 = vld [vmem:[%s182 + $0xe8] sm:$0x7]
        %v222 = vld [vmem:[%s182 + $0xf0] sm:$0x7]
        %v223 = vld [vmem:[%s182 + $0xf8] sm:$0x7]
        %v224 = vld [vmem:[%s2] sm:$0xff]
        %v225 = vld [vmem:[%s2 + $0x8] sm:$0xff]
        %v226 = vld [vmem:[%s2 + $0x10] sm:$0xff]
        %v227 = vld [vmem:[%s2 + $0x18] sm:$0xff]
        %229 = vset.pattern.permute.xlu0 0
        %230 = vperm.xlu0 %229, %v224
        %v231 = vpop.permute.xlu0 %230
        %234 = vset.pattern.permute.xlu0 0
        %235 = vperm.xlu0 %234, %v225
        %v236 = vpop.permute.xlu0 %235
        %239 = vset.pattern.permute.xlu0 0
        %240 = vperm.xlu0 %239, %v226
        %v241 = vpop.permute.xlu0 %240
        %244 = vset.pattern.permute.xlu0 0
        %245 = vperm.xlu0 %244, %v227
        %v246 = vpop.permute.xlu0 %245
        %vm248 = vcmask 220160
        %v250 = vsel %vm248, %v188, 0
        %v253 = vsel %vm248, %v189, 0
        %v256 = vsel %vm248, %v190, 0
        %v259 = vsel %vm248, %v191, 0
        %vm261 = vcmask 1042432
        %v263 = vsel %vm261, %v216, 0
        %v266 = vsel %vm261, %v217, 0
        %v269 = vsel %vm261, %v218, 0
        %v272 = vsel %vm261, %v219, 0
        %v275 = vsel %vm261, %v220, 0
        %v278 = vsel %vm261, %v221, 0
        %v281 = vsel %vm261, %v222, 0
        %v284 = vsel %vm261, %v223, 0
        %286 = vmatpush.msra.mxu0 0.0
        %287 = vmatpush.msra.mxu0 0.0
        %288 = vmatpush.msra.mxu0 0.0
        %289 = vmatpush.msra.mxu0 0.0
        %290 = vmatpush.msra.mxu0 0.0
        %291 = vmatpush.msra.mxu0 0.0
        %292 = vmatpush.msra.mxu0 0.0
        %293 = vmatpush.msra.mxu0 0.0
        %294 = vmatpush.msra.mxu0 0.0
        %295 = vmatpush.msra.mxu0 0.0
        %296 = vmatpush.msra.mxu0 0.0
        %297 = vmatpush.msra.mxu0 0.0
        %298 = vmatpush.msra.mxu0 %v263
        %299 = vmatpush.msra.mxu0 %v208
        %300 = vmatpush.msra.mxu0 %v200
        %301 = vmatpush.msra.mxu0 %v192
        %302 = vmatmul.f32.gmra.mxu0 %v250
        %v303 = vpop.f32.mrf.mxu0
        %v304 = vadd.f32 %v231, %v303
        %305 = vmatmul.f32.gmra.mxu0 %v253
        %v306 = vpop.f32.mrf.mxu0
        %v307 = vadd.f32 %v236, %v306
        %308 = vmatmul.f32.gmra.mxu0 %v256
        %v309 = vpop.f32.mrf.mxu0
        %v310 = vadd.f32 %v241, %v309
        %311 = vmatmul.f32.gmra.mxu0 %v259
        %v312 = vpop.f32.mrf.mxu0
        %v313 = vadd.f32 %v246, %v312
        %314 = vdwg.mxu0
        %315 = vmatpush.msra.mxu0 0.0
        %316 = vmatpush.msra.mxu0 0.0
        %317 = vmatpush.msra.mxu0 0.0
        %318 = vmatpush.msra.mxu0 0.0
        %319 = vmatpush.msra.mxu0 0.0
        %320 = vmatpush.msra.mxu0 0.0
        %321 = vmatpush.msra.mxu0 0.0
        %322 = vmatpush.msra.mxu0 0.0
        %323 = vmatpush.msra.mxu0 0.0
        %324 = vmatpush.msra.mxu0 0.0
        %325 = vmatpush.msra.mxu0 0.0
        %326 = vmatpush.msra.mxu0 0.0
        %327 = vmatpush.msra.mxu0 %v266
        %328 = vmatpush.msra.mxu0 %v209
        %329 = vmatpush.msra.mxu0 %v201
        %330 = vmatpush.msra.mxu0 %v193
        %331 = vmatmul.f32.gmra.mxu0 %v250
        %v332 = vpop.f32.mrf.mxu0
        %v333 = vadd.f32 %v231, %v332
        %334 = vmatmul.f32.gmra.mxu0 %v253
        %v335 = vpop.f32.mrf.mxu0
        %v336 = vadd.f32 %v236, %v335
        %337 = vmatmul.f32.gmra.mxu0 %v256
        %v338 = vpop.f32.mrf.mxu0
        %v339 = vadd.f32 %v241, %v338
        %340 = vmatmul.f32.gmra.mxu0 %v259
        %v341 = vpop.f32.mrf.mxu0
        %v342 = vadd.f32 %v246, %v341
        %343 = vdwg.mxu0
        %344 = vmatpush.msra.mxu0 0.0
        %345 = vmatpush.msra.mxu0 0.0
        %346 = vmatpush.msra.mxu0 0.0
        %347 = vmatpush.msra.mxu0 0.0
        %348 = vmatpush.msra.mxu0 0.0
        %349 = vmatpush.msra.mxu0 0.0
        %350 = vmatpush.msra.mxu0 0.0
        %351 = vmatpush.msra.mxu0 0.0
        %352 = vmatpush.msra.mxu0 0.0
        %353 = vmatpush.msra.mxu0 0.0
        %354 = vmatpush.msra.mxu0 0.0
        %355 = vmatpush.msra.mxu0 0.0
        %356 = vmatpush.msra.mxu0 %v269
        %357 = vmatpush.msra.mxu0 %v210
        %358 = vmatpush.msra.mxu0 %v202
        %359 = vmatpush.msra.mxu0 %v194
        %360 = vmatmul.f32.gmra.mxu0 %v250
        %v361 = vpop.f32.mrf.mxu0
        %v362 = vadd.f32 %v231, %v361
        %363 = vmatmul.f32.gmra.mxu0 %v253
        %v364 = vpop.f32.mrf.mxu0
        %v365 = vadd.f32 %v236, %v364
        %366 = vmatmul.f32.gmra.mxu0 %v256
        %v367 = vpop.f32.mrf.mxu0
        %v368 = vadd.f32 %v241, %v367
        %369 = vmatmul.f32.gmra.mxu0 %v259
        %v370 = vpop.f32.mrf.mxu0
        %v371 = vadd.f32 %v246, %v370
        %372 = vdwg.mxu0
        %373 = vmatpush.msra.mxu0 0.0
        %374 = vmatpush.msra.mxu0 0.0
        %375 = vmatpush.msra.mxu0 0.0
        %376 = vmatpush.msra.mxu0 0.0
        %377 = vmatpush.msra.mxu0 0.0
        %378 = vmatpush.msra.mxu0 0.0
        %379 = vmatpush.msra.mxu0 0.0
        %380 = vmatpush.msra.mxu0 0.0
        %381 = vmatpush.msra.mxu0 0.0
        %382 = vmatpush.msra.mxu0 0.0
        %383 = vmatpush.msra.mxu0 0.0
        %384 = vmatpush.msra.mxu0 0.0
        %385 = vmatpush.msra.mxu0 %v272
        %386 = vmatpush.msra.mxu0 %v211
        %387 = vmatpush.msra.mxu0 %v203
        %388 = vmatpush.msra.mxu0 %v195
        %389 = vmatmul.f32.gmra.mxu0 %v250
        %v390 = vpop.f32.mrf.mxu0
        %v391 = vadd.f32 %v231, %v390
        %392 = vmatmul.f32.gmra.mxu0 %v253
        %v393 = vpop.f32.mrf.mxu0
        %v394 = vadd.f32 %v236, %v393
        %395 = vmatmul.f32.gmra.mxu0 %v256
        %v396 = vpop.f32.mrf.mxu0
        %v397 = vadd.f32 %v241, %v396
        %398 = vmatmul.f32.gmra.mxu0 %v259
        %v399 = vpop.f32.mrf.mxu0
        %v400 = vadd.f32 %v246, %v399
        %401 = vdwg.mxu0
        %402 = vmatpush.msra.mxu0 0.0
        %403 = vmatpush.msra.mxu0 0.0
        %404 = vmatpush.msra.mxu0 0.0
        %405 = vmatpush.msra.mxu0 0.0
        %406 = vmatpush.msra.mxu0 0.0
        %407 = vmatpush.msra.mxu0 0.0
        %408 = vmatpush.msra.mxu0 0.0
        %409 = vmatpush.msra.mxu0 0.0
        %410 = vmatpush.msra.mxu0 0.0
        %411 = vmatpush.msra.mxu0 0.0
        %412 = vmatpush.msra.mxu0 0.0
        %413 = vmatpush.msra.mxu0 0.0
        %414 = vmatpush.msra.mxu0 %v275
        %415 = vmatpush.msra.mxu0 %v212
        %416 = vmatpush.msra.mxu0 %v204
        %417 = vmatpush.msra.mxu0 %v196
        %418 = vmatmul.f32.gmra.mxu0 %v250
        %v419 = vpop.f32.mrf.mxu0
        %v420 = vadd.f32 %v231, %v419
        %421 = vmatmul.f32.gmra.mxu0 %v253
        %v422 = vpop.f32.mrf.mxu0
        %v423 = vadd.f32 %v236, %v422
        %424 = vmatmul.f32.gmra.mxu0 %v256
        %v425 = vpop.f32.mrf.mxu0
        %v426 = vadd.f32 %v241, %v425
        %427 = vmatmul.f32.gmra.mxu0 %v259
        %v428 = vpop.f32.mrf.mxu0
        %v429 = vadd.f32 %v246, %v428
        %430 = vdwg.mxu0
        %431 = vmatpush.msra.mxu0 0.0
        %432 = vmatpush.msra.mxu0 0.0
        %433 = vmatpush.msra.mxu0 0.0
        %434 = vmatpush.msra.mxu0 0.0
        %435 = vmatpush.msra.mxu0 0.0
        %436 = vmatpush.msra.mxu0 0.0
        %437 = vmatpush.msra.mxu0 0.0
        %438 = vmatpush.msra.mxu0 0.0
        %439 = vmatpush.msra.mxu0 0.0
        %440 = vmatpush.msra.mxu0 0.0
        %441 = vmatpush.msra.mxu0 0.0
        %442 = vmatpush.msra.mxu0 0.0
        %443 = vmatpush.msra.mxu0 %v278
        %444 = vmatpush.msra.mxu0 %v213
        %445 = vmatpush.msra.mxu0 %v205
        %446 = vmatpush.msra.mxu0 %v197
        %447 = vmatmul.f32.gmra.mxu0 %v250
        %v448 = vpop.f32.mrf.mxu0
        %v449 = vadd.f32 %v231, %v448
        %450 = vmatmul.f32.gmra.mxu0 %v253
        %v451 = vpop.f32.mrf.mxu0
        %v452 = vadd.f32 %v236, %v451
        %453 = vmatmul.f32.gmra.mxu0 %v256
        %v454 = vpop.f32.mrf.mxu0
        %v455 = vadd.f32 %v241, %v454
        %456 = vmatmul.f32.gmra.mxu0 %v259
        %v457 = vpop.f32.mrf.mxu0
        %v458 = vadd.f32 %v246, %v457
        %459 = vdwg.mxu0
        %460 = vmatpush.msra.mxu0 0.0
        %461 = vmatpush.msra.mxu0 0.0
        %462 = vmatpush.msra.mxu0 0.0
        %463 = vmatpush.msra.mxu0 0.0
        %464 = vmatpush.msra.mxu0 0.0
        %465 = vmatpush.msra.mxu0 0.0
        %466 = vmatpush.msra.mxu0 0.0
        %467 = vmatpush.msra.mxu0 0.0
        %468 = vmatpush.msra.mxu0 0.0
        %469 = vmatpush.msra.mxu0 0.0
        %470 = vmatpush.msra.mxu0 0.0
        %471 = vmatpush.msra.mxu0 0.0
        %472 = vmatpush.msra.mxu0 %v281
        %473 = vmatpush.msra.mxu0 %v214
        %474 = vmatpush.msra.mxu0 %v206
        %475 = vmatpush.msra.mxu0 %v198
        %476 = vmatmul.f32.gmra.mxu0 %v250
        %v477 = vpop.f32.mrf.mxu0
        %v478 = vadd.f32 %v231, %v477
        %479 = vmatmul.f32.gmra.mxu0 %v253
        %v480 = vpop.f32.mrf.mxu0
        %v481 = vadd.f32 %v236, %v480
        %482 = vmatmul.f32.gmra.mxu0 %v256
        %v483 = vpop.f32.mrf.mxu0
        %v484 = vadd.f32 %v241, %v483
        %485 = vmatmul.f32.gmra.mxu0 %v259
        %v486 = vpop.f32.mrf.mxu0
        %v487 = vadd.f32 %v246, %v486
        %488 = vdwg.mxu0
        %489 = vmatpush.msra.mxu0 0.0
        %490 = vmatpush.msra.mxu0 0.0
        %491 = vmatpush.msra.mxu0 0.0
        %492 = vmatpush.msra.mxu0 0.0
        %493 = vmatpush.msra.mxu0 0.0
        %494 = vmatpush.msra.mxu0 0.0
        %495 = vmatpush.msra.mxu0 0.0
        %496 = vmatpush.msra.mxu0 0.0
        %497 = vmatpush.msra.mxu0 0.0
        %498 = vmatpush.msra.mxu0 0.0
        %499 = vmatpush.msra.mxu0 0.0
        %500 = vmatpush.msra.mxu0 0.0
        %501 = vmatpush.msra.mxu0 %v284
        %502 = vmatpush.msra.mxu0 %v215
        %503 = vmatpush.msra.mxu0 %v207
        %504 = vmatpush.msra.mxu0 %v199
        %505 = vmatmul.f32.gmra.mxu0 %v250
        %v506 = vpop.f32.mrf.mxu0
        %v507 = vadd.f32 %v231, %v506
        %508 = vmatmul.f32.gmra.mxu0 %v253
        %v509 = vpop.f32.mrf.mxu0
        %v510 = vadd.f32 %v236, %v509
        %511 = vmatmul.f32.gmra.mxu0 %v256
        %v512 = vpop.f32.mrf.mxu0
        %v513 = vadd.f32 %v241, %v512
        %514 = vmatmul.f32.gmra.mxu0 %v259
        %v515 = vpop.f32.mrf.mxu0
        %v516 = vadd.f32 %v246, %v515
        %517 = vdwg.mxu0
        %v518 = vmax.f32 %v304, 0.0
        %v519 = vmax.f32 %v333, 0.0
        %v520 = vmax.f32 %v362, 0.0
        %v521 = vmax.f32 %v391, 0.0
        %v522 = vmax.f32 %v420, 0.0
        %v523 = vmax.f32 %v449, 0.0
        %v524 = vmax.f32 %v478, 0.0
        %v525 = vmax.f32 %v507, 0.0
        %v526 = vmax.f32 %v307, 0.0
        %v527 = vmax.f32 %v336, 0.0
        %v528 = vmax.f32 %v365, 0.0
        %v529 = vmax.f32 %v394, 0.0
        %v530 = vmax.f32 %v423, 0.0
        %v531 = vmax.f32 %v452, 0.0
        %v532 = vmax.f32 %v481, 0.0
        %v533 = vmax.f32 %v510, 0.0
        %v534 = vmax.f32 %v310, 0.0
        %v535 = vmax.f32 %v339, 0.0
        %v536 = vmax.f32 %v368, 0.0
        %v537 = vmax.f32 %v397, 0.0
        %v538 = vmax.f32 %v426, 0.0
        %v539 = vmax.f32 %v455, 0.0
        %v540 = vmax.f32 %v484, 0.0
        %v541 = vmax.f32 %v513, 0.0
        %v542 = vmax.f32 %v313, 0.0
        %v543 = vmax.f32 %v342, 0.0
        %v544 = vmax.f32 %v371, 0.0
        %v545 = vmax.f32 %v400, 0.0
        %v546 = vmax.f32 %v429, 0.0
        %v547 = vmax.f32 %v458, 0.0
        %v548 = vmax.f32 %v487, 0.0
        %v549 = vmax.f32 %v516, 0.0
        %550 = vst [vmem:[%s187] sm:$0xff] %v518
        %551 = vst [vmem:[%s187 + $0x8] sm:$0xff] %v519
        %552 = vst [vmem:[%s187 + $0x10] sm:$0xff] %v520
        %553 = vst [vmem:[%s187 + $0x18] sm:$0xff] %v521
        %554 = vst [vmem:[%s187 + $0x20] sm:$0xff] %v522
        %555 = vst [vmem:[%s187 + $0x28] sm:$0xff] %v523
        %556 = vst [vmem:[%s187 + $0x30] sm:$0xff] %v524
        %vm557 = vcmask 31744
        %558 = vst.msk [vmem:[%s187 + $0x38] sm:$0xff] %vm557, %v525
        %559 = vst [vmem:[%s187 + $0x40] sm:$0xff] %v526
        %560 = vst [vmem:[%s187 + $0x48] sm:$0xff] %v527
        %561 = vst [vmem:[%s187 + $0x50] sm:$0xff] %v528
        %562 = vst [vmem:[%s187 + $0x58] sm:$0xff] %v529
        %563 = vst [vmem:[%s187 + $0x60] sm:$0xff] %v530
        %564 = vst [vmem:[%s187 + $0x68] sm:$0xff] %v531
        %565 = vst [vmem:[%s187 + $0x70] sm:$0xff] %v532
        %566 = vst.msk [vmem:[%s187 + $0x78] sm:$0xff] %vm557, %v533
        %567 = vst [vmem:[%s187 + $0x80] sm:$0xff] %v534
        %568 = vst [vmem:[%s187 + $0x88] sm:$0xff] %v535
        %569 = vst [vmem:[%s187 + $0x90] sm:$0xff] %v536
        %570 = vst [vmem:[%s187 + $0x98] sm:$0xff] %v537
        %571 = vst [vmem:[%s187 + $0xa0] sm:$0xff] %v538
        %572 = vst [vmem:[%s187 + $0xa8] sm:$0xff] %v539
        %573 = vst [vmem:[%s187 + $0xb0] sm:$0xff] %v540
        %574 = vst.msk [vmem:[%s187 + $0xb8] sm:$0xff] %vm557, %v541
        %575 = vst [vmem:[%s187 + $0xc0] sm:$0xff] %v542
        %576 = vst [vmem:[%s187 + $0xc8] sm:$0xff] %v543
        %577 = vst [vmem:[%s187 + $0xd0] sm:$0xff] %v544
        %578 = vst [vmem:[%s187 + $0xd8] sm:$0xff] %v545
        %579 = vst [vmem:[%s187 + $0xe0] sm:$0xff] %v546
        %580 = vst [vmem:[%s187 + $0xe8] sm:$0xff] %v547
        %581 = vst [vmem:[%s187 + $0xf0] sm:$0xff] %v548
        %582 = vst.msk [vmem:[%s187 + $0xf8] sm:$0xff] %vm557, %v549
        %p583 = scmp.lt.s32.totalorder %s15, 1
        %s584 = scalar_select %p583, %s15, 1
        %s585 = smul.addr %s584, 32
        %s586 = smul.addr %s585, 8
        %s587 = scalar_lea.vmem %s3, %s586
        // Predicated region
        $region37: #{net_forward.2} parent=31 // pred_check
          %p588 = pneg %p101
        $region38: #{net_forward.2} parent=31 // pred_check_branch
          %590 = sbr.rel (%p588) target = $region40
        $region39: #{net_forward.2} parent=31 // pred_region
          _
        $region40: #{net_forward.2} parent=31 // pred_fallthru
          _
      $region32: #{net_forward.2} parent=5 // pred_fallthru
        _
      %p591 = scmp.le.s32.totalorder 2, %s10
      // Predicated region
      $region41: #{net_forward.2} parent=5 // pred_check
        %p592 = pneg %p591
      $region42: #{net_forward.2} parent=5 // pred_check_branch
        %594 = sbr.rel (%p592) target = $region44
      $region43: #{net_forward.2} parent=5 // pred_region
        %s595 = ssub.s32 %s10, 2
        // Predicated region
        $region45: #{net_forward.2} parent=43 // pred_check
          %p596 = pneg %p107
        $region46: #{net_forward.2} parent=43 // pred_check_branch
          %598 = sbr.rel (%p596) target = $region48
        $region47: #{net_forward.2} parent=43 // pred_region
          %p599 = scmp.lt.s32.totalorder %s16, 1
          %s600 = scalar_select %p599, %s16, 1
          %s601 = smul.addr %s600, 32
          %s602 = smul.addr %s601, 8
          %s603 = scalar_lea.vmem %s3, %s602
        $region48: #{net_forward.2} parent=43 // pred_fallthru
          _
      $region44: #{net_forward.2} parent=5 // pred_fallthru
        _
    $region6: #{net_forward.2} parent=1 // loop_footer
      %s14 = sadd.s32 1, %s10
    $region7: #{net_forward.2} parent=1 // loop_footer_branch
      %9 = sbr.rel target = $region3
    $region8: #{net_forward.2} parent=1 // loop_exit
      _
    %604 = vsyncpa [#allocation3], 1
    %s605 = scalar_lea.sflag [#allocation3], 1
    %606 = vsyncpa %s605, 1

// kernel: net_forward.3
$region0: #{net_forward.3}
  #allocation0 [shape = 'u32[]', space=smem, size = 0x4, offset = 0x4, fixed_abs, tag = 'smem constant byte address 0x4 - core index']
  #allocation1 [shape = 'u32[72,128]{1,0:T(1,128)}', space=vmem, size = 0x9000, scoped, tag = 'internal scratch']
  #allocation2 [shape = 'f32[2,128]{1,0:T(2,128)}', space=vmem, size = 0x400, scoped, tag = 'scratch operand']
  %s0 = inlined_call_operand.vmem [shape: f32[2,28800], index: 0, kind: input, shape index: {}]
  %s1 = inlined_call_operand.hbm [shape: f32[28800,128], index: 1, kind: input, shape index: {}]
  %s2 = inlined_call_operand.hbm [shape: f32[1,128], index: 2, kind: input, shape index: {}]
  %s3 = inlined_call_operand.vmem [shape: f32[128,10], index: 3, kind: input, shape index: {}]
  %s4 = inlined_call_operand.hbm [shape: f32[1,10], index: 4, kind: input, shape index: {}]
  %s5 = inlined_call_operand.hbm [shape: f32[2,10], index: 5, kind: output, shape index: {}]
  %s6 = sld [smem:[#allocation0]]
  $region73: #{net_forward.3} parent=0
    _
  %s8 = ssub.s32 1, %s6
  %s9 = scalar_select 0, %s8, %s6
  $region1: #{net_forward.3} parent=0
    #allocation3 [shape = 'u8[9830400]{0}', space=vmem, size = 0x960000, scoped, tag = 'input window, operand 1']
    #allocation4 [shape = 's32[2]{0}', space=sflag, size = 0x8, scoped, tag = 'scoped memory for net_forward.3']
    #allocation5 [shape = 's32[2]{0}', space=sflag, size = 0x8, scoped, tag = 'scoped memory for net_forward.3']
    #allocation6 [shape = 'u8[512]{0}', space=vmem, size = 0x400, scoped, tag = 'input window, operand 2, single buffered']
    #allocation7 [shape = 's32[1]{0}', space=sflag, size = 0x4, scoped, tag = 'scoped memory for net_forward.3']
    #allocation8 [shape = 'u8[512]{0}', space=vmem, size = 0x400, scoped, tag = 'input window, operand 4, single buffered']
    #allocation9 [shape = 'u8[1024]{0}', space=vmem, size = 0x400, scoped, tag = 'output window, operand 0, single buffered']
    %10 = vsyncpa [#allocation4], 0
    %s11 = scalar_lea.sflag [#allocation4], 1
    %12 = vsyncpa %s11, 0
    %13 = vsyncpa [#allocation7], 0
    %14 = vsyncpa [#allocation5], 0
    loop: start=0, step=1, limit=5
    $region2: #{net_forward.3} parent=1 // loop_pre_header
      _
    $region3: #{net_forward.3} parent=1 // loop_header
      %s16 = sphi 0, %s20
      %p17 = scmp.ge.s32.totalorder %s16, 5
      %s26 = sphi 0, %s28
      %s29 = sphi 0, %s26
      %s30 = sphi 0, %s29
      %s46 = sphi 0, %s30
      %s52 = sphi 0, %s54
      %s55 = sphi 0, %s52
      %s56 = sphi 0, %s55
      %s72 = sphi 0, %s56
      %s76 = sphi 0, %s76
      %s78 = sphi 0, %s76
      %s79 = sphi 0, %s78
      %s93 = sphi 0, %s79
      %s97 = sphi 0, %s97
      %s99 = sphi 0, %s97
      %s100 = sphi 0, %s99
      %s114 = sphi 0, %s100
      %s118 = sphi 0, %s118
      %s120 = sphi 0, %s118
      %s121 = sphi 0, %s120
      %s135 = sphi 0, %s121
      %s139 = sphi 0, %s139
      %s141 = sphi 0, %s139
      %s142 = sphi 0, %s141
      %s156 = sphi 0, %s142
    $region4: #{net_forward.3} parent=1 // loop_header_branch
      %19 = sbr.rel (%p17) target = $region8
    $region5: #{net_forward.3} parent=1 // loop_body
      %s21 = ssub.s32 %s16, 1
      %s22 = ssub.s32 %s16, 2
      %s23 = sadd.s32 %s16, 1
      %s24 = ssub.s32 %s16, %s23
      %p25 = scmp.eq.s32.totalorder %s24, 0
      %s27 = sadd.s32 %s26, 1
      %s28 = scalar_select %p25, %s26, %s27
      %p31 = pneg %p25
      %p32 = scmp.eq.s32.totalorder %s16, 2
      %p33 = por %p31, %p32
      %p34 = scmp.ne.s32.totalorder %s26, %s29
      %p35 = scmp.eq.s32.totalorder %s16, 0
      %p36 = por %p34, %p35
      %p37 = scmp.ne.s32.totalorder %s26, %s29
      %p38 = scmp.eq.s32.totalorder %s21, 2
      %p39 = por %p37, %p38
      %p40 = scmp.ne.s32.totalorder %s29, %s30
      %p41 = scmp.eq.s32.totalorder %s21, 0
      %p42 = por %p40, %p41
      %p43 = scmp.ne.s32.totalorder %s29, %s30
      %p44 = scmp.eq.s32.totalorder %s22, 2
      %p45 = por %p43, %p44
      %p47 = scmp.ne.s32.totalorder %s30, %s46
      %p48 = scmp.eq.s32.totalorder %s22, 0
      %p49 = por %p47, %p48
      %s50 = ssub.s32 %s16, %s23
      %p51 = scmp.eq.s32.totalorder %s50, 0
      %s53 = sadd.s32 %s52, 1
      %s54 = scalar_select %p51, %s52, %s53
      %p57 = pneg %p51
      %p58 = scmp.eq.s32.totalorder %s16, 2
      %p59 = por %p57, %p58
      %p60 = scmp.ne.s32.totalorder %s52, %s55
      %p61 = scmp.eq.s32.totalorder %s16, 0
      %p62 = por %p60, %p61
      %p63 = scmp.ne.s32.totalorder %s52, %s55
      %p64 = scmp.eq.s32.totalorder %s21, 2
      %p65 = por %p63, %p64
      %p66 = scmp.ne.s32.totalorder %s55, %s56
      %p67 = scmp.eq.s32.totalorder %s21, 0
      %p68 = por %p66, %p67
      %p69 = scmp.ne.s32.totalorder %s55, %s56
      %p70 = scmp.eq.s32.totalorder %s22, 2
      %p71 = por %p69, %p70
      %p73 = scmp.ne.s32.totalorder %s56, %s72
      %p74 = scmp.eq.s32.totalorder %s22, 0
      %p75 = por %p73, %p74
      %s77 = sadd.s32 %s76, 1
      %p80 = scmp.eq.s32.totalorder %s16, 2
      %p81 = scmp.ne.s32.totalorder %s76, %s78
      %p82 = scmp.eq.s32.totalorder %s16, 0
      %p83 = por %p81, %p82
      %p84 = scmp.ne.s32.totalorder %s76, %s78
      %p85 = scmp.eq.s32.totalorder %s21, 2
      %p86 = por %p84, %p85
      %p87 = scmp.ne.s32.totalorder %s78, %s79
      %p88 = scmp.eq.s32.totalorder %s21, 0
      %p89 = por %p87, %p88
      %p90 = scmp.ne.s32.totalorder %s78, %s79
      %p91 = scmp.eq.s32.totalorder %s22, 2
      %p92 = por %p90, %p91
      %p94 = scmp.ne.s32.totalorder %s79, %s93
      %p95 = scmp.eq.s32.totalorder %s22, 0
      %p96 = por %p94, %p95
      %s98 = sadd.s32 %s97, 1
      %p101 = scmp.eq.s32.totalorder %s16, 2
      %p102 = scmp.ne.s32.totalorder %s97, %s99
      %p103 = scmp.eq.s32.totalorder %s16, 0
      %p104 = por %p102, %p103
      %p105 = scmp.ne.s32.totalorder %s97, %s99
      %p106 = scmp.eq.s32.totalorder %s21, 2
      %p107 = por %p105, %p106
      %p108 = scmp.ne.s32.totalorder %s99, %s100
      %p109 = scmp.eq.s32.totalorder %s21, 0
      %p110 = por %p108, %p109
      %p111 = scmp.ne.s32.totalorder %s99, %s100
      %p112 = scmp.eq.s32.totalorder %s22, 2
      %p113 = por %p111, %p112
      %p115 = scmp.ne.s32.totalorder %s100, %s114
      %p116 = scmp.eq.s32.totalorder %s22, 0
      %p117 = por %p115, %p116
      %s119 = sadd.s32 %s118, 1
      %p122 = scmp.eq.s32.totalorder %s16, 2
      %p123 = scmp.ne.s32.totalorder %s118, %s120
      %p124 = scmp.eq.s32.totalorder %s16, 0
      %p125 = por %p123, %p124
      %p126 = scmp.ne.s32.totalorder %s118, %s120
      %p127 = scmp.eq.s32.totalorder %s21, 2
      %p128 = por %p126, %p127
      %p129 = scmp.ne.s32.totalorder %s120, %s121
      %p130 = scmp.eq.s32.totalorder %s21, 0
      %p131 = por %p129, %p130
      %p132 = scmp.ne.s32.totalorder %s120, %s121
      %p133 = scmp.eq.s32.totalorder %s22, 2
      %p134 = por %p132, %p133
      %p136 = scmp.ne.s32.totalorder %s121, %s135
      %p137 = scmp.eq.s32.totalorder %s22, 0
      %p138 = por %p136, %p137
      %s140 = sadd.s32 %s139, 1
      %p143 = scmp.eq.s32.totalorder %s16, 2
      %p144 = scmp.ne.s32.totalorder %s139, %s141
      %p145 = scmp.eq.s32.totalorder %s16, 0
      %p146 = por %p144, %p145
      %p147 = scmp.ne.s32.totalorder %s139, %s141
      %p148 = scmp.eq.s32.totalorder %s21, 2
      %p149 = por %p147, %p148
      %p150 = scmp.ne.s32.totalorder %s141, %s142
      %p151 = scmp.eq.s32.totalorder %s21, 0
      %p152 = por %p150, %p151
      %p153 = scmp.ne.s32.totalorder %s141, %s142
      %p154 = scmp.eq.s32.totalorder %s22, 2
      %p155 = por %p153, %p154
      %p157 = scmp.ne.s32.totalorder %s142, %s156
      %p158 = scmp.eq.s32.totalorder %s22, 0
      %p159 = por %p157, %p158
      %p160 = scmp.le.s32.totalorder 1, %s16
      %p161 = scmp.lt.s32.totalorder %s16, 4
      %p162 = pnand %p160, %p161
      %p163 = pneg %p162
      // Predicated region
      $region9: #{net_forward.3} parent=5 // pred_check
        _
      $region10: #{net_forward.3} parent=5 // pred_check_branch
        %165 = sbr.rel (%p162) target = $region12
      $region11: #{net_forward.3} parent=5 // pred_region
        %s166 = ssub.s32 %s16, 1
        // Predicated region
        $region13: #{net_forward.3} parent=11 // pred_check
          %p167 = pneg %p89
        $region14: #{net_forward.3} parent=11 // pred_check_branch
          %169 = sbr.rel (%p167) target = $region16
        $region15: #{net_forward.3} parent=11 // pred_region
          %171 = vsyncadd [#allocation7], 0
          %s173 = sshll.u32 %s2, 4
          %s174 = int_to_ptr.hbm [resolvable:$true] %s173
          %s175 = sshll.u32 [#allocation6], 4
          %s176 = int_to_ptr.vmem [resolvable:$true] %s175
          %178 = dma.hbm_to_vmem [thread:$0]  %s174, 16, %s176, [#allocation7]
        $region16: #{net_forward.3} parent=11 // pred_fallthru
          _
        // Predicated region
        $region17: #{net_forward.3} parent=11 // pred_check
          %p179 = pneg %p110
        $region18: #{net_forward.3} parent=11 // pred_check_branch
          %181 = sbr.rel (%p179) target = $region20
        $region19: #{net_forward.3} parent=11 // pred_region
          _
        $region20: #{net_forward.3} parent=11 // pred_fallthru
          _
        // Predicated region
        $region21: #{net_forward.3} parent=11 // pred_check
          %p182 = pneg %p131
        $region22: #{net_forward.3} parent=11 // pred_check_branch
          %184 = sbr.rel (%p182) target = $region24
        $region23: #{net_forward.3} parent=11 // pred_region
          %186 = vsyncadd [#allocation7], 0
          %s188 = sshll.u32 %s4, 4
          %s189 = int_to_ptr.hbm [resolvable:$true] %s188
          %s190 = sshll.u32 [#allocation8], 4
          %s191 = int_to_ptr.vmem [resolvable:$true] %s190
          %193 = dma.hbm_to_vmem [thread:$0]  %s189, 16, %s191, [#allocation7]
        $region24: #{net_forward.3} parent=11 // pred_fallthru
          _
      $region12: #{net_forward.3} parent=5 // pred_fallthru
        _
      %p194 = scmp.lt.s32.totalorder %s16, 3
      // Predicated region
      $region25: #{net_forward.3} parent=5 // pred_check
        %p195 = pneg %p194
      $region26: #{net_forward.3} parent=5 // pred_check_branch
        %197 = sbr.rel (%p195) target = $region28
      $region27: #{net_forward.3} parent=5 // pred_region
        // Predicated region
        $region29: #{net_forward.3} parent=27 // pred_check
          %p198 = pneg %p36
        $region30: #{net_forward.3} parent=27 // pred_check_branch
          %200 = sbr.rel (%p198) target = $region32
        $region31: #{net_forward.3} parent=27 // pred_region
          %s201 = smul.u32 75, %s16
          %p202 = scmp.lt.s32.totalorder %s201, 224
          %s203 = scalar_select %p202, %s201, 224
          %s204 = smul.addr %s203, 2
          %s205 = scalar_lea.vmem %s0, %s204
          %s206 = smul.u32 75, %s16
        $region32: #{net_forward.3} parent=27 // pred_fallthru
          _
        // Predicated region
        $region33: #{net_forward.3} parent=27 // pred_check
          %p207 = pneg %p62
        $region34: #{net_forward.3} parent=27 // pred_check_branch
          %209 = sbr.rel (%p207) target = $region36
        $region35: #{net_forward.3} parent=27 // pred_region
          %s210 = sand.u32 %s52, 1
          %s211 = scalar_lea.sflag [#allocation4], %s210
          %s212 = sand.u32 %s52, 1
          %s213 = smul.addr %s212, 9600
          %s214 = scalar_lea.vmem [#allocation3], %s213
          %s215 = smul.u32 1200, %s16
          %217 = vsyncadd %s211, 0
          %s218 = smul.addr %s215, 8
          %s219 = scalar_lea.hbm %s1, %s218
          %s220 = sshll.u32 %s219, 4
          %s221 = int_to_ptr.hbm [resolvable:$true] %s220
          %s222 = sshll.u32 %s214, 4
          %s223 = int_to_ptr.vmem [resolvable:$true] %s222
          %228 = dma.hbm_to_vmem [thread:$0]  %s221, 153600, %s223, %s211, 128, 128, 8
        $region36: #{net_forward.3} parent=27 // pred_fallthru
          _
      $region28: #{net_forward.3} parent=5 // pred_fallthru
        _
      %p229 = scmp.le.s32.totalorder 1, %s16
      %p230 = scmp.lt.s32.totalorder %s16, 4
      %p231 = pnand %p229, %p230
      %p232 = pneg %p231
      // Predicated region
      $region37: #{net_forward.3} parent=5 // pred_check
        _
      $region38: #{net_forward.3} parent=5 // pred_check_branch
        %234 = sbr.rel (%p231) target = $region40
      $region39: #{net_forward.3} parent=5 // pred_region
        %s235 = ssub.s32 %s16, 1
        %s236 = sand.u32 %s55, 1
        %s237 = scalar_lea.sflag [#allocation4], %s236
        %s238 = sand.u32 %s55, 1
        %s239 = smul.addr %s238, 9600
        %s240 = scalar_lea.vmem [#allocation3], %s239
        // Predicated region
        $region41: #{net_forward.3} parent=39 // pred_check
          %p241 = pneg %p68
        $region42: #{net_forward.3} parent=39 // pred_check_branch
          %243 = sbr.rel (%p241) target = $region44
        $region43: #{net_forward.3} parent=39 // pred_region
          %245 = dma.done %s237, 153600
        $region44: #{net_forward.3} parent=39 // pred_fallthru
          _
        // Predicated region
        $region45: #{net_forward.3} parent=39 // pred_check
          %p246 = pneg %p89
        $region46: #{net_forward.3} parent=39 // pred_check_branch
          %248 = sbr.rel (%p246) target = $region48
        $region47: #{net_forward.3} parent=39 // pred_region
          %250 = dma.done [#allocation7], 16
        $region48: #{net_forward.3} parent=39 // pred_fallthru
          _
        // Predicated region
        $region49: #{net_forward.3} parent=39 // pred_check
          %p251 = pneg %p131
        $region50: #{net_forward.3} parent=39 // pred_check_branch
          %253 = sbr.rel (%p251) target = $region52
        $region51: #{net_forward.3} parent=39 // pred_region
          %255 = dma.done [#allocation7], 16
        $region52: #{net_forward.3} parent=39 // pred_fallthru
          _
        %s256 = smul.u32 75, %s21
        %p257 = scmp.lt.s32.totalorder %s256, 224
        %s258 = scalar_select %p257, %s256, 224
        %s259 = smul.addr %s258, 2
        %s260 = scalar_lea.vmem %s0, %s259
        %p261 = pneg %p42
        %p262 = pneg %p39
        %s263 = sand.u32 %s55, 1
        %s264 = scalar_lea.sflag [#allocation4], %s263
        %s265 = sand.u32 %s55, 1
        %s266 = smul.addr %s265, 9600
        %s267 = scalar_lea.vmem [#allocation3], %s266
        %p268 = pneg %p68
        %p269 = pneg %p65
        %p270 = pneg %p89
        %p271 = pneg %p86
        %p272 = pneg %p110
        %p273 = pneg %p107
        %p274 = pneg %p131
        %p275 = pneg %p128
        %p276 = pneg %p152
        %p277 = pneg %p149
        %s278 = smul.u32 75, %s21
        %p279 = scmp.lt.s32.totalorder %s278, 224
        %s280 = scalar_select %p279, %s278, 224
        %s281 = smul.addr %s280, 2
        %s282 = scalar_lea.vmem %s0, %s281
        %s283 = smul.u32 75, %s21
        %s284 = smul.u32 1200, %s21
        %p285 = scmp.eq.s32.totalorder %s21, 0
        // Predicated region
        $region53: #{net_forward.3} parent=39 // pred_check
          %p286 = pneg %p285
        $region54: #{net_forward.3} parent=39 // pred_check_branch
          %288 = sbr.rel (%p286) target = $region56
        $region55: #{net_forward.3} parent=39 // pred_region
          %289 = vst [vmem:[#allocation2] sm:$0x3] 0.0
        $region56: #{net_forward.3} parent=39 // pred_fallthru
          _
        %v290 = vld [vmem:[#allocation2] sm:$0x3]
        %v291 = vld [vmem:[%s282] sm:$0xff]
        %v292 = vld [vmem:[%s282 + $0x8] sm:$0xff]
        %v293 = vld [vmem:[%s282 + $0x10] sm:$0xff]
        %v294 = vld [vmem:[%s282 + $0x18] sm:$0xff]
        %v295 = vld [vmem:[%s282 + $0x20] sm:$0xff]
        %v296 = vld [vmem:[%s282 + $0x28] sm:$0xff]
        %v297 = vld [vmem:[%s282 + $0x30] sm:$0xff]
        %v298 = vld [vmem:[%s282 + $0x38] sm:$0xff]
        %v299 = vld [vmem:[%s282 + $0x40] sm:$0xff]
        %v300 = vld [vmem:[%s282 + $0x48] sm:$0xff]
        %v301 = vld [vmem:[%s282 + $0x50] sm:$0xff]
        %v302 = vld [vmem:[%s282 + $0x58] sm:$0xff]
        %v303 = vld [vmem:[%s282 + $0x60] sm:$0xff]
        %v304 = vld [vmem:[%s282 + $0x68] sm:$0xff]
        %v305 = vld [vmem:[%s282 + $0x70] sm:$0xff]
        %v306 = vld [vmem:[%s282 + $0x78] sm:$0xff]
        %v307 = vld [vmem:[%s282 + $0x80] sm:$0xff]
        %v308 = vld [vmem:[%s282 + $0x88] sm:$0xff]
        %v309 = vld [vmem:[%s282 + $0x90] sm:$0x3f]
        %v310 = vld [vmem:[%s240] sm:$0xff]
        %v311 = vld [vmem:[%s240 + $0x8] sm:$0xff]
        %v312 = vld [vmem:[%s240 + $0x10] sm:$0xff]
        %v313 = vld [vmem:[%s240 + $0x18] sm:$0xff]
        %v314 = vld [vmem:[%s240 + $0x20] sm:$0xff]
        %v315 = vld [vmem:[%s240 + $0x28] sm:$0xff]
        %v316 = vld [vmem:[%s240 + $0x30] sm:$0xff]
        %v317 = vld [vmem:[%s240 + $0x38] sm:$0xff]
        %v318 = vld [vmem:[%s240 + $0x40] sm:$0xff]
        %v319 = vld [vmem:[%s240 + $0x48] sm:$0xff]
        %v320 = vld [vmem:[%s240 + $0x50] sm:$0xff]
        %v321 = vld [vmem:[%s240 + $0x58] sm:$0xff]
        %v322 = vld [vmem:[%s240 + $0x60] sm:$0xff]
        %v323 = vld [vmem:[%s240 + $0x68] sm:$0xff]
        %v324 = vld [vmem:[%s240 + $0x70] sm:$0xff]
        %v325 = vld [vmem:[%s240 + $0x78] sm:$0xff]
        %v326 = vld [vmem:[%s240 + $0x80] sm:$0xff]
        %v327 = vld [vmem:[%s240 + $0x88] sm:$0xff]
        %v328 = vld [vmem:[%s240 + $0x90] sm:$0xff]
        %v329 = vld [vmem:[%s240 + $0x98] sm:$0xff]
        %v330 = vld [vmem:[%s240 + $0xa0] sm:$0xff]
        %v331 = vld [vmem:[%s240 + $0xa8] sm:$0xff]
        %v332 = vld [vmem:[%s240 + $0xb0] sm:$0xff]
        %v333 = vld [vmem:[%s240 + $0xb8] sm:$0xff]
        %v334 = vld [vmem:[%s240 + $0xc0] sm:$0xff]
        %v335 = vld [vmem:[%s240 + $0xc8] sm:$0xff]
        %v336 = vld [vmem:[%s240 + $0xd0] sm:$0xff]
        %v337 = vld [vmem:[%s240 + $0xd8] sm:$0xff]
        %v338 = vld [vmem:[%s240 + $0xe0] sm:$0xff]
        %v339 = vld [vmem:[%s240 + $0xe8] sm:$0xff]
        %v340 = vld [vmem:[%s240 + $0xf0] sm:$0xff]
        %v341 = vld [vmem:[%s240 + $0xf8] sm:$0xff]
        %v342 = vld [vmem:[%s240 + $0x100] sm:$0xff]
        %v343 = vld [vmem:[%s240 + $0x108] sm:$0xff]
        %v344 = vld [vmem:[%s240 + $0x110] sm:$0xff]
        %v345 = vld [vmem:[%s240 + $0x118] sm:$0xff]
        %v346 = vld [vmem:[%s240 + $0x120] sm:$0xff]
        %v347 = vld [vmem:[%s240 + $0x128] sm:$0xff]
        %v348 = vld [vmem:[%s240 + $0x130] sm:$0xff]
        %v349 = vld [vmem:[%s240 + $0x138] sm:$0xff]
        %v350 = vld [vmem:[%s240 + $0x140] sm:$0xff]
        %v351 = vld [vmem:[%s240 + $0x148] sm:$0xff]
        %v352 = vld [vmem:[%s240 + $0x150] sm:$0xff]
        %v353 = vld [vmem:[%s240 + $0x158] sm:$0xff]
        %v354 = vld [vmem:[%s240 + $0x160] sm:$0xff]
        %v355 = vld [vmem:[%s240 + $0x168] sm:$0xff]
        %v356 = vld [vmem:[%s240 + $0x170] sm:$0xff]
        %v357 = vld [vmem:[%s240 + $0x178] sm:$0xff]
        %v358 = vld [vmem:[%s240 + $0x180] sm:$0xff]
        %v359 = vld [vmem:[%s240 + $0x188] sm:$0xff]
        %v360 = vld [vmem:[%s240 + $0x190] sm:$0xff]
        %v361 = vld [vmem:[%s240 + $0x198] sm:$0xff]
        %v362 = vld [vmem:[%s240 + $0x1a0] sm:$0xff]
        %v363 = vld [vmem:[%s240 + $0x1a8] sm:$0xff]
        %v364 = vld [vmem:[%s240 + $0x1b0] sm:$0xff]
        %v365 = vld [vmem:[%s240 + $0x1b8] sm:$0xff]
        %v366 = vld [vmem:[%s240 + $0x1c0] sm:$0xff]
        %v367 = vld [vmem:[%s240 + $0x1c8] sm:$0xff]
        %v368 = vld [vmem:[%s240 + $0x1d0] sm:$0xff]
        %v369 = vld [vmem:[%s240 + $0x1d8] sm:$0xff]
        %v370 = vld [vmem:[%s240 + $0x1e0] sm:$0xff]
        %v371 = vld [vmem:[%s240 + $0x1e8] sm:$0xff]
        %v372 = vld [vmem:[%s240 + $0x1f0] sm:$0xff]
        %v373 = vld [vmem:[%s240 + $0x1f8] sm:$0xff]
        %v374 = vld [vmem:[%s240 + $0x200] sm:$0xff]
        %v375 = vld [vmem:[%s240 + $0x208] sm:$0xff]
        %v376 = vld [vmem:[%s240 + $0x210] sm:$0xff]
        %v377 = vld [vmem:[%s240 + $0x218] sm:$0xff]
        %v378 = vld [vmem:[%s240 + $0x220] sm:$0xff]
        %v379 = vld [vmem:[%s240 + $0x228] sm:$0xff]
        %v380 = vld [vmem:[%s240 + $0x230] sm:$0xff]
        %v381 = vld [vmem:[%s240 + $0x238] sm:$0xff]
        %v382 = vld [vmem:[%s240 + $0x240] sm:$0xff]
        %v383 = vld [vmem:[%s240 + $0x248] sm:$0xff]
        %v384 = vld [vmem:[%s240 + $0x250] sm:$0xff]
        %v385 = vld [vmem:[%s240 + $0x258] sm:$0xff]
        %v386 = vld [vmem:[%s240 + $0x260] sm:$0xff]
        %v387 = vld [vmem:[%s240 + $0x268] sm:$0xff]
        %v388 = vld [vmem:[%s240 + $0x270] sm:$0xff]
        %v389 = vld [vmem:[%s240 + $0x278] sm:$0xff]
        %v390 = vld [vmem:[%s240 + $0x280] sm:$0xff]
        %v391 = vld [vmem:[%s240 + $0x288] sm:$0xff]
        %v392 = vld [vmem:[%s240 + $0x290] sm:$0xff]
        %v393 = vld [vmem:[%s240 + $0x298] sm:$0xff]
        %v394 = vld [vmem:[%s240 + $0x2a0] sm:$0xff]
        %v395 = vld [vmem:[%s240 + $0x2a8] sm:$0xff]
        %v396 = vld [vmem:[%s240 + $0x2b0] sm:$0xff]
        %v397 = vld [vmem:[%s240 + $0x2b8] sm:$0xff]
        %v398 = vld [vmem:[%s240 + $0x2c0] sm:$0xff]
        %v399 = vld [vmem:[%s240 + $0x2c8] sm:$0xff]
        %v400 = vld [vmem:[%s240 + $0x2d0] sm:$0xff]
        %v401 = vld [vmem:[%s240 + $0x2d8] sm:$0xff]
        %v402 = vld [vmem:[%s240 + $0x2e0] sm:$0xff]
        %v403 = vld [vmem:[%s240 + $0x2e8] sm:$0xff]
        %v404 = vld [vmem:[%s240 + $0x2f0] sm:$0xff]
        %v405 = vld [vmem:[%s240 + $0x2f8] sm:$0xff]
        %v406 = vld [vmem:[%s240 + $0x300] sm:$0xff]
        %v407 = vld [vmem:[%s240 + $0x308] sm:$0xff]
        %v408 = vld [vmem:[%s240 + $0x310] sm:$0xff]
        %v409 = vld [vmem:[%s240 + $0x318] sm:$0xff]
        %v410 = vld [vmem:[%s240 + $0x320] sm:$0xff]
        %v411 = vld [vmem:[%s240 + $0x328] sm:$0xff]
        %v412 = vld [vmem:[%s240 + $0x330] sm:$0xff]
        %v413 = vld [vmem:[%s240 + $0x338] sm:$0xff]
        %v414 = vld [vmem:[%s240 + $0x340] sm:$0xff]
        %v415 = vld [vmem:[%s240 + $0x348] sm:$0xff]
        %v416 = vld [vmem:[%s240 + $0x350] sm:$0xff]
        %v417 = vld [vmem:[%s240 + $0x358] sm:$0xff]
        %v418 = vld [vmem:[%s240 + $0x360] sm:$0xff]
        %v419 = vld [vmem:[%s240 + $0x368] sm:$0xff]
        %v420 = vld [vmem:[%s240 + $0x370] sm:$0xff]
        %v421 = vld [vmem:[%s240 + $0x378] sm:$0xff]
        %v422 = vld [vmem:[%s240 + $0x380] sm:$0xff]
        %v423 = vld [vmem:[%s240 + $0x388] sm:$0xff]
        %v424 = vld [vmem:[%s240 + $0x390] sm:$0xff]
        %v425 = vld [vmem:[%s240 + $0x398] sm:$0xff]
        %v426 = vld [vmem:[%s240 + $0x3a0] sm:$0xff]
        %v427 = vld [vmem:[%s240 + $0x3a8] sm:$0xff]
        %v428 = vld [vmem:[%s240 + $0x3b0] sm:$0xff]
        %v429 = vld [vmem:[%s240 + $0x3b8] sm:$0xff]
        %v430 = vld [vmem:[%s240 + $0x3c0] sm:$0xff]
        %v431 = vld [vmem:[%s240 + $0x3c8] sm:$0xff]
        %v432 = vld [vmem:[%s240 + $0x3d0] sm:$0xff]
        %v433 = vld [vmem:[%s240 + $0x3d8] sm:$0xff]
        %v434 = vld [vmem:[%s240 + $0x3e0] sm:$0xff]
        %v435 = vld [vmem:[%s240 + $0x3e8] sm:$0xff]
        %v436 = vld [vmem:[%s240 + $0x3f0] sm:$0xff]
        %v437 = vld [vmem:[%s240 + $0x3f8] sm:$0xff]
        %v438 = vld [vmem:[%s240 + $0x400] sm:$0xff]
        %v439 = vld [vmem:[%s240 + $0x408] sm:$0xff]
        %v440 = vld [vmem:[%s240 + $0x410] sm:$0xff]
        %v441 = vld [vmem:[%s240 + $0x418] sm:$0xff]
        %v442 = vld [vmem:[%s240 + $0x420] sm:$0xff]
        %v443 = vld [vmem:[%s240 + $0x428] sm:$0xff]
        %v444 = vld [vmem:[%s240 + $0x430] sm:$0xff]
        %v445 = vld [vmem:[%s240 + $0x438] sm:$0xff]
        %v446 = vld [vmem:[%s240 + $0x440] sm:$0xff]
        %v447 = vld [vmem:[%s240 + $0x448] sm:$0xff]
        %v448 = vld [vmem:[%s240 + $0x450] sm:$0xff]
        %v449 = vld [vmem:[%s240 + $0x458] sm:$0xff]
        %v450 = vld [vmem:[%s240 + $0x460] sm:$0xff]
        %v451 = vld [vmem:[%s240 + $0x468] sm:$0xff]
        %v452 = vld [vmem:[%s240 + $0x470] sm:$0xff]
        %v453 = vld [vmem:[%s240 + $0x478] sm:$0xff]
        %v454 = vld [vmem:[%s240 + $0x480] sm:$0xff]
        %v455 = vld [vmem:[%s240 + $0x488] sm:$0xff]
        %v456 = vld [vmem:[%s240 + $0x490] sm:$0xff]
        %v457 = vld [vmem:[%s240 + $0x498] sm:$0xff]
        %v458 = vld [vmem:[%s240 + $0x4a0] sm:$0xff]
        %v459 = vld [vmem:[%s240 + $0x4a8] sm:$0xff]
        %v460 = vld [vmem:[%s240 + $0x4b0] sm:$0xff]
        %v461 = vld [vmem:[%s240 + $0x4b8] sm:$0xff]
        %v462 = vld [vmem:[%s240 + $0x4c0] sm:$0xff]
        %v463 = vld [vmem:[%s240 + $0x4c8] sm:$0xff]
        %v464 = vld [vmem:[%s240 + $0x4d0] sm:$0xff]
        %v465 = vld [vmem:[%s240 + $0x4d8] sm:$0xff]
        %v466 = vld [vmem:[%s240 + $0x4e0] sm:$0xff]
        %v467 = vld [vmem:[%s240 + $0x4e8] sm:$0xff]
        %v468 = vld [vmem:[%s240 + $0x4f0] sm:$0xff]
        %v469 = vld [vmem:[%s240 + $0x4f8] sm:$0xff]
        %v470 = vld [vmem:[%s240 + $0x500] sm:$0xff]
        %v471 = vld [vmem:[%s240 + $0x508] sm:$0xff]
        %v472 = vld [vmem:[%s240 + $0x510] sm:$0xff]
        %v473 = vld [vmem:[%s240 + $0x518] sm:$0xff]
        %v474 = vld [vmem:[%s240 + $0x520] sm:$0xff]
        %v475 = vld [vmem:[%s240 + $0x528] sm:$0xff]
        %v476 = vld [vmem:[%s240 + $0x530] sm:$0xff]
        %v477 = vld [vmem:[%s240 + $0x538] sm:$0xff]
        %v478 = vld [vmem:[%s240 + $0x540] sm:$0xff]
        %v479 = vld [vmem:[%s240 + $0x548] sm:$0xff]
        %v480 = vld [vmem:[%s240 + $0x550] sm:$0xff]
        %v481 = vld [vmem:[%s240 + $0x558] sm:$0xff]
        %v482 = vld [vmem:[%s240 + $0x560] sm:$0xff]
        %v483 = vld [vmem:[%s240 + $0x568] sm:$0xff]
        %v484 = vld [vmem:[%s240 + $0x570] sm:$0xff]
        %v485 = vld [vmem:[%s240 + $0x578] sm:$0xff]
        %v486 = vld [vmem:[%s240 + $0x580] sm:$0xff]
        %v487 = vld [vmem:[%s240 + $0x588] sm:$0xff]
        %v488 = vld [vmem:[%s240 + $0x590] sm:$0xff]
        %v489 = vld [vmem:[%s240 + $0x598] sm:$0xff]
        %v490 = vld [vmem:[%s240 + $0x5a0] sm:$0xff]
        %v491 = vld [vmem:[%s240 + $0x5a8] sm:$0xff]
        %v492 = vld [vmem:[%s240 + $0x5b0] sm:$0xff]
        %v493 = vld [vmem:[%s240 + $0x5b8] sm:$0xff]
        %v494 = vld [vmem:[%s240 + $0x5c0] sm:$0xff]
        %v495 = vld [vmem:[%s240 + $0x5c8] sm:$0xff]
        %v496 = vld [vmem:[%s240 + $0x5d0] sm:$0xff]
        %v497 = vld [vmem:[%s240 + $0x5d8] sm:$0xff]
        %v498 = vld [vmem:[%s240 + $0x5e0] sm:$0xff]
        %v499 = vld [vmem:[%s240 + $0x5e8] sm:$0xff]
        %v500 = vld [vmem:[%s240 + $0x5f0] sm:$0xff]
        %v501 = vld [vmem:[%s240 + $0x5f8] sm:$0xff]
        %v502 = vld [vmem:[%s240 + $0x600] sm:$0xff]
        %v503 = vld [vmem:[%s240 + $0x608] sm:$0xff]
        %v504 = vld [vmem:[%s240 + $0x610] sm:$0xff]
        %v505 = vld [vmem:[%s240 + $0x618] sm:$0xff]
        %v506 = vld [vmem:[%s240 + $0x620] sm:$0xff]
        %v507 = vld [vmem:[%s240 + $0x628] sm:$0xff]
        %v508 = vld [vmem:[%s240 + $0x630] sm:$0xff]
        %v509 = vld [vmem:[%s240 + $0x638] sm:$0xff]
        %v510 = vld [vmem:[%s240 + $0x640] sm:$0xff]
        %v511 = vld [vmem:[%s240 + $0x648] sm:$0xff]
        %v512 = vld [vmem:[%s240 + $0x650] sm:$0xff]
        %v513 = vld [vmem:[%s240 + $0x658] sm:$0xff]
        %v514 = vld [vmem:[%s240 + $0x660] sm:$0xff]
        %v515 = vld [vmem:[%s240 + $0x668] sm:$0xff]
        %v516 = vld [vmem:[%s240 + $0x670] sm:$0xff]
        %v517 = vld [vmem:[%s240 + $0x678] sm:$0xff]
        %v518 = vld [vmem:[%s240 + $0x680] sm:$0xff]
        %v519 = vld [vmem:[%s240 + $0x688] sm:$0xff]
        %v520 = vld [vmem:[%s240 + $0x690] sm:$0xff]
        %v521 = vld [vmem:[%s240 + $0x698] sm:$0xff]
        %v522 = vld [vmem:[%s240 + $0x6a0] sm:$0xff]
        %v523 = vld [vmem:[%s240 + $0x6a8] sm:$0xff]
        %v524 = vld [vmem:[%s240 + $0x6b0] sm:$0xff]
        %v525 = vld [vmem:[%s240 + $0x6b8] sm:$0xff]
        %v526 = vld [vmem:[%s240 + $0x6c0] sm:$0xff]
        %v527 = vld [vmem:[%s240 + $0x6c8] sm:$0xff]
        %v528 = vld [vmem:[%s240 + $0x6d0] sm:$0xff]
        %v529 = vld [vmem:[%s240 + $0x6d8] sm:$0xff]
        %v530 = vld [vmem:[%s240 + $0x6e0] sm:$0xff]
        %v531 = vld [vmem:[%s240 + $0x6e8] sm:$0xff]
        %v532 = vld [vmem:[%s240 + $0x6f0] sm:$0xff]
        %v533 = vld [vmem:[%s240 + $0x6f8] sm:$0xff]
        %v534 = vld [vmem:[%s240 + $0x700] sm:$0xff]
        %v535 = vld [vmem:[%s240 + $0x708] sm:$0xff]
        %v536 = vld [vmem:[%s240 + $0x710] sm:$0xff]
        %v537 = vld [vmem:[%s240 + $0x718] sm:$0xff]
        %v538 = vld [vmem:[%s240 + $0x720] sm:$0xff]
        %v539 = vld [vmem:[%s240 + $0x728] sm:$0xff]
        %v540 = vld [vmem:[%s240 + $0x730] sm:$0xff]
        %v541 = vld [vmem:[%s240 + $0x738] sm:$0xff]
        %v542 = vld [vmem:[%s240 + $0x740] sm:$0xff]
        %v543 = vld [vmem:[%s240 + $0x748] sm:$0xff]
        %v544 = vld [vmem:[%s240 + $0x750] sm:$0xff]
        %v545 = vld [vmem:[%s240 + $0x758] sm:$0xff]
        %v546 = vld [vmem:[%s240 + $0x760] sm:$0xff]
        %v547 = vld [vmem:[%s240 + $0x768] sm:$0xff]
        %v548 = vld [vmem:[%s240 + $0x770] sm:$0xff]
        %v549 = vld [vmem:[%s240 + $0x778] sm:$0xff]
        %v550 = vld [vmem:[%s240 + $0x780] sm:$0xff]
        %v551 = vld [vmem:[%s240 + $0x788] sm:$0xff]
        %v552 = vld [vmem:[%s240 + $0x790] sm:$0xff]
        %v553 = vld [vmem:[%s240 + $0x798] sm:$0xff]
        %v554 = vld [vmem:[%s240 + $0x7a0] sm:$0xff]
        %v555 = vld [vmem:[%s240 + $0x7a8] sm:$0xff]
        %v556 = vld [vmem:[%s240 + $0x7b0] sm:$0xff]
        %v557 = vld [vmem:[%s240 + $0x7b8] sm:$0xff]
        %v558 = vld [vmem:[%s240 + $0x7c0] sm:$0xff]
        %v559 = vld [vmem:[%s240 + $0x7c8] sm:$0xff]
        %v560 = vld [vmem:[%s240 + $0x7d0] sm:$0xff]
        %v561 = vld [vmem:[%s240 + $0x7d8] sm:$0xff]
        %v562 = vld [vmem:[%s240 + $0x7e0] sm:$0xff]
        %v563 = vld [vmem:[%s240 + $0x7e8] sm:$0xff]
        %v564 = vld [vmem:[%s240 + $0x7f0] sm:$0xff]
        %v565 = vld [vmem:[%s240 + $0x7f8] sm:$0xff]
        %v566 = vld [vmem:[%s240 + $0x800] sm:$0xff]
        %v567 = vld [vmem:[%s240 + $0x808] sm:$0xff]
        %v568 = vld [vmem:[%s240 + $0x810] sm:$0xff]
        %v569 = vld [vmem:[%s240 + $0x818] sm:$0xff]
        %v570 = vld [vmem:[%s240 + $0x820] sm:$0xff]
        %v571 = vld [vmem:[%s240 + $0x828] sm:$0xff]
        %v572 = vld [vmem:[%s240 + $0x830] sm:$0xff]
        %v573 = vld [vmem:[%s240 + $0x838] sm:$0xff]
        %v574 = vld [vmem:[%s240 + $0x840] sm:$0xff]
        %v575 = vld [vmem:[%s240 + $0x848] sm:$0xff]
        %v576 = vld [vmem:[%s240 + $0x850] sm:$0xff]
        %v577 = vld [vmem:[%s240 + $0x858] sm:$0xff]
        %v578 = vld [vmem:[%s240 + $0x860] sm:$0xff]
        %v579 = vld [vmem:[%s240 + $0x868] sm:$0xff]
        %v580 = vld [vmem:[%s240 + $0x870] sm:$0xff]
        %v581 = vld [vmem:[%s240 + $0x878] sm:$0xff]
        %v582 = vld [vmem:[%s240 + $0x880] sm:$0xff]
        %v583 = vld [vmem:[%s240 + $0x888] sm:$0xff]
        %v584 = vld [vmem:[%s240 + $0x890] sm:$0xff]
        %v585 = vld [vmem:[%s240 + $0x898] sm:$0xff]
        %v586 = vld [vmem:[%s240 + $0x8a0] sm:$0xff]
        %v587 = vld [vmem:[%s240 + $0x8a8] sm:$0xff]
        %v588 = vld [vmem:[%s240 + $0x8b0] sm:$0xff]
        %v589 = vld [vmem:[%s240 + $0x8b8] sm:$0xff]
        %v590 = vld [vmem:[%s240 + $0x8c0] sm:$0xff]
        %v591 = vld [vmem:[%s240 + $0x8c8] sm:$0xff]
        %v592 = vld [vmem:[%s240 + $0x8d0] sm:$0xff]
        %v593 = vld [vmem:[%s240 + $0x8d8] sm:$0xff]
        %v594 = vld [vmem:[%s240 + $0x8e0] sm:$0xff]
        %v595 = vld [vmem:[%s240 + $0x8e8] sm:$0xff]
        %v596 = vld [vmem:[%s240 + $0x8f0] sm:$0xff]
        %v597 = vld [vmem:[%s240 + $0x8f8] sm:$0xff]
        %v598 = vld [vmem:[%s240 + $0x900] sm:$0xff]
        %v599 = vld [vmem:[%s240 + $0x908] sm:$0xff]
        %v600 = vld [vmem:[%s240 + $0x910] sm:$0xff]
        %v601 = vld [vmem:[%s240 + $0x918] sm:$0xff]
        %v602 = vld [vmem:[%s240 + $0x920] sm:$0xff]
        %v603 = vld [vmem:[%s240 + $0x928] sm:$0xff]
        %v604 = vld [vmem:[%s240 + $0x930] sm:$0xff]
        %v605 = vld [vmem:[%s240 + $0x938] sm:$0xff]
        %v606 = vld [vmem:[%s240 + $0x940] sm:$0xff]
        %v607 = vld [vmem:[%s240 + $0x948] sm:$0xff]
        %v608 = vld [vmem:[%s240 + $0x950] sm:$0xff]
        %v609 = vld [vmem:[%s240 + $0x958] sm:$0xff]
        %v610 = vld [vmem:[%s240 + $0x960] sm:$0xff]
        %v611 = vld [vmem:[%s240 + $0x968] sm:$0xff]
        %v612 = vld [vmem:[%s240 + $0x970] sm:$0xff]
        %v613 = vld [vmem:[%s240 + $0x978] sm:$0xff]
        %v614 = vld [vmem:[%s240 + $0x980] sm:$0xff]
        %v615 = vld [vmem:[%s240 + $0x988] sm:$0xff]
        %v616 = vld [vmem:[%s240 + $0x990] sm:$0xff]
        %v617 = vld [vmem:[%s240 + $0x998] sm:$0xff]
        %v618 = vld [vmem:[%s240 + $0x9a0] sm:$0xff]
        %v619 = vld [vmem:[%s240 + $0x9a8] sm:$0xff]
        %v620 = vld [vmem:[%s240 + $0x9b0] sm:$0xff]
        %v621 = vld [vmem:[%s240 + $0x9b8] sm:$0xff]
        %v622 = vld [vmem:[%s240 + $0x9c0] sm:$0xff]
        %v623 = vld [vmem:[%s240 + $0x9c8] sm:$0xff]
        %v624 = vld [vmem:[%s240 + $0x9d0] sm:$0xff]
        %v625 = vld [vmem:[%s240 + $0x9d8] sm:$0xff]
        %v626 = vld [vmem:[%s240 + $0x9e0] sm:$0xff]
        %v627 = vld [vmem:[%s240 + $0x9e8] sm:$0xff]
        %v628 = vld [vmem:[%s240 + $0x9f0] sm:$0xff]
        %v629 = vld [vmem:[%s240 + $0x9f8] sm:$0xff]
        %v630 = vld [vmem:[%s240 + $0xa00] sm:$0xff]
        %v631 = vld [vmem:[%s240 + $0xa08] sm:$0xff]
        %v632 = vld [vmem:[%s240 + $0xa10] sm:$0xff]
        %v633 = vld [vmem:[%s240 + $0xa18] sm:$0xff]
        %v634 = vld [vmem:[%s240 + $0xa20] sm:$0xff]
        %v635 = vld [vmem:[%s240 + $0xa28] sm:$0xff]
        %v636 = vld [vmem:[%s240 + $0xa30] sm:$0xff]
        %v637 = vld [vmem:[%s240 + $0xa38] sm:$0xff]
        %v638 = vld [vmem:[%s240 + $0xa40] sm:$0xff]
        %v639 = vld [vmem:[%s240 + $0xa48] sm:$0xff]
        %v640 = vld [vmem:[%s240 + $0xa50] sm:$0xff]
        %v641 = vld [vmem:[%s240 + $0xa58] sm:$0xff]
        %v642 = vld [vmem:[%s240 + $0xa60] sm:$0xff]
        %v643 = vld [vmem:[%s240 + $0xa68] sm:$0xff]
        %v644 = vld [vmem:[%s240 + $0xa70] sm:$0xff]
        %v645 = vld [vmem:[%s240 + $0xa78] sm:$0xff]
        %v646 = vld [vmem:[%s240 + $0xa80] sm:$0xff]
        %v647 = vld [vmem:[%s240 + $0xa88] sm:$0xff]
        %v648 = vld [vmem:[%s240 + $0xa90] sm:$0xff]
        %v649 = vld [vmem:[%s240 + $0xa98] sm:$0xff]
        %v650 = vld [vmem:[%s240 + $0xaa0] sm:$0xff]
        %v651 = vld [vmem:[%s240 + $0xaa8] sm:$0xff]
        %v652 = vld [vmem:[%s240 + $0xab0] sm:$0xff]
        %v653 = vld [vmem:[%s240 + $0xab8] sm:$0xff]
        %v654 = vld [vmem:[%s240 + $0xac0] sm:$0xff]
        %v655 = vld [vmem:[%s240 + $0xac8] sm:$0xff]
        %v656 = vld [vmem:[%s240 + $0xad0] sm:$0xff]
        %v657 = vld [vmem:[%s240 + $0xad8] sm:$0xff]
        %v658 = vld [vmem:[%s240 + $0xae0] sm:$0xff]
        %v659 = vld [vmem:[%s240 + $0xae8] sm:$0xff]
        %v660 = vld [vmem:[%s240 + $0xaf0] sm:$0xff]
        %v661 = vld [vmem:[%s240 + $0xaf8] sm:$0xff]
        %v662 = vld [vmem:[%s240 + $0xb00] sm:$0xff]
        %v663 = vld [vmem:[%s240 + $0xb08] sm:$0xff]
        %v664 = vld [vmem:[%s240 + $0xb10] sm:$0xff]
        %v665 = vld [vmem:[%s240 + $0xb18] sm:$0xff]
        %v666 = vld [vmem:[%s240 + $0xb20] sm:$0xff]
        %v667 = vld [vmem:[%s240 + $0xb28] sm:$0xff]
        %v668 = vld [vmem:[%s240 + $0xb30] sm:$0xff]
        %v669 = vld [vmem:[%s240 + $0xb38] sm:$0xff]
        %v670 = vld [vmem:[%s240 + $0xb40] sm:$0xff]
        %v671 = vld [vmem:[%s240 + $0xb48] sm:$0xff]
        %v672 = vld [vmem:[%s240 + $0xb50] sm:$0xff]
        %v673 = vld [vmem:[%s240 + $0xb58] sm:$0xff]
        %v674 = vld [vmem:[%s240 + $0xb60] sm:$0xff]
        %v675 = vld [vmem:[%s240 + $0xb68] sm:$0xff]
        %v676 = vld [vmem:[%s240 + $0xb70] sm:$0xff]
        %v677 = vld [vmem:[%s240 + $0xb78] sm:$0xff]
        %v678 = vld [vmem:[%s240 + $0xb80] sm:$0xff]
        %v679 = vld [vmem:[%s240 + $0xb88] sm:$0xff]
        %v680 = vld [vmem:[%s240 + $0xb90] sm:$0xff]
        %v681 = vld [vmem:[%s240 + $0xb98] sm:$0xff]
        %v682 = vld [vmem:[%s240 + $0xba0] sm:$0xff]
        %v683 = vld [vmem:[%s240 + $0xba8] sm:$0xff]
        %v684 = vld [vmem:[%s240 + $0xbb0] sm:$0xff]
        %v685 = vld [vmem:[%s240 + $0xbb8] sm:$0xff]
        %v686 = vld [vmem:[%s240 + $0xbc0] sm:$0xff]
        %v687 = vld [vmem:[%s240 + $0xbc8] sm:$0xff]
        %v688 = vld [vmem:[%s240 + $0xbd0] sm:$0xff]
        %v689 = vld [vmem:[%s240 + $0xbd8] sm:$0xff]
        %v690 = vld [vmem:[%s240 + $0xbe0] sm:$0xff]
        %v691 = vld [vmem:[%s240 + $0xbe8] sm:$0xff]
        %v692 = vld [vmem:[%s240 + $0xbf0] sm:$0xff]
        %v693 = vld [vmem:[%s240 + $0xbf8] sm:$0xff]
        %v694 = vld [vmem:[%s240 + $0xc00] sm:$0xff]
        %v695 = vld [vmem:[%s240 + $0xc08] sm:$0xff]
        %v696 = vld [vmem:[%s240 + $0xc10] sm:$0xff]
        %v697 = vld [vmem:[%s240 + $0xc18] sm:$0xff]
        %v698 = vld [vmem:[%s240 + $0xc20] sm:$0xff]
        %v699 = vld [vmem:[%s240 + $0xc28] sm:$0xff]
        %v700 = vld [vmem:[%s240 + $0xc30] sm:$0xff]
        %v701 = vld [vmem:[%s240 + $0xc38] sm:$0xff]
        %v702 = vld [vmem:[%s240 + $0xc40] sm:$0xff]
        %v703 = vld [vmem:[%s240 + $0xc48] sm:$0xff]
        %v704 = vld [vmem:[%s240 + $0xc50] sm:$0xff]
        %v705 = vld [vmem:[%s240 + $0xc58] sm:$0xff]
        %v706 = vld [vmem:[%s240 + $0xc60] sm:$0xff]
        %v707 = vld [vmem:[%s240 + $0xc68] sm:$0xff]
        %v708 = vld [vmem:[%s240 + $0xc70] sm:$0xff]
        %v709 = vld [vmem:[%s240 + $0xc78] sm:$0xff]
        %v710 = vld [vmem:[%s240 + $0xc80] sm:$0xff]
        %v711 = vld [vmem:[%s240 + $0xc88] sm:$0xff]
        %v712 = vld [vmem:[%s240 + $0xc90] sm:$0xff]
        %v713 = vld [vmem:[%s240 + $0xc98] sm:$0xff]
        %v714 = vld [vmem:[%s240 + $0xca0] sm:$0xff]
        %v715 = vld [vmem:[%s240 + $0xca8] sm:$0xff]
        %v716 = vld [vmem:[%s240 + $0xcb0] sm:$0xff]
        %v717 = vld [vmem:[%s240 + $0xcb8] sm:$0xff]
        %v718 = vld [vmem:[%s240 + $0xcc0] sm:$0xff]
        %v719 = vld [vmem:[%s240 + $0xcc8] sm:$0xff]
        %v720 = vld [vmem:[%s240 + $0xcd0] sm:$0xff]
        %v721 = vld [vmem:[%s240 + $0xcd8] sm:$0xff]
        %v722 = vld [vmem:[%s240 + $0xce0] sm:$0xff]
        %v723 = vld [vmem:[%s240 + $0xce8] sm:$0xff]
        %v724 = vld [vmem:[%s240 + $0xcf0] sm:$0xff]
        %v725 = vld [vmem:[%s240 + $0xcf8] sm:$0xff]
        %v726 = vld [vmem:[%s240 + $0xd00] sm:$0xff]
        %v727 = vld [vmem:[%s240 + $0xd08] sm:$0xff]
        %v728 = vld [vmem:[%s240 + $0xd10] sm:$0xff]
        %v729 = vld [vmem:[%s240 + $0xd18] sm:$0xff]
        %v730 = vld [vmem:[%s240 + $0xd20] sm:$0xff]
        %v731 = vld [vmem:[%s240 + $0xd28] sm:$0xff]
        %v732 = vld [vmem:[%s240 + $0xd30] sm:$0xff]
        %v733 = vld [vmem:[%s240 + $0xd38] sm:$0xff]
        %v734 = vld [vmem:[%s240 + $0xd40] sm:$0xff]
        %v735 = vld [vmem:[%s240 + $0xd48] sm:$0xff]
        %v736 = vld [vmem:[%s240 + $0xd50] sm:$0xff]
        %v737 = vld [vmem:[%s240 + $0xd58] sm:$0xff]
        %v738 = vld [vmem:[%s240 + $0xd60] sm:$0xff]
        %v739 = vld [vmem:[%s240 + $0xd68] sm:$0xff]
        %v740 = vld [vmem:[%s240 + $0xd70] sm:$0xff]
        %v741 = vld [vmem:[%s240 + $0xd78] sm:$0xff]
        %v742 = vld [vmem:[%s240 + $0xd80] sm:$0xff]
        %v743 = vld [vmem:[%s240 + $0xd88] sm:$0xff]
        %v744 = vld [vmem:[%s240 + $0xd90] sm:$0xff]
        %v745 = vld [vmem:[%s240 + $0xd98] sm:$0xff]
        %v746 = vld [vmem:[%s240 + $0xda0] sm:$0xff]
        %v747 = vld [vmem:[%s240 + $0xda8] sm:$0xff]
        %v748 = vld [vmem:[%s240 + $0xdb0] sm:$0xff]
        %v749 = vld [vmem:[%s240 + $0xdb8] sm:$0xff]
        %v750 = vld [vmem:[%s240 + $0xdc0] sm:$0xff]
        %v751 = vld [vmem:[%s240 + $0xdc8] sm:$0xff]
        %v752 = vld [vmem:[%s240 + $0xdd0] sm:$0xff]
        %v753 = vld [vmem:[%s240 + $0xdd8] sm:$0xff]
        %v754 = vld [vmem:[%s240 + $0xde0] sm:$0xff]
        %v755 = vld [vmem:[%s240 + $0xde8] sm:$0xff]
        %v756 = vld [vmem:[%s240 + $0xdf0] sm:$0xff]
        %v757 = vld [vmem:[%s240 + $0xdf8] sm:$0xff]
        %v758 = vld [vmem:[%s240 + $0xe00] sm:$0xff]
        %v759 = vld [vmem:[%s240 + $0xe08] sm:$0xff]
        %v760 = vld [vmem:[%s240 + $0xe10] sm:$0xff]
        %v761 = vld [vmem:[%s240 + $0xe18] sm:$0xff]
        %v762 = vld [vmem:[%s240 + $0xe20] sm:$0xff]
        %v763 = vld [vmem:[%s240 + $0xe28] sm:$0xff]
        %v764 = vld [vmem:[%s240 + $0xe30] sm:$0xff]
        %v765 = vld [vmem:[%s240 + $0xe38] sm:$0xff]
        %v766 = vld [vmem:[%s240 + $0xe40] sm:$0xff]
        %v767 = vld [vmem:[%s240 + $0xe48] sm:$0xff]
        %v768 = vld [vmem:[%s240 + $0xe50] sm:$0xff]
        %v769 = vld [vmem:[%s240 + $0xe58] sm:$0xff]
        %v770 = vld [vmem:[%s240 + $0xe60] sm:$0xff]
        %v771 = vld [vmem:[%s240 + $0xe68] sm:$0xff]
        %v772 = vld [vmem:[%s240 + $0xe70] sm:$0xff]
        %v773 = vld [vmem:[%s240 + $0xe78] sm:$0xff]
        %v774 = vld [vmem:[%s240 + $0xe80] sm:$0xff]
        %v775 = vld [vmem:[%s240 + $0xe88] sm:$0xff]
        %v776 = vld [vmem:[%s240 + $0xe90] sm:$0xff]
        %v777 = vld [vmem:[%s240 + $0xe98] sm:$0xff]
        %v778 = vld [vmem:[%s240 + $0xea0] sm:$0xff]
        %v779 = vld [vmem:[%s240 + $0xea8] sm:$0xff]
        %v780 = vld [vmem:[%s240 + $0xeb0] sm:$0xff]
        %v781 = vld [vmem:[%s240 + $0xeb8] sm:$0xff]
        %v782 = vld [vmem:[%s240 + $0xec0] sm:$0xff]
        %v783 = vld [vmem:[%s240 + $0xec8] sm:$0xff]
        %v784 = vld [vmem:[%s240 + $0xed0] sm:$0xff]
        %v785 = vld [vmem:[%s240 + $0xed8] sm:$0xff]
        %v786 = vld [vmem:[%s240 + $0xee0] sm:$0xff]
        %v787 = vld [vmem:[%s240 + $0xee8] sm:$0xff]
        %v788 = vld [vmem:[%s240 + $0xef0] sm:$0xff]
        %v789 = vld [vmem:[%s240 + $0xef8] sm:$0xff]
        %v790 = vld [vmem:[%s240 + $0xf00] sm:$0xff]
        %v791 = vld [vmem:[%s240 + $0xf08] sm:$0xff]
        %v792 = vld [vmem:[%s240 + $0xf10] sm:$0xff]
        %v793 = vld [vmem:[%s240 + $0xf18] sm:$0xff]
        %v794 = vld [vmem:[%s240 + $0xf20] sm:$0xff]
        %v795 = vld [vmem:[%s240 + $0xf28] sm:$0xff]
        %v796 = vld [vmem:[%s240 + $0xf30] sm:$0xff]
        %v797 = vld [vmem:[%s240 + $0xf38] sm:$0xff]
        %v798 = vld [vmem:[%s240 + $0xf40] sm:$0xff]
        %v799 = vld [vmem:[%s240 + $0xf48] sm:$0xff]
        %v800 = vld [vmem:[%s240 + $0xf50] sm:$0xff]
        %v801 = vld [vmem:[%s240 + $0xf58] sm:$0xff]
        %v802 = vld [vmem:[%s240 + $0xf60] sm:$0xff]
        %v803 = vld [vmem:[%s240 + $0xf68] sm:$0xff]
        %v804 = vld [vmem:[%s240 + $0xf70] sm:$0xff]
        %v805 = vld [vmem:[%s240 + $0xf78] sm:$0xff]
        %v806 = vld [vmem:[%s240 + $0xf80] sm:$0xff]
        %v807 = vld [vmem:[%s240 + $0xf88] sm:$0xff]
        %v808 = vld [vmem:[%s240 + $0xf90] sm:$0xff]
        %v809 = vld [vmem:[%s240 + $0xf98] sm:$0xff]
        %v810 = vld [vmem:[%s240 + $0xfa0] sm:$0xff]
        %v811 = vld [vmem:[%s240 + $0xfa8] sm:$0xff]
        %v812 = vld [vmem:[%s240 + $0xfb0] sm:$0xff]
        %v813 = vld [vmem:[%s240 + $0xfb8] sm:$0xff]
        %v814 = vld [vmem:[%s240 + $0xfc0] sm:$0xff]
        %v815 = vld [vmem:[%s240 + $0xfc8] sm:$0xff]
        %v816 = vld [vmem:[%s240 + $0xfd0] sm:$0xff]
        %v817 = vld [vmem:[%s240 + $0xfd8] sm:$0xff]
        %v818 = vld [vmem:[%s240 + $0xfe0] sm:$0xff]
        %v819 = vld [vmem:[%s240 + $0xfe8] sm:$0xff]
        %v820 = vld [vmem:[%s240 + $0xff0] sm:$0xff]
        %v821 = vld [vmem:[%s240 + $0xff8] sm:$0xff]
        %v822 = vld [vmem:[%s240 + $0x1000] sm:$0xff]
        %v823 = vld [vmem:[%s240 + $0x1008] sm:$0xff]
        %v824 = vld [vmem:[%s240 + $0x1010] sm:$0xff]
        %v825 = vld [vmem:[%s240 + $0x1018] sm:$0xff]
        %v826 = vld [vmem:[%s240 + $0x1020] sm:$0xff]
        %v827 = vld [vmem:[%s240 + $0x1028] sm:$0xff]
        %v828 = vld [vmem:[%s240 + $0x1030] sm:$0xff]
        %v829 = vld [vmem:[%s240 + $0x1038] sm:$0xff]
        %v830 = vld [vmem:[%s240 + $0x1040] sm:$0xff]
        %v831 = vld [vmem:[%s240 + $0x1048] sm:$0xff]
        %v832 = vld [vmem:[%s240 + $0x1050] sm:$0xff]
        %v833 = vld [vmem:[%s240 + $0x1058] sm:$0xff]
        %v834 = vld [vmem:[%s240 + $0x1060] sm:$0xff]
        %v835 = vld [vmem:[%s240 + $0x1068] sm:$0xff]
        %v836 = vld [vmem:[%s240 + $0x1070] sm:$0xff]
        %v837 = vld [vmem:[%s240 + $0x1078] sm:$0xff]
        %v838 = vld [vmem:[%s240 + $0x1080] sm:$0xff]
        %v839 = vld [vmem:[%s240 + $0x1088] sm:$0xff]
        %v840 = vld [vmem:[%s240 + $0x1090] sm:$0xff]
        %v841 = vld [vmem:[%s240 + $0x1098] sm:$0xff]
        %v842 = vld [vmem:[%s240 + $0x10a0] sm:$0xff]
        %v843 = vld [vmem:[%s240 + $0x10a8] sm:$0xff]
        %v844 = vld [vmem:[%s240 + $0x10b0] sm:$0xff]
        %v845 = vld [vmem:[%s240 + $0x10b8] sm:$0xff]
        %v846 = vld [vmem:[%s240 + $0x10c0] sm:$0xff]
        %v847 = vld [vmem:[%s240 + $0x10c8] sm:$0xff]
        %v848 = vld [vmem:[%s240 + $0x10d0] sm:$0xff]
        %v849 = vld [vmem:[%s240 + $0x10d8] sm:$0xff]
        %v850 = vld [vmem:[%s240 + $0x10e0] sm:$0xff]
        %v851 = vld [vmem:[%s240 + $0x10e8] sm:$0xff]
        %v852 = vld [vmem:[%s240 + $0x10f0] sm:$0xff]
        %v853 = vld [vmem:[%s240 + $0x10f8] sm:$0xff]
        %v854 = vld [vmem:[%s240 + $0x1100] sm:$0xff]
        %v855 = vld [vmem:[%s240 + $0x1108] sm:$0xff]
        %v856 = vld [vmem:[%s240 + $0x1110] sm:$0xff]
        %v857 = vld [vmem:[%s240 + $0x1118] sm:$0xff]
        %v858 = vld [vmem:[%s240 + $0x1120] sm:$0xff]
        %v859 = vld [vmem:[%s240 + $0x1128] sm:$0xff]
        %v860 = vld [vmem:[%s240 + $0x1130] sm:$0xff]
        %v861 = vld [vmem:[%s240 + $0x1138] sm:$0xff]
        %v862 = vld [vmem:[%s240 + $0x1140] sm:$0xff]
        %v863 = vld [vmem:[%s240 + $0x1148] sm:$0xff]
        %v864 = vld [vmem:[%s240 + $0x1150] sm:$0xff]
        %v865 = vld [vmem:[%s240 + $0x1158] sm:$0xff]
        %v866 = vld [vmem:[%s240 + $0x1160] sm:$0xff]
        %v867 = vld [vmem:[%s240 + $0x1168] sm:$0xff]
        %v868 = vld [vmem:[%s240 + $0x1170] sm:$0xff]
        %v869 = vld [vmem:[%s240 + $0x1178] sm:$0xff]
        %v870 = vld [vmem:[%s240 + $0x1180] sm:$0xff]
        %v871 = vld [vmem:[%s240 + $0x1188] sm:$0xff]
        %v872 = vld [vmem:[%s240 + $0x1190] sm:$0xff]
        %v873 = vld [vmem:[%s240 + $0x1198] sm:$0xff]
        %v874 = vld [vmem:[%s240 + $0x11a0] sm:$0xff]
        %v875 = vld [vmem:[%s240 + $0x11a8] sm:$0xff]
        %v876 = vld [vmem:[%s240 + $0x11b0] sm:$0xff]
        %v877 = vld [vmem:[%s240 + $0x11b8] sm:$0xff]
        %v878 = vld [vmem:[%s240 + $0x11c0] sm:$0xff]
        %v879 = vld [vmem:[%s240 + $0x11c8] sm:$0xff]
        %v880 = vld [vmem:[%s240 + $0x11d0] sm:$0xff]
        %v881 = vld [vmem:[%s240 + $0x11d8] sm:$0xff]
        %v882 = vld [vmem:[%s240 + $0x11e0] sm:$0xff]
        %v883 = vld [vmem:[%s240 + $0x11e8] sm:$0xff]
        %v884 = vld [vmem:[%s240 + $0x11f0] sm:$0xff]
        %v885 = vld [vmem:[%s240 + $0x11f8] sm:$0xff]
        %v886 = vld [vmem:[%s240 + $0x1200] sm:$0xff]
        %v887 = vld [vmem:[%s240 + $0x1208] sm:$0xff]
        %v888 = vld [vmem:[%s240 + $0x1210] sm:$0xff]
        %v889 = vld [vmem:[%s240 + $0x1218] sm:$0xff]
        %v890 = vld [vmem:[%s240 + $0x1220] sm:$0xff]
        %v891 = vld [vmem:[%s240 + $0x1228] sm:$0xff]
        %v892 = vld [vmem:[%s240 + $0x1230] sm:$0xff]
        %v893 = vld [vmem:[%s240 + $0x1238] sm:$0xff]
        %v894 = vld [vmem:[%s240 + $0x1240] sm:$0xff]
        %v895 = vld [vmem:[%s240 + $0x1248] sm:$0xff]
        %v896 = vld [vmem:[%s240 + $0x1250] sm:$0xff]
        %v897 = vld [vmem:[%s240 + $0x1258] sm:$0xff]
        %v898 = vld [vmem:[%s240 + $0x1260] sm:$0xff]
        %v899 = vld [vmem:[%s240 + $0x1268] sm:$0xff]
        %v900 = vld [vmem:[%s240 + $0x1270] sm:$0xff]
        %v901 = vld [vmem:[%s240 + $0x1278] sm:$0xff]
        %v902 = vld [vmem:[%s240 + $0x1280] sm:$0xff]
        %v903 = vld [vmem:[%s240 + $0x1288] sm:$0xff]
        %v904 = vld [vmem:[%s240 + $0x1290] sm:$0xff]
        %v905 = vld [vmem:[%s240 + $0x1298] sm:$0xff]
        %v906 = vld [vmem:[%s240 + $0x12a0] sm:$0xff]
        %v907 = vld [vmem:[%s240 + $0x12a8] sm:$0xff]
        %v908 = vld [vmem:[%s240 + $0x12b0] sm:$0xff]
        %v909 = vld [vmem:[%s240 + $0x12b8] sm:$0xff]
        %v910 = vld [vmem:[%s240 + $0x12c0] sm:$0xff]
        %v911 = vld [vmem:[%s240 + $0x12c8] sm:$0xff]
        %v912 = vld [vmem:[%s240 + $0x12d0] sm:$0xff]
        %v913 = vld [vmem:[%s240 + $0x12d8] sm:$0xff]
        %v914 = vld [vmem:[%s240 + $0x12e0] sm:$0xff]
        %v915 = vld [vmem:[%s240 + $0x12e8] sm:$0xff]
        %v916 = vld [vmem:[%s240 + $0x12f0] sm:$0xff]
        %v917 = vld [vmem:[%s240 + $0x12f8] sm:$0xff]
        %v918 = vld [vmem:[%s240 + $0x1300] sm:$0xff]
        %v919 = vld [vmem:[%s240 + $0x1308] sm:$0xff]
        %v920 = vld [vmem:[%s240 + $0x1310] sm:$0xff]
        %v921 = vld [vmem:[%s240 + $0x1318] sm:$0xff]
        %v922 = vld [vmem:[%s240 + $0x1320] sm:$0xff]
        %v923 = vld [vmem:[%s240 + $0x1328] sm:$0xff]
        %v924 = vld [vmem:[%s240 + $0x1330] sm:$0xff]
        %v925 = vld [vmem:[%s240 + $0x1338] sm:$0xff]
        %v926 = vld [vmem:[%s240 + $0x1340] sm:$0xff]
        %v927 = vld [vmem:[%s240 + $0x1348] sm:$0xff]
        %v928 = vld [vmem:[%s240 + $0x1350] sm:$0xff]
        %v929 = vld [vmem:[%s240 + $0x1358] sm:$0xff]
        %v930 = vld [vmem:[%s240 + $0x1360] sm:$0xff]
        %v931 = vld [vmem:[%s240 + $0x1368] sm:$0xff]
        %v932 = vld [vmem:[%s240 + $0x1370] sm:$0xff]
        %v933 = vld [vmem:[%s240 + $0x1378] sm:$0xff]
        %v934 = vld [vmem:[%s240 + $0x1380] sm:$0xff]
        %v935 = vld [vmem:[%s240 + $0x1388] sm:$0xff]
        %v936 = vld [vmem:[%s240 + $0x1390] sm:$0xff]
        %v937 = vld [vmem:[%s240 + $0x1398] sm:$0xff]
        %v938 = vld [vmem:[%s240 + $0x13a0] sm:$0xff]
        %v939 = vld [vmem:[%s240 + $0x13a8] sm:$0xff]
        %v940 = vld [vmem:[%s240 + $0x13b0] sm:$0xff]
        %v941 = vld [vmem:[%s240 + $0x13b8] sm:$0xff]
        %v942 = vld [vmem:[%s240 + $0x13c0] sm:$0xff]
        %v943 = vld [vmem:[%s240 + $0x13c8] sm:$0xff]
        %v944 = vld [vmem:[%s240 + $0x13d0] sm:$0xff]
        %v945 = vld [vmem:[%s240 + $0x13d8] sm:$0xff]
        %v946 = vld [vmem:[%s240 + $0x13e0] sm:$0xff]
        %v947 = vld [vmem:[%s240 + $0x13e8] sm:$0xff]
        %v948 = vld [vmem:[%s240 + $0x13f0] sm:$0xff]
        %v949 = vld [vmem:[%s240 + $0x13f8] sm:$0xff]
        %v950 = vld [vmem:[%s240 + $0x1400] sm:$0xff]
        %v951 = vld [vmem:[%s240 + $0x1408] sm:$0xff]
        %v952 = vld [vmem:[%s240 + $0x1410] sm:$0xff]
        %v953 = vld [vmem:[%s240 + $0x1418] sm:$0xff]
        %v954 = vld [vmem:[%s240 + $0x1420] sm:$0xff]
        %v955 = vld [vmem:[%s240 + $0x1428] sm:$0xff]
        %v956 = vld [vmem:[%s240 + $0x1430] sm:$0xff]
        %v957 = vld [vmem:[%s240 + $0x1438] sm:$0xff]
        %v958 = vld [vmem:[%s240 + $0x1440] sm:$0xff]
        %v959 = vld [vmem:[%s240 + $0x1448] sm:$0xff]
        %v960 = vld [vmem:[%s240 + $0x1450] sm:$0xff]
        %v961 = vld [vmem:[%s240 + $0x1458] sm:$0xff]
        %v962 = vld [vmem:[%s240 + $0x1460] sm:$0xff]
        %v963 = vld [vmem:[%s240 + $0x1468] sm:$0xff]
        %v964 = vld [vmem:[%s240 + $0x1470] sm:$0xff]
        %v965 = vld [vmem:[%s240 + $0x1478] sm:$0xff]
        %v966 = vld [vmem:[%s240 + $0x1480] sm:$0xff]
        %v967 = vld [vmem:[%s240 + $0x1488] sm:$0xff]
        %v968 = vld [vmem:[%s240 + $0x1490] sm:$0xff]
        %v969 = vld [vmem:[%s240 + $0x1498] sm:$0xff]
        %v970 = vld [vmem:[%s240 + $0x14a0] sm:$0xff]
        %v971 = vld [vmem:[%s240 + $0x14a8] sm:$0xff]
        %v972 = vld [vmem:[%s240 + $0x14b0] sm:$0xff]
        %v973 = vld [vmem:[%s240 + $0x14b8] sm:$0xff]
        %v974 = vld [vmem:[%s240 + $0x14c0] sm:$0xff]
        %v975 = vld [vmem:[%s240 + $0x14c8] sm:$0xff]
        %v976 = vld [vmem:[%s240 + $0x14d0] sm:$0xff]
        %v977 = vld [vmem:[%s240 + $0x14d8] sm:$0xff]
        %v978 = vld [vmem:[%s240 + $0x14e0] sm:$0xff]
        %v979 = vld [vmem:[%s240 + $0x14e8] sm:$0xff]
        %v980 = vld [vmem:[%s240 + $0x14f0] sm:$0xff]
        %v981 = vld [vmem:[%s240 + $0x14f8] sm:$0xff]
        %v982 = vld [vmem:[%s240 + $0x1500] sm:$0xff]
        %v983 = vld [vmem:[%s240 + $0x1508] sm:$0xff]
        %v984 = vld [vmem:[%s240 + $0x1510] sm:$0xff]
        %v985 = vld [vmem:[%s240 + $0x1518] sm:$0xff]
        %v986 = vld [vmem:[%s240 + $0x1520] sm:$0xff]
        %v987 = vld [vmem:[%s240 + $0x1528] sm:$0xff]
        %v988 = vld [vmem:[%s240 + $0x1530] sm:$0xff]
        %v989 = vld [vmem:[%s240 + $0x1538] sm:$0xff]
        %v990 = vld [vmem:[%s240 + $0x1540] sm:$0xff]
        %v991 = vld [vmem:[%s240 + $0x1548] sm:$0xff]
        %v992 = vld [vmem:[%s240 + $0x1550] sm:$0xff]
        %v993 = vld [vmem:[%s240 + $0x1558] sm:$0xff]
        %v994 = vld [vmem:[%s240 + $0x1560] sm:$0xff]
        %v995 = vld [vmem:[%s240 + $0x1568] sm:$0xff]
        %v996 = vld [vmem:[%s240 + $0x1570] sm:$0xff]
        %v997 = vld [vmem:[%s240 + $0x1578] sm:$0xff]
        %v998 = vld [vmem:[%s240 + $0x1580] sm:$0xff]
        %v999 = vld [vmem:[%s240 + $0x1588] sm:$0xff]
        %v1000 = vld [vmem:[%s240 + $0x1590] sm:$0xff]
        %v1001 = vld [vmem:[%s240 + $0x1598] sm:$0xff]
        %v1002 = vld [vmem:[%s240 + $0x15a0] sm:$0xff]
        %v1003 = vld [vmem:[%s240 + $0x15a8] sm:$0xff]
        %v1004 = vld [vmem:[%s240 + $0x15b0] sm:$0xff]
        %v1005 = vld [vmem:[%s240 + $0x15b8] sm:$0xff]
        %v1006 = vld [vmem:[%s240 + $0x15c0] sm:$0xff]
        %v1007 = vld [vmem:[%s240 + $0x15c8] sm:$0xff]
        %v1008 = vld [vmem:[%s240 + $0x15d0] sm:$0xff]
        %v1009 = vld [vmem:[%s240 + $0x15d8] sm:$0xff]
        %v1010 = vld [vmem:[%s240 + $0x15e0] sm:$0xff]
        %v1011 = vld [vmem:[%s240 + $0x15e8] sm:$0xff]
        %v1012 = vld [vmem:[%s240 + $0x15f0] sm:$0xff]
        %v1013 = vld [vmem:[%s240 + $0x15f8] sm:$0xff]
        %v1014 = vld [vmem:[%s240 + $0x1600] sm:$0xff]
        %v1015 = vld [vmem:[%s240 + $0x1608] sm:$0xff]
        %v1016 = vld [vmem:[%s240 + $0x1610] sm:$0xff]
        %v1017 = vld [vmem:[%s240 + $0x1618] sm:$0xff]
        %v1018 = vld [vmem:[%s240 + $0x1620] sm:$0xff]
        %v1019 = vld [vmem:[%s240 + $0x1628] sm:$0xff]
        %v1020 = vld [vmem:[%s240 + $0x1630] sm:$0xff]
        %v1021 = vld [vmem:[%s240 + $0x1638] sm:$0xff]
        %v1022 = vld [vmem:[%s240 + $0x1640] sm:$0xff]
        %v1023 = vld [vmem:[%s240 + $0x1648] sm:$0xff]
        %v1024 = vld [vmem:[%s240 + $0x1650] sm:$0xff]
        %v1025 = vld [vmem:[%s240 + $0x1658] sm:$0xff]
        %v1026 = vld [vmem:[%s240 + $0x1660] sm:$0xff]
        %v1027 = vld [vmem:[%s240 + $0x1668] sm:$0xff]
        %v1028 = vld [vmem:[%s240 + $0x1670] sm:$0xff]
        %v1029 = vld [vmem:[%s240 + $0x1678] sm:$0xff]
        %v1030 = vld [vmem:[%s240 + $0x1680] sm:$0xff]
        %v1031 = vld [vmem:[%s240 + $0x1688] sm:$0xff]
        %v1032 = vld [vmem:[%s240 + $0x1690] sm:$0xff]
        %v1033 = vld [vmem:[%s240 + $0x1698] sm:$0xff]
        %v1034 = vld [vmem:[%s240 + $0x16a0] sm:$0xff]
        %v1035 = vld [vmem:[%s240 + $0x16a8] sm:$0xff]
        %v1036 = vld [vmem:[%s240 + $0x16b0] sm:$0xff]
        %v1037 = vld [vmem:[%s240 + $0x16b8] sm:$0xff]
        %v1038 = vld [vmem:[%s240 + $0x16c0] sm:$0xff]
        %v1039 = vld [vmem:[%s240 + $0x16c8] sm:$0xff]
        %v1040 = vld [vmem:[%s240 + $0x16d0] sm:$0xff]
        %v1041 = vld [vmem:[%s240 + $0x16d8] sm:$0xff]
        %v1042 = vld [vmem:[%s240 + $0x16e0] sm:$0xff]
        %v1043 = vld [vmem:[%s240 + $0x16e8] sm:$0xff]
        %v1044 = vld [vmem:[%s240 + $0x16f0] sm:$0xff]
        %v1045 = vld [vmem:[%s240 + $0x16f8] sm:$0xff]
        %v1046 = vld [vmem:[%s240 + $0x1700] sm:$0xff]
        %v1047 = vld [vmem:[%s240 + $0x1708] sm:$0xff]
        %v1048 = vld [vmem:[%s240 + $0x1710] sm:$0xff]
        %v1049 = vld [vmem:[%s240 + $0x1718] sm:$0xff]
        %v1050 = vld [vmem:[%s240 + $0x1720] sm:$0xff]
        %v1051 = vld [vmem:[%s240 + $0x1728] sm:$0xff]
        %v1052 = vld [vmem:[%s240 + $0x1730] sm:$0xff]
        %v1053 = vld [vmem:[%s240 + $0x1738] sm:$0xff]
        %v1054 = vld [vmem:[%s240 + $0x1740] sm:$0xff]
        %v1055 = vld [vmem:[%s240 + $0x1748] sm:$0xff]
        %v1056 = vld [vmem:[%s240 + $0x1750] sm:$0xff]
        %v1057 = vld [vmem:[%s240 + $0x1758] sm:$0xff]
        %v1058 = vld [vmem:[%s240 + $0x1760] sm:$0xff]
        %v1059 = vld [vmem:[%s240 + $0x1768] sm:$0xff]
        %v1060 = vld [vmem:[%s240 + $0x1770] sm:$0xff]
        %v1061 = vld [vmem:[%s240 + $0x1778] sm:$0xff]
        %v1062 = vld [vmem:[%s240 + $0x1780] sm:$0xff]
        %v1063 = vld [vmem:[%s240 + $0x1788] sm:$0xff]
        %v1064 = vld [vmem:[%s240 + $0x1790] sm:$0xff]
        %v1065 = vld [vmem:[%s240 + $0x1798] sm:$0xff]
        %v1066 = vld [vmem:[%s240 + $0x17a0] sm:$0xff]
        %v1067 = vld [vmem:[%s240 + $0x17a8] sm:$0xff]
        %v1068 = vld [vmem:[%s240 + $0x17b0] sm:$0xff]
        %v1069 = vld [vmem:[%s240 + $0x17b8] sm:$0xff]
        %v1070 = vld [vmem:[%s240 + $0x17c0] sm:$0xff]
        %v1071 = vld [vmem:[%s240 + $0x17c8] sm:$0xff]
        %v1072 = vld [vmem:[%s240 + $0x17d0] sm:$0xff]
        %v1073 = vld [vmem:[%s240 + $0x17d8] sm:$0xff]
        %v1074 = vld [vmem:[%s240 + $0x17e0] sm:$0xff]
        %v1075 = vld [vmem:[%s240 + $0x17e8] sm:$0xff]
        %v1076 = vld [vmem:[%s240 + $0x17f0] sm:$0xff]
        %v1077 = vld [vmem:[%s240 + $0x17f8] sm:$0xff]
        %v1078 = vld [vmem:[%s240 + $0x1800] sm:$0xff]
        %v1079 = vld [vmem:[%s240 + $0x1808] sm:$0xff]
        %v1080 = vld [vmem:[%s240 + $0x1810] sm:$0xff]
        %v1081 = vld [vmem:[%s240 + $0x1818] sm:$0xff]
        %v1082 = vld [vmem:[%s240 + $0x1820] sm:$0xff]
        %v1083 = vld [vmem:[%s240 + $0x1828] sm:$0xff]
        %v1084 = vld [vmem:[%s240 + $0x1830] sm:$0xff]
        %v1085 = vld [vmem:[%s240 + $0x1838] sm:$0xff]
        %v1086 = vld [vmem:[%s240 + $0x1840] sm:$0xff]
        %v1087 = vld [vmem:[%s240 + $0x1848] sm:$0xff]
        %v1088 = vld [vmem:[%s240 + $0x1850] sm:$0xff]
        %v1089 = vld [vmem:[%s240 + $0x1858] sm:$0xff]
        %v1090 = vld [vmem:[%s240 + $0x1860] sm:$0xff]
        %v1091 = vld [vmem:[%s240 + $0x1868] sm:$0xff]
        %v1092 = vld [vmem:[%s240 + $0x1870] sm:$0xff]
        %v1093 = vld [vmem:[%s240 + $0x1878] sm:$0xff]
        %v1094 = vld [vmem:[%s240 + $0x1880] sm:$0xff]
        %v1095 = vld [vmem:[%s240 + $0x1888] sm:$0xff]
        %v1096 = vld [vmem:[%s240 + $0x1890] sm:$0xff]
        %v1097 = vld [vmem:[%s240 + $0x1898] sm:$0xff]
        %v1098 = vld [vmem:[%s240 + $0x18a0] sm:$0xff]
        %v1099 = vld [vmem:[%s240 + $0x18a8] sm:$0xff]
        %v1100 = vld [vmem:[%s240 + $0x18b0] sm:$0xff]
        %v1101 = vld [vmem:[%s240 + $0x18b8] sm:$0xff]
        %v1102 = vld [vmem:[%s240 + $0x18c0] sm:$0xff]
        %v1103 = vld [vmem:[%s240 + $0x18c8] sm:$0xff]
        %v1104 = vld [vmem:[%s240 + $0x18d0] sm:$0xff]
        %v1105 = vld [vmem:[%s240 + $0x18d8] sm:$0xff]
        %v1106 = vld [vmem:[%s240 + $0x18e0] sm:$0xff]
        %v1107 = vld [vmem:[%s240 + $0x18e8] sm:$0xff]
        %v1108 = vld [vmem:[%s240 + $0x18f0] sm:$0xff]
        %v1109 = vld [vmem:[%s240 + $0x18f8] sm:$0xff]
        %v1110 = vld [vmem:[%s240 + $0x1900] sm:$0xff]
        %v1111 = vld [vmem:[%s240 + $0x1908] sm:$0xff]
        %v1112 = vld [vmem:[%s240 + $0x1910] sm:$0xff]
        %v1113 = vld [vmem:[%s240 + $0x1918] sm:$0xff]
        %v1114 = vld [vmem:[%s240 + $0x1920] sm:$0xff]
        %v1115 = vld [vmem:[%s240 + $0x1928] sm:$0xff]
        %v1116 = vld [vmem:[%s240 + $0x1930] sm:$0xff]
        %v1117 = vld [vmem:[%s240 + $0x1938] sm:$0xff]
        %v1118 = vld [vmem:[%s240 + $0x1940] sm:$0xff]
        %v1119 = vld [vmem:[%s240 + $0x1948] sm:$0xff]
        %v1120 = vld [vmem:[%s240 + $0x1950] sm:$0xff]
        %v1121 = vld [vmem:[%s240 + $0x1958] sm:$0xff]
        %v1122 = vld [vmem:[%s240 + $0x1960] sm:$0xff]
        %v1123 = vld [vmem:[%s240 + $0x1968] sm:$0xff]
        %v1124 = vld [vmem:[%s240 + $0x1970] sm:$0xff]
        %v1125 = vld [vmem:[%s240 + $0x1978] sm:$0xff]
        %v1126 = vld [vmem:[%s240 + $0x1980] sm:$0xff]
        %v1127 = vld [vmem:[%s240 + $0x1988] sm:$0xff]
        %v1128 = vld [vmem:[%s240 + $0x1990] sm:$0xff]
        %v1129 = vld [vmem:[%s240 + $0x1998] sm:$0xff]
        %v1130 = vld [vmem:[%s240 + $0x19a0] sm:$0xff]
        %v1131 = vld [vmem:[%s240 + $0x19a8] sm:$0xff]
        %v1132 = vld [vmem:[%s240 + $0x19b0] sm:$0xff]
        %v1133 = vld [vmem:[%s240 + $0x19b8] sm:$0xff]
        %v1134 = vld [vmem:[%s240 + $0x19c0] sm:$0xff]
        %v1135 = vld [vmem:[%s240 + $0x19c8] sm:$0xff]
        %v1136 = vld [vmem:[%s240 + $0x19d0] sm:$0xff]
        %v1137 = vld [vmem:[%s240 + $0x19d8] sm:$0xff]
        %v1138 = vld [vmem:[%s240 + $0x19e0] sm:$0xff]
        %v1139 = vld [vmem:[%s240 + $0x19e8] sm:$0xff]
        %v1140 = vld [vmem:[%s240 + $0x19f0] sm:$0xff]
        %v1141 = vld [vmem:[%s240 + $0x19f8] sm:$0xff]
        %v1142 = vld [vmem:[%s240 + $0x1a00] sm:$0xff]
        %v1143 = vld [vmem:[%s240 + $0x1a08] sm:$0xff]
        %v1144 = vld [vmem:[%s240 + $0x1a10] sm:$0xff]
        %v1145 = vld [vmem:[%s240 + $0x1a18] sm:$0xff]
        %v1146 = vld [vmem:[%s240 + $0x1a20] sm:$0xff]
        %v1147 = vld [vmem:[%s240 + $0x1a28] sm:$0xff]
        %v1148 = vld [vmem:[%s240 + $0x1a30] sm:$0xff]
        %v1149 = vld [vmem:[%s240 + $0x1a38] sm:$0xff]
        %v1150 = vld [vmem:[%s240 + $0x1a40] sm:$0xff]
        %v1151 = vld [vmem:[%s240 + $0x1a48] sm:$0xff]
        %v1152 = vld [vmem:[%s240 + $0x1a50] sm:$0xff]
        %v1153 = vld [vmem:[%s240 + $0x1a58] sm:$0xff]
        %v1154 = vld [vmem:[%s240 + $0x1a60] sm:$0xff]
        %v1155 = vld [vmem:[%s240 + $0x1a68] sm:$0xff]
        %v1156 = vld [vmem:[%s240 + $0x1a70] sm:$0xff]
        %v1157 = vld [vmem:[%s240 + $0x1a78] sm:$0xff]
        %v1158 = vld [vmem:[%s240 + $0x1a80] sm:$0xff]
        %v1159 = vld [vmem:[%s240 + $0x1a88] sm:$0xff]
        %v1160 = vld [vmem:[%s240 + $0x1a90] sm:$0xff]
        %v1161 = vld [vmem:[%s240 + $0x1a98] sm:$0xff]
        %v1162 = vld [vmem:[%s240 + $0x1aa0] sm:$0xff]
        %v1163 = vld [vmem:[%s240 + $0x1aa8] sm:$0xff]
        %v1164 = vld [vmem:[%s240 + $0x1ab0] sm:$0xff]
        %v1165 = vld [vmem:[%s240 + $0x1ab8] sm:$0xff]
        %v1166 = vld [vmem:[%s240 + $0x1ac0] sm:$0xff]
        %v1167 = vld [vmem:[%s240 + $0x1ac8] sm:$0xff]
        %v1168 = vld [vmem:[%s240 + $0x1ad0] sm:$0xff]
        %v1169 = vld [vmem:[%s240 + $0x1ad8] sm:$0xff]
        %v1170 = vld [vmem:[%s240 + $0x1ae0] sm:$0xff]
        %v1171 = vld [vmem:[%s240 + $0x1ae8] sm:$0xff]
        %v1172 = vld [vmem:[%s240 + $0x1af0] sm:$0xff]
        %v1173 = vld [vmem:[%s240 + $0x1af8] sm:$0xff]
        %v1174 = vld [vmem:[%s240 + $0x1b00] sm:$0xff]
        %v1175 = vld [vmem:[%s240 + $0x1b08] sm:$0xff]
        %v1176 = vld [vmem:[%s240 + $0x1b10] sm:$0xff]
        %v1177 = vld [vmem:[%s240 + $0x1b18] sm:$0xff]
        %v1178 = vld [vmem:[%s240 + $0x1b20] sm:$0xff]
        %v1179 = vld [vmem:[%s240 + $0x1b28] sm:$0xff]
        %v1180 = vld [vmem:[%s240 + $0x1b30] sm:$0xff]
        %v1181 = vld [vmem:[%s240 + $0x1b38] sm:$0xff]
        %v1182 = vld [vmem:[%s240 + $0x1b40] sm:$0xff]
        %v1183 = vld [vmem:[%s240 + $0x1b48] sm:$0xff]
        %v1184 = vld [vmem:[%s240 + $0x1b50] sm:$0xff]
        %v1185 = vld [vmem:[%s240 + $0x1b58] sm:$0xff]
        %v1186 = vld [vmem:[%s240 + $0x1b60] sm:$0xff]
        %v1187 = vld [vmem:[%s240 + $0x1b68] sm:$0xff]
        %v1188 = vld [vmem:[%s240 + $0x1b70] sm:$0xff]
        %v1189 = vld [vmem:[%s240 + $0x1b78] sm:$0xff]
        %v1190 = vld [vmem:[%s240 + $0x1b80] sm:$0xff]
        %v1191 = vld [vmem:[%s240 + $0x1b88] sm:$0xff]
        %v1192 = vld [vmem:[%s240 + $0x1b90] sm:$0xff]
        %v1193 = vld [vmem:[%s240 + $0x1b98] sm:$0xff]
        %v1194 = vld [vmem:[%s240 + $0x1ba0] sm:$0xff]
        %v1195 = vld [vmem:[%s240 + $0x1ba8] sm:$0xff]
        %v1196 = vld [vmem:[%s240 + $0x1bb0] sm:$0xff]
        %v1197 = vld [vmem:[%s240 + $0x1bb8] sm:$0xff]
        %v1198 = vld [vmem:[%s240 + $0x1bc0] sm:$0xff]
        %v1199 = vld [vmem:[%s240 + $0x1bc8] sm:$0xff]
        %v1200 = vld [vmem:[%s240 + $0x1bd0] sm:$0xff]
        %v1201 = vld [vmem:[%s240 + $0x1bd8] sm:$0xff]
        %v1202 = vld [vmem:[%s240 + $0x1be0] sm:$0xff]
        %v1203 = vld [vmem:[%s240 + $0x1be8] sm:$0xff]
        %v1204 = vld [vmem:[%s240 + $0x1bf0] sm:$0xff]
        %v1205 = vld [vmem:[%s240 + $0x1bf8] sm:$0xff]
        %v1206 = vld [vmem:[%s240 + $0x1c00] sm:$0xff]
        %v1207 = vld [vmem:[%s240 + $0x1c08] sm:$0xff]
        %v1208 = vld [vmem:[%s240 + $0x1c10] sm:$0xff]
        %v1209 = vld [vmem:[%s240 + $0x1c18] sm:$0xff]
        %v1210 = vld [vmem:[%s240 + $0x1c20] sm:$0xff]
        %v1211 = vld [vmem:[%s240 + $0x1c28] sm:$0xff]
        %v1212 = vld [vmem:[%s240 + $0x1c30] sm:$0xff]
        %v1213 = vld [vmem:[%s240 + $0x1c38] sm:$0xff]
        %v1214 = vld [vmem:[%s240 + $0x1c40] sm:$0xff]
        %v1215 = vld [vmem:[%s240 + $0x1c48] sm:$0xff]
        %v1216 = vld [vmem:[%s240 + $0x1c50] sm:$0xff]
        %v1217 = vld [vmem:[%s240 + $0x1c58] sm:$0xff]
        %v1218 = vld [vmem:[%s240 + $0x1c60] sm:$0xff]
        %v1219 = vld [vmem:[%s240 + $0x1c68] sm:$0xff]
        %v1220 = vld [vmem:[%s240 + $0x1c70] sm:$0xff]
        %v1221 = vld [vmem:[%s240 + $0x1c78] sm:$0xff]
        %v1222 = vld [vmem:[%s240 + $0x1c80] sm:$0xff]
        %v1223 = vld [vmem:[%s240 + $0x1c88] sm:$0xff]
        %v1224 = vld [vmem:[%s240 + $0x1c90] sm:$0xff]
        %v1225 = vld [vmem:[%s240 + $0x1c98] sm:$0xff]
        %v1226 = vld [vmem:[%s240 + $0x1ca0] sm:$0xff]
        %v1227 = vld [vmem:[%s240 + $0x1ca8] sm:$0xff]
        %v1228 = vld [vmem:[%s240 + $0x1cb0] sm:$0xff]
        %v1229 = vld [vmem:[%s240 + $0x1cb8] sm:$0xff]
        %v1230 = vld [vmem:[%s240 + $0x1cc0] sm:$0xff]
        %v1231 = vld [vmem:[%s240 + $0x1cc8] sm:$0xff]
        %v1232 = vld [vmem:[%s240 + $0x1cd0] sm:$0xff]
        %v1233 = vld [vmem:[%s240 + $0x1cd8] sm:$0xff]
        %v1234 = vld [vmem:[%s240 + $0x1ce0] sm:$0xff]
        %v1235 = vld [vmem:[%s240 + $0x1ce8] sm:$0xff]
        %v1236 = vld [vmem:[%s240 + $0x1cf0] sm:$0xff]
        %v1237 = vld [vmem:[%s240 + $0x1cf8] sm:$0xff]
        %v1238 = vld [vmem:[%s240 + $0x1d00] sm:$0xff]
        %v1239 = vld [vmem:[%s240 + $0x1d08] sm:$0xff]
        %v1240 = vld [vmem:[%s240 + $0x1d10] sm:$0xff]
        %v1241 = vld [vmem:[%s240 + $0x1d18] sm:$0xff]
        %v1242 = vld [vmem:[%s240 + $0x1d20] sm:$0xff]
        %v1243 = vld [vmem:[%s240 + $0x1d28] sm:$0xff]
        %v1244 = vld [vmem:[%s240 + $0x1d30] sm:$0xff]
        %v1245 = vld [vmem:[%s240 + $0x1d38] sm:$0xff]
        %v1246 = vld [vmem:[%s240 + $0x1d40] sm:$0xff]
        %v1247 = vld [vmem:[%s240 + $0x1d48] sm:$0xff]
        %v1248 = vld [vmem:[%s240 + $0x1d50] sm:$0xff]
        %v1249 = vld [vmem:[%s240 + $0x1d58] sm:$0xff]
        %v1250 = vld [vmem:[%s240 + $0x1d60] sm:$0xff]
        %v1251 = vld [vmem:[%s240 + $0x1d68] sm:$0xff]
        %v1252 = vld [vmem:[%s240 + $0x1d70] sm:$0xff]
        %v1253 = vld [vmem:[%s240 + $0x1d78] sm:$0xff]
        %v1254 = vld [vmem:[%s240 + $0x1d80] sm:$0xff]
        %v1255 = vld [vmem:[%s240 + $0x1d88] sm:$0xff]
        %v1256 = vld [vmem:[%s240 + $0x1d90] sm:$0xff]
        %v1257 = vld [vmem:[%s240 + $0x1d98] sm:$0xff]
        %v1258 = vld [vmem:[%s240 + $0x1da0] sm:$0xff]
        %v1259 = vld [vmem:[%s240 + $0x1da8] sm:$0xff]
        %v1260 = vld [vmem:[%s240 + $0x1db0] sm:$0xff]
        %v1261 = vld [vmem:[%s240 + $0x1db8] sm:$0xff]
        %v1262 = vld [vmem:[%s240 + $0x1dc0] sm:$0xff]
        %v1263 = vld [vmem:[%s240 + $0x1dc8] sm:$0xff]
        %v1264 = vld [vmem:[%s240 + $0x1dd0] sm:$0xff]
        %v1265 = vld [vmem:[%s240 + $0x1dd8] sm:$0xff]
        %v1266 = vld [vmem:[%s240 + $0x1de0] sm:$0xff]
        %v1267 = vld [vmem:[%s240 + $0x1de8] sm:$0xff]
        %v1268 = vld [vmem:[%s240 + $0x1df0] sm:$0xff]
        %v1269 = vld [vmem:[%s240 + $0x1df8] sm:$0xff]
        %v1270 = vld [vmem:[%s240 + $0x1e00] sm:$0xff]
        %v1271 = vld [vmem:[%s240 + $0x1e08] sm:$0xff]
        %v1272 = vld [vmem:[%s240 + $0x1e10] sm:$0xff]
        %v1273 = vld [vmem:[%s240 + $0x1e18] sm:$0xff]
        %v1274 = vld [vmem:[%s240 + $0x1e20] sm:$0xff]
        %v1275 = vld [vmem:[%s240 + $0x1e28] sm:$0xff]
        %v1276 = vld [vmem:[%s240 + $0x1e30] sm:$0xff]
        %v1277 = vld [vmem:[%s240 + $0x1e38] sm:$0xff]
        %v1278 = vld [vmem:[%s240 + $0x1e40] sm:$0xff]
        %v1279 = vld [vmem:[%s240 + $0x1e48] sm:$0xff]
        %v1280 = vld [vmem:[%s240 + $0x1e50] sm:$0xff]
        %v1281 = vld [vmem:[%s240 + $0x1e58] sm:$0xff]
        %v1282 = vld [vmem:[%s240 + $0x1e60] sm:$0xff]
        %v1283 = vld [vmem:[%s240 + $0x1e68] sm:$0xff]
        %v1284 = vld [vmem:[%s240 + $0x1e70] sm:$0xff]
        %v1285 = vld [vmem:[%s240 + $0x1e78] sm:$0xff]
        %v1286 = vld [vmem:[%s240 + $0x1e80] sm:$0xff]
        %v1287 = vld [vmem:[%s240 + $0x1e88] sm:$0xff]
        %v1288 = vld [vmem:[%s240 + $0x1e90] sm:$0xff]
        %v1289 = vld [vmem:[%s240 + $0x1e98] sm:$0xff]
        %v1290 = vld [vmem:[%s240 + $0x1ea0] sm:$0xff]
        %v1291 = vld [vmem:[%s240 + $0x1ea8] sm:$0xff]
        %v1292 = vld [vmem:[%s240 + $0x1eb0] sm:$0xff]
        %v1293 = vld [vmem:[%s240 + $0x1eb8] sm:$0xff]
        %v1294 = vld [vmem:[%s240 + $0x1ec0] sm:$0xff]
        %v1295 = vld [vmem:[%s240 + $0x1ec8] sm:$0xff]
        %v1296 = vld [vmem:[%s240 + $0x1ed0] sm:$0xff]
        %v1297 = vld [vmem:[%s240 + $0x1ed8] sm:$0xff]
        %v1298 = vld [vmem:[%s240 + $0x1ee0] sm:$0xff]
        %v1299 = vld [vmem:[%s240 + $0x1ee8] sm:$0xff]
        %v1300 = vld [vmem:[%s240 + $0x1ef0] sm:$0xff]
        %v1301 = vld [vmem:[%s240 + $0x1ef8] sm:$0xff]
        %v1302 = vld [vmem:[%s240 + $0x1f00] sm:$0xff]
        %v1303 = vld [vmem:[%s240 + $0x1f08] sm:$0xff]
        %v1304 = vld [vmem:[%s240 + $0x1f10] sm:$0xff]
        %v1305 = vld [vmem:[%s240 + $0x1f18] sm:$0xff]
        %v1306 = vld [vmem:[%s240 + $0x1f20] sm:$0xff]
        %v1307 = vld [vmem:[%s240 + $0x1f28] sm:$0xff]
        %v1308 = vld [vmem:[%s240 + $0x1f30] sm:$0xff]
        %v1309 = vld [vmem:[%s240 + $0x1f38] sm:$0xff]
        %v1310 = vld [vmem:[%s240 + $0x1f40] sm:$0xff]
        %v1311 = vld [vmem:[%s240 + $0x1f48] sm:$0xff]
        %v1312 = vld [vmem:[%s240 + $0x1f50] sm:$0xff]
        %v1313 = vld [vmem:[%s240 + $0x1f58] sm:$0xff]
        %v1314 = vld [vmem:[%s240 + $0x1f60] sm:$0xff]
        %v1315 = vld [vmem:[%s240 + $0x1f68] sm:$0xff]
        %v1316 = vld [vmem:[%s240 + $0x1f70] sm:$0xff]
        %v1317 = vld [vmem:[%s240 + $0x1f78] sm:$0xff]
        %v1318 = vld [vmem:[%s240 + $0x1f80] sm:$0xff]
        %v1319 = vld [vmem:[%s240 + $0x1f88] sm:$0xff]
        %v1320 = vld [vmem:[%s240 + $0x1f90] sm:$0xff]
        %v1321 = vld [vmem:[%s240 + $0x1f98] sm:$0xff]
        %v1322 = vld [vmem:[%s240 + $0x1fa0] sm:$0xff]
        %v1323 = vld [vmem:[%s240 + $0x1fa8] sm:$0xff]
        %v1324 = vld [vmem:[%s240 + $0x1fb0] sm:$0xff]
        %v1325 = vld [vmem:[%s240 + $0x1fb8] sm:$0xff]
        %v1326 = vld [vmem:[%s240 + $0x1fc0] sm:$0xff]
        %v1327 = vld [vmem:[%s240 + $0x1fc8] sm:$0xff]
        %v1328 = vld [vmem:[%s240 + $0x1fd0] sm:$0xff]
        %v1329 = vld [vmem:[%s240 + $0x1fd8] sm:$0xff]
        %v1330 = vld [vmem:[%s240 + $0x1fe0] sm:$0xff]
        %v1331 = vld [vmem:[%s240 + $0x1fe8] sm:$0xff]
        %v1332 = vld [vmem:[%s240 + $0x1ff0] sm:$0xff]
        %v1333 = vld [vmem:[%s240 + $0x1ff8] sm:$0xff]
        %v1334 = vld [vmem:[%s240 + $0x2000] sm:$0xff]
        %v1335 = vld [vmem:[%s240 + $0x2008] sm:$0xff]
        %v1336 = vld [vmem:[%s240 + $0x2010] sm:$0xff]
        %v1337 = vld [vmem:[%s240 + $0x2018] sm:$0xff]
        %v1338 = vld [vmem:[%s240 + $0x2020] sm:$0xff]
        %v1339 = vld [vmem:[%s240 + $0x2028] sm:$0xff]
        %v1340 = vld [vmem:[%s240 + $0x2030] sm:$0xff]
        %v1341 = vld [vmem:[%s240 + $0x2038] sm:$0xff]
        %v1342 = vld [vmem:[%s240 + $0x2040] sm:$0xff]
        %v1343 = vld [vmem:[%s240 + $0x2048] sm:$0xff]
        %v1344 = vld [vmem:[%s240 + $0x2050] sm:$0xff]
        %v1345 = vld [vmem:[%s240 + $0x2058] sm:$0xff]
        %v1346 = vld [vmem:[%s240 + $0x2060] sm:$0xff]
        %v1347 = vld [vmem:[%s240 + $0x2068] sm:$0xff]
        %v1348 = vld [vmem:[%s240 + $0x2070] sm:$0xff]
        %v1349 = vld [vmem:[%s240 + $0x2078] sm:$0xff]
        %v1350 = vld [vmem:[%s240 + $0x2080] sm:$0xff]
        %v1351 = vld [vmem:[%s240 + $0x2088] sm:$0xff]
        %v1352 = vld [vmem:[%s240 + $0x2090] sm:$0xff]
        %v1353 = vld [vmem:[%s240 + $0x2098] sm:$0xff]
        %v1354 = vld [vmem:[%s240 + $0x20a0] sm:$0xff]
        %v1355 = vld [vmem:[%s240 + $0x20a8] sm:$0xff]
        %v1356 = vld [vmem:[%s240 + $0x20b0] sm:$0xff]
        %v1357 = vld [vmem:[%s240 + $0x20b8] sm:$0xff]
        %v1358 = vld [vmem:[%s240 + $0x20c0] sm:$0xff]
        %v1359 = vld [vmem:[%s240 + $0x20c8] sm:$0xff]
        %v1360 = vld [vmem:[%s240 + $0x20d0] sm:$0xff]
        %v1361 = vld [vmem:[%s240 + $0x20d8] sm:$0xff]
        %v1362 = vld [vmem:[%s240 + $0x20e0] sm:$0xff]
        %v1363 = vld [vmem:[%s240 + $0x20e8] sm:$0xff]
        %v1364 = vld [vmem:[%s240 + $0x20f0] sm:$0xff]
        %v1365 = vld [vmem:[%s240 + $0x20f8] sm:$0xff]
        %v1366 = vld [vmem:[%s240 + $0x2100] sm:$0xff]
        %v1367 = vld [vmem:[%s240 + $0x2108] sm:$0xff]
        %v1368 = vld [vmem:[%s240 + $0x2110] sm:$0xff]
        %v1369 = vld [vmem:[%s240 + $0x2118] sm:$0xff]
        %v1370 = vld [vmem:[%s240 + $0x2120] sm:$0xff]
        %v1371 = vld [vmem:[%s240 + $0x2128] sm:$0xff]
        %v1372 = vld [vmem:[%s240 + $0x2130] sm:$0xff]
        %v1373 = vld [vmem:[%s240 + $0x2138] sm:$0xff]
        %v1374 = vld [vmem:[%s240 + $0x2140] sm:$0xff]
        %v1375 = vld [vmem:[%s240 + $0x2148] sm:$0xff]
        %v1376 = vld [vmem:[%s240 + $0x2150] sm:$0xff]
        %v1377 = vld [vmem:[%s240 + $0x2158] sm:$0xff]
        %v1378 = vld [vmem:[%s240 + $0x2160] sm:$0xff]
        %v1379 = vld [vmem:[%s240 + $0x2168] sm:$0xff]
        %v1380 = vld [vmem:[%s240 + $0x2170] sm:$0xff]
        %v1381 = vld [vmem:[%s240 + $0x2178] sm:$0xff]
        %v1382 = vld [vmem:[%s240 + $0x2180] sm:$0xff]
        %v1383 = vld [vmem:[%s240 + $0x2188] sm:$0xff]
        %v1384 = vld [vmem:[%s240 + $0x2190] sm:$0xff]
        %v1385 = vld [vmem:[%s240 + $0x2198] sm:$0xff]
        %v1386 = vld [vmem:[%s240 + $0x21a0] sm:$0xff]
        %v1387 = vld [vmem:[%s240 + $0x21a8] sm:$0xff]
        %v1388 = vld [vmem:[%s240 + $0x21b0] sm:$0xff]
        %v1389 = vld [vmem:[%s240 + $0x21b8] sm:$0xff]
        %v1390 = vld [vmem:[%s240 + $0x21c0] sm:$0xff]
        %v1391 = vld [vmem:[%s240 + $0x21c8] sm:$0xff]
        %v1392 = vld [vmem:[%s240 + $0x21d0] sm:$0xff]
        %v1393 = vld [vmem:[%s240 + $0x21d8] sm:$0xff]
        %v1394 = vld [vmem:[%s240 + $0x21e0] sm:$0xff]
        %v1395 = vld [vmem:[%s240 + $0x21e8] sm:$0xff]
        %v1396 = vld [vmem:[%s240 + $0x21f0] sm:$0xff]
        %v1397 = vld [vmem:[%s240 + $0x21f8] sm:$0xff]
        %v1398 = vld [vmem:[%s240 + $0x2200] sm:$0xff]
        %v1399 = vld [vmem:[%s240 + $0x2208] sm:$0xff]
        %v1400 = vld [vmem:[%s240 + $0x2210] sm:$0xff]
        %v1401 = vld [vmem:[%s240 + $0x2218] sm:$0xff]
        %v1402 = vld [vmem:[%s240 + $0x2220] sm:$0xff]
        %v1403 = vld [vmem:[%s240 + $0x2228] sm:$0xff]
        %v1404 = vld [vmem:[%s240 + $0x2230] sm:$0xff]
        %v1405 = vld [vmem:[%s240 + $0x2238] sm:$0xff]
        %v1406 = vld [vmem:[%s240 + $0x2240] sm:$0xff]
        %v1407 = vld [vmem:[%s240 + $0x2248] sm:$0xff]
        %v1408 = vld [vmem:[%s240 + $0x2250] sm:$0xff]
        %v1409 = vld [vmem:[%s240 + $0x2258] sm:$0xff]
        %v1410 = vld [vmem:[%s240 + $0x2260] sm:$0xff]
        %v1411 = vld [vmem:[%s240 + $0x2268] sm:$0xff]
        %v1412 = vld [vmem:[%s240 + $0x2270] sm:$0xff]
        %v1413 = vld [vmem:[%s240 + $0x2278] sm:$0xff]
        %v1414 = vld [vmem:[%s240 + $0x2280] sm:$0xff]
        %v1415 = vld [vmem:[%s240 + $0x2288] sm:$0xff]
        %v1416 = vld [vmem:[%s240 + $0x2290] sm:$0xff]
        %v1417 = vld [vmem:[%s240 + $0x2298] sm:$0xff]
        %v1418 = vld [vmem:[%s240 + $0x22a0] sm:$0xff]
        %v1419 = vld [vmem:[%s240 + $0x22a8] sm:$0xff]
        %v1420 = vld [vmem:[%s240 + $0x22b0] sm:$0xff]
        %v1421 = vld [vmem:[%s240 + $0x22b8] sm:$0xff]
        %v1422 = vld [vmem:[%s240 + $0x22c0] sm:$0xff]
        %v1423 = vld [vmem:[%s240 + $0x22c8] sm:$0xff]
        %v1424 = vld [vmem:[%s240 + $0x22d0] sm:$0xff]
        %v1425 = vld [vmem:[%s240 + $0x22d8] sm:$0xff]
        %v1426 = vld [vmem:[%s240 + $0x22e0] sm:$0xff]
        %v1427 = vld [vmem:[%s240 + $0x22e8] sm:$0xff]
        %v1428 = vld [vmem:[%s240 + $0x22f0] sm:$0xff]
        %v1429 = vld [vmem:[%s240 + $0x22f8] sm:$0xff]
        %v1430 = vld [vmem:[%s240 + $0x2300] sm:$0xff]
        %v1431 = vld [vmem:[%s240 + $0x2308] sm:$0xff]
        %v1432 = vld [vmem:[%s240 + $0x2310] sm:$0xff]
        %v1433 = vld [vmem:[%s240 + $0x2318] sm:$0xff]
        %v1434 = vld [vmem:[%s240 + $0x2320] sm:$0xff]
        %v1435 = vld [vmem:[%s240 + $0x2328] sm:$0xff]
        %v1436 = vld [vmem:[%s240 + $0x2330] sm:$0xff]
        %v1437 = vld [vmem:[%s240 + $0x2338] sm:$0xff]
        %v1438 = vld [vmem:[%s240 + $0x2340] sm:$0xff]
        %v1439 = vld [vmem:[%s240 + $0x2348] sm:$0xff]
        %v1440 = vld [vmem:[%s240 + $0x2350] sm:$0xff]
        %v1441 = vld [vmem:[%s240 + $0x2358] sm:$0xff]
        %v1442 = vld [vmem:[%s240 + $0x2360] sm:$0xff]
        %v1443 = vld [vmem:[%s240 + $0x2368] sm:$0xff]
        %v1444 = vld [vmem:[%s240 + $0x2370] sm:$0xff]
        %v1445 = vld [vmem:[%s240 + $0x2378] sm:$0xff]
        %v1446 = vld [vmem:[%s240 + $0x2380] sm:$0xff]
        %v1447 = vld [vmem:[%s240 + $0x2388] sm:$0xff]
        %v1448 = vld [vmem:[%s240 + $0x2390] sm:$0xff]
        %v1449 = vld [vmem:[%s240 + $0x2398] sm:$0xff]
        %v1450 = vld [vmem:[%s240 + $0x23a0] sm:$0xff]
        %v1451 = vld [vmem:[%s240 + $0x23a8] sm:$0xff]
        %v1452 = vld [vmem:[%s240 + $0x23b0] sm:$0xff]
        %v1453 = vld [vmem:[%s240 + $0x23b8] sm:$0xff]
        %v1454 = vld [vmem:[%s240 + $0x23c0] sm:$0xff]
        %v1455 = vld [vmem:[%s240 + $0x23c8] sm:$0xff]
        %v1456 = vld [vmem:[%s240 + $0x23d0] sm:$0xff]
        %v1457 = vld [vmem:[%s240 + $0x23d8] sm:$0xff]
        %v1458 = vld [vmem:[%s240 + $0x23e0] sm:$0xff]
        %v1459 = vld [vmem:[%s240 + $0x23e8] sm:$0xff]
        %v1460 = vld [vmem:[%s240 + $0x23f0] sm:$0xff]
        %v1461 = vld [vmem:[%s240 + $0x23f8] sm:$0xff]
        %v1462 = vld [vmem:[%s240 + $0x2400] sm:$0xff]
        %v1463 = vld [vmem:[%s240 + $0x2408] sm:$0xff]
        %v1464 = vld [vmem:[%s240 + $0x2410] sm:$0xff]
        %v1465 = vld [vmem:[%s240 + $0x2418] sm:$0xff]
        %v1466 = vld [vmem:[%s240 + $0x2420] sm:$0xff]
        %v1467 = vld [vmem:[%s240 + $0x2428] sm:$0xff]
        %v1468 = vld [vmem:[%s240 + $0x2430] sm:$0xff]
        %v1469 = vld [vmem:[%s240 + $0x2438] sm:$0xff]
        %v1470 = vld [vmem:[%s240 + $0x2440] sm:$0xff]
        %v1471 = vld [vmem:[%s240 + $0x2448] sm:$0xff]
        %v1472 = vld [vmem:[%s240 + $0x2450] sm:$0xff]
        %v1473 = vld [vmem:[%s240 + $0x2458] sm:$0xff]
        %v1474 = vld [vmem:[%s240 + $0x2460] sm:$0xff]
        %v1475 = vld [vmem:[%s240 + $0x2468] sm:$0xff]
        %v1476 = vld [vmem:[%s240 + $0x2470] sm:$0xff]
        %v1477 = vld [vmem:[%s240 + $0x2478] sm:$0xff]
        %v1478 = vld [vmem:[%s240 + $0x2480] sm:$0xff]
        %v1479 = vld [vmem:[%s240 + $0x2488] sm:$0xff]
        %v1480 = vld [vmem:[%s240 + $0x2490] sm:$0xff]
        %v1481 = vld [vmem:[%s240 + $0x2498] sm:$0xff]
        %v1482 = vld [vmem:[%s240 + $0x24a0] sm:$0xff]
        %v1483 = vld [vmem:[%s240 + $0x24a8] sm:$0xff]
        %v1484 = vld [vmem:[%s240 + $0x24b0] sm:$0xff]
        %v1485 = vld [vmem:[%s240 + $0x24b8] sm:$0xff]
        %v1486 = vld [vmem:[%s240 + $0x24c0] sm:$0xff]
        %v1487 = vld [vmem:[%s240 + $0x24c8] sm:$0xff]
        %v1488 = vld [vmem:[%s240 + $0x24d0] sm:$0xff]
        %v1489 = vld [vmem:[%s240 + $0x24d8] sm:$0xff]
        %v1490 = vld [vmem:[%s240 + $0x24e0] sm:$0xff]
        %v1491 = vld [vmem:[%s240 + $0x24e8] sm:$0xff]
        %v1492 = vld [vmem:[%s240 + $0x24f0] sm:$0xff]
        %v1493 = vld [vmem:[%s240 + $0x24f8] sm:$0xff]
        %v1494 = vld [vmem:[%s240 + $0x2500] sm:$0xff]
        %v1495 = vld [vmem:[%s240 + $0x2508] sm:$0xff]
        %v1496 = vld [vmem:[%s240 + $0x2510] sm:$0xff]
        %v1497 = vld [vmem:[%s240 + $0x2518] sm:$0xff]
        %v1498 = vld [vmem:[%s240 + $0x2520] sm:$0xff]
        %v1499 = vld [vmem:[%s240 + $0x2528] sm:$0xff]
        %v1500 = vld [vmem:[%s240 + $0x2530] sm:$0xff]
        %v1501 = vld [vmem:[%s240 + $0x2538] sm:$0xff]
        %v1502 = vld [vmem:[%s240 + $0x2540] sm:$0xff]
        %v1503 = vld [vmem:[%s240 + $0x2548] sm:$0xff]
        %v1504 = vld [vmem:[%s240 + $0x2550] sm:$0xff]
        %v1505 = vld [vmem:[%s240 + $0x2558] sm:$0xff]
        %v1506 = vld [vmem:[%s240 + $0x2560] sm:$0xff]
        %v1507 = vld [vmem:[%s240 + $0x2568] sm:$0xff]
        %v1508 = vld [vmem:[%s240 + $0x2570] sm:$0xff]
        %v1509 = vld [vmem:[%s240 + $0x2578] sm:$0xff]
        %1529 = vst [vmem:[#allocation1] ss:$4 sm:$0xff] %v291
        %s1530 = scalar_lea.vmem [#allocation1], 32
        %1531 = vst [vmem:[%s1530] ss:$4 sm:$0xff] %v292
        %v1532 = vld.sshfl [vmem:[#allocation1] sm:$0xff pattern:$0x73625140]
        %v1533 = vld.sshfl [vmem:[#allocation1 + $0x8] sm:$0xff pattern:$0x73625140]
        %v1534 = vld.sshfl [vmem:[#allocation1 + $0x10] sm:$0xff pattern:$0x73625140]
        %v1535 = vld.sshfl [vmem:[#allocation1 + $0x18] sm:$0xff pattern:$0x73625140]
        %v1536 = vld.sshfl [vmem:[#allocation1 + $0x20] sm:$0xff pattern:$0x73625140]
        %v1537 = vld.sshfl [vmem:[#allocation1 + $0x28] sm:$0xff pattern:$0x73625140]
        %v1538 = vld.sshfl [vmem:[#allocation1 + $0x30] sm:$0xff pattern:$0x73625140]
        %v1539 = vld.sshfl [vmem:[#allocation1 + $0x38] sm:$0xff pattern:$0x73625140]
        %1540 = vst [vmem:[#allocation1] ss:$4 sm:$0xff] %v293
        %1541 = vst [vmem:[%s1530] ss:$4 sm:$0xff] %v294
        %v1542 = vld.sshfl [vmem:[#allocation1] sm:$0xff pattern:$0x73625140]
        %v1543 = vld.sshfl [vmem:[#allocation1 + $0x8] sm:$0xff pattern:$0x73625140]
        %v1544 = vld.sshfl [vmem:[#allocation1 + $0x10] sm:$0xff pattern:$0x73625140]
        %v1545 = vld.sshfl [vmem:[#allocation1 + $0x18] sm:$0xff pattern:$0x73625140]
        %v1546 = vld.sshfl [vmem:[#allocation1 + $0x20] sm:$0xff pattern:$0x73625140]
        %v1547 = vld.sshfl [vmem:[#allocation1 + $0x28] sm:$0xff pattern:$0x73625140]
        %v1548 = vld.sshfl [vmem:[#allocation1 + $0x30] sm:$0xff pattern:$0x73625140]
        %v1549 = vld.sshfl [vmem:[#allocation1 + $0x38] sm:$0xff pattern:$0x73625140]
        %1550 = vst [vmem:[#allocation1] ss:$4 sm:$0xff] %v295
        %1551 = vst [vmem:[%s1530] ss:$4 sm:$0xff] %v296
        %v1552 = vld.sshfl [vmem:[#allocation1] sm:$0xff pattern:$0x73625140]
        %v1553 = vld.sshfl [vmem:[#allocation1 + $0x8] sm:$0xff pattern:$0x73625140]
        %v1554 = vld.sshfl [vmem:[#allocation1 + $0x10] sm:$0xff pattern:$0x73625140]
        %v1555 = vld.sshfl [vmem:[#allocation1 + $0x18] sm:$0xff pattern:$0x73625140]
        %v1556 = vld.sshfl [vmem:[#allocation1 + $0x20] sm:$0xff pattern:$0x73625140]
        %v1557 = vld.sshfl [vmem:[#allocation1 + $0x28] sm:$0xff pattern:$0x73625140]
        %v1558 = vld.sshfl [vmem:[#allocation1 + $0x30] sm:$0xff pattern:$0x73625140]
        %v1559 = vld.sshfl [vmem:[#allocation1 + $0x38] sm:$0xff pattern:$0x73625140]
        %1560 = vst [vmem:[#allocation1] ss:$4 sm:$0xff] %v297
        %1561 = vst [vmem:[%s1530] ss:$4 sm:$0xff] %v298
        %v1562 = vld.sshfl [vmem:[#allocation1] sm:$0xff pattern:$0x73625140]
        %v1563 = vld.sshfl [vmem:[#allocation1 + $0x8] sm:$0xff pattern:$0x73625140]
        %v1564 = vld.sshfl [vmem:[#allocation1 + $0x10] sm:$0xff pattern:$0x73625140]
        %v1565 = vld.sshfl [vmem:[#allocation1 + $0x18] sm:$0xff pattern:$0x73625140]
        %v1566 = vld.sshfl [vmem:[#allocation1 + $0x20] sm:$0xff pattern:$0x73625140]
        %v1567 = vld.sshfl [vmem:[#allocation1 + $0x28] sm:$0xff pattern:$0x73625140]
        %v1568 = vld.sshfl [vmem:[#allocation1 + $0x30] sm:$0xff pattern:$0x73625140]
        %v1569 = vld.sshfl [vmem:[#allocation1 + $0x38] sm:$0xff pattern:$0x73625140]
        %1570 = vst [vmem:[#allocation1] ss:$4 sm:$0xff] %v299
        %1571 = vst [vmem:[%s1530] ss:$4 sm:$0xff] %v300
        %v1572 = vld.sshfl [vmem:[#allocation1] sm:$0xff pattern:$0x73625140]
        %v1573 = vld.sshfl [vmem:[#allocation1 + $0x8] sm:$0xff pattern:$0x73625140]
        %v1574 = vld.sshfl [vmem:[#allocation1 + $0x10] sm:$0xff pattern:$0x73625140]
        %v1575 = vld.sshfl [vmem:[#allocation1 + $0x18] sm:$0xff pattern:$0x73625140]
        %v1576 = vld.sshfl [vmem:[#allocation1 + $0x20] sm:$0xff pattern:$0x73625140]
        %v1577 = vld.sshfl [vmem:[#allocation1 + $0x28] sm:$0xff pattern:$0x73625140]
        %v1578 = vld.sshfl [vmem:[#allocation1 + $0x30] sm:$0xff pattern:$0x73625140]
        %v1579 = vld.sshfl [vmem:[#allocation1 + $0x38] sm:$0xff pattern:$0x73625140]
        %1580 = vst [vmem:[#allocation1] ss:$4 sm:$0xff] %v301
        %1581 = vst [vmem:[%s1530] ss:$4 sm:$0xff] %v302
        %v1582 = vld.sshfl [vmem:[#allocation1] sm:$0xff pattern:$0x73625140]
        %v1583 = vld.sshfl [vmem:[#allocation1 + $0x8] sm:$0xff pattern:$0x73625140]
        %v1584 = vld.sshfl [vmem:[#allocation1 + $0x10] sm:$0xff pattern:$0x73625140]
        %v1585 = vld.sshfl [vmem:[#allocation1 + $0x18] sm:$0xff pattern:$0x73625140]
        %v1586 = vld.sshfl [vmem:[#allocation1 + $0x20] sm:$0xff pattern:$0x73625140]
        %v1587 = vld.sshfl [vmem:[#allocation1 + $0x28] sm:$0xff pattern:$0x73625140]
        %v1588 = vld.sshfl [vmem:[#allocation1 + $0x30] sm:$0xff pattern:$0x73625140]
        %v1589 = vld.sshfl [vmem:[#allocation1 + $0x38] sm:$0xff pattern:$0x73625140]
        %1590 = vst [vmem:[#allocation1] ss:$4 sm:$0xff] %v303
        %1591 = vst [vmem:[%s1530] ss:$4 sm:$0xff] %v304
        %v1592 = vld.sshfl [vmem:[#allocation1] sm:$0xff pattern:$0x73625140]
        %v1593 = vld.sshfl [vmem:[#allocation1 + $0x8] sm:$0xff pattern:$0x73625140]
        %v1594 = vld.sshfl [vmem:[#allocation1 + $0x10] sm:$0xff pattern:$0x73625140]
        %v1595 = vld.sshfl [vmem:[#allocation1 + $0x18] sm:$0xff pattern:$0x73625140]
        %v1596 = vld.sshfl [vmem:[#allocation1 + $0x20] sm:$0xff pattern:$0x73625140]
        %v1597 = vld.sshfl [vmem:[#allocation1 + $0x28] sm:$0xff pattern:$0x73625140]
        %v1598 = vld.sshfl [vmem:[#allocation1 + $0x30] sm:$0xff pattern:$0x73625140]
        %v1599 = vld.sshfl [vmem:[#allocation1 + $0x38] sm:$0xff pattern:$0x73625140]
        %1600 = vst [vmem:[#allocation1] ss:$4 sm:$0xff] %v305
        %1601 = vst [vmem:[%s1530] ss:$4 sm:$0xff] %v306
        %v1602 = vld.sshfl [vmem:[#allocation1] sm:$0xff pattern:$0x73625140]
        %v1603 = vld.sshfl [vmem:[#allocation1 + $0x8] sm:$0xff pattern:$0x73625140]
        %v1604 = vld.sshfl [vmem:[#allocation1 + $0x10] sm:$0xff pattern:$0x73625140]
        %v1605 = vld.sshfl [vmem:[#allocation1 + $0x18] sm:$0xff pattern:$0x73625140]
        %v1606 = vld.sshfl [vmem:[#allocation1 + $0x20] sm:$0xff pattern:$0x73625140]
        %v1607 = vld.sshfl [vmem:[#allocation1 + $0x28] sm:$0xff pattern:$0x73625140]
        %v1608 = vld.sshfl [vmem:[#allocation1 + $0x30] sm:$0xff pattern:$0x73625140]
        %v1609 = vld.sshfl [vmem:[#allocation1 + $0x38] sm:$0xff pattern:$0x73625140]
        %1610 = vst [vmem:[#allocation1] ss:$4 sm:$0xff] %v307
        %1611 = vst [vmem:[%s1530] ss:$4 sm:$0xff] %v308
        %v1612 = vld.sshfl [vmem:[#allocation1] sm:$0xff pattern:$0x73625140]
        %v1613 = vld.sshfl [vmem:[#allocation1 + $0x8] sm:$0xff pattern:$0x73625140]
        %v1614 = vld.sshfl [vmem:[#allocation1 + $0x10] sm:$0xff pattern:$0x73625140]
        %v1615 = vld.sshfl [vmem:[#allocation1 + $0x18] sm:$0xff pattern:$0x73625140]
        %v1616 = vld.sshfl [vmem:[#allocation1 + $0x20] sm:$0xff pattern:$0x73625140]
        %v1617 = vld.sshfl [vmem:[#allocation1 + $0x28] sm:$0xff pattern:$0x73625140]
        %v1618 = vld.sshfl [vmem:[#allocation1 + $0x30] sm:$0xff pattern:$0x73625140]
        %v1619 = vld.sshfl [vmem:[#allocation1 + $0x38] sm:$0xff pattern:$0x73625140]
        %1620 = vst [vmem:[#allocation1] ss:$4 sm:$0xff] %v309
        %v1621 = vld.sshfl [vmem:[#allocation1] sm:$0xff pattern:$0x73625140]
        %v1622 = vld.sshfl [vmem:[#allocation1 + $0x8] sm:$0xff pattern:$0x73625140]
        %v1623 = vld.sshfl [vmem:[#allocation1 + $0x10] sm:$0xff pattern:$0x73625140]
        %1699 = vmatpush.msra.mxu0 %v325
        %1700 = vmatpush.msra.mxu0 %v324
        %1701 = vmatpush.msra.mxu0 %v323
        %1702 = vmatpush.msra.mxu0 %v322
        %1703 = vmatpush.msra.mxu0 %v321
        %1704 = vmatpush.msra.mxu0 %v320
        %1705 = vmatpush.msra.mxu0 %v319
        %1706 = vmatpush.msra.mxu0 %v318
        %1707 = vmatpush.msra.mxu0 %v317
        %1708 = vmatpush.msra.mxu0 %v316
        %1709 = vmatpush.msra.mxu0 %v315
        %1710 = vmatpush.msra.mxu0 %v314
        %1711 = vmatpush.msra.mxu0 %v313
        %1712 = vmatpush.msra.mxu0 %v312
        %1713 = vmatpush.msra.mxu0 %v311
        %1714 = vmatpush.msra.mxu0 %v310
        %1715 = vmatmul.f32.gmra.mxu0 %v1532
        %v1716 = vpop.f32.mrf.mxu0
        %v1717 = vadd.f32 0.0, %v1716
        %1718 = vdwg.mxu0
        %1719 = vmatpush.msra.mxu0 %v341
        %1720 = vmatpush.msra.mxu0 %v340
        %1721 = vmatpush.msra.mxu0 %v339
        %1722 = vmatpush.msra.mxu0 %v338
        %1723 = vmatpush.msra.mxu0 %v337
        %1724 = vmatpush.msra.mxu0 %v336
        %1725 = vmatpush.msra.mxu0 %v335
        %1726 = vmatpush.msra.mxu0 %v334
        %1727 = vmatpush.msra.mxu0 %v333
        %1728 = vmatpush.msra.mxu0 %v332
        %1729 = vmatpush.msra.mxu0 %v331
        %1730 = vmatpush.msra.mxu0 %v330
        %1731 = vmatpush.msra.mxu0 %v329
        %1732 = vmatpush.msra.mxu0 %v328
        %1733 = vmatpush.msra.mxu0 %v327
        %1734 = vmatpush.msra.mxu0 %v326
        %1735 = vmatmul.f32.gmra.mxu0 %v1533
        %v1736 = vpop.f32.mrf.mxu0
        %v1737 = vadd.f32 %v1717, %v1736
        %1738 = vdwg.mxu0
        %1739 = vmatpush.msra.mxu0 %v357
        %1740 = vmatpush.msra.mxu0 %v356
        %1741 = vmatpush.msra.mxu0 %v355
        %1742 = vmatpush.msra.mxu0 %v354
        %1743 = vmatpush.msra.mxu0 %v353
        %1744 = vmatpush.msra.mxu0 %v352
        %1745 = vmatpush.msra.mxu0 %v351
        %1746 = vmatpush.msra.mxu0 %v350
        %1747 = vmatpush.msra.mxu0 %v349
        %1748 = vmatpush.msra.mxu0 %v348
        %1749 = vmatpush.msra.mxu0 %v347
        %1750 = vmatpush.msra.mxu0 %v346
        %1751 = vmatpush.msra.mxu0 %v345
        %1752 = vmatpush.msra.mxu0 %v344
        %1753 = vmatpush.msra.mxu0 %v343
        %1754 = vmatpush.msra.mxu0 %v342
        %1755 = vmatmul.f32.gmra.mxu0 %v1534
        %v1756 = vpop.f32.mrf.mxu0
        %v1757 = vadd.f32 %v1737, %v1756
        %1758 = vdwg.mxu0
        %1759 = vmatpush.msra.mxu0 %v373
        %1760 = vmatpush.msra.mxu0 %v372
        %1761 = vmatpush.msra.mxu0 %v371
        %1762 = vmatpush.msra.mxu0 %v370
        %1763 = vmatpush.msra.mxu0 %v369
        %1764 = vmatpush.msra.mxu0 %v368
        %1765 = vmatpush.msra.mxu0 %v367
        %1766 = vmatpush.msra.mxu0 %v366
        %1767 = vmatpush.msra.mxu0 %v365
        %1768 = vmatpush.msra.mxu0 %v364
        %1769 = vmatpush.msra.mxu0 %v363
        %1770 = vmatpush.msra.mxu0 %v362
        %1771 = vmatpush.msra.mxu0 %v361
        %1772 = vmatpush.msra.mxu0 %v360
        %1773 = vmatpush.msra.mxu0 %v359
        %1774 = vmatpush.msra.mxu0 %v358
        %1775 = vmatmul.f32.gmra.mxu0 %v1535
        %v1776 = vpop.f32.mrf.mxu0
        %v1777 = vadd.f32 %v1757, %v1776
        %1778 = vdwg.mxu0
        %1779 = vmatpush.msra.mxu0 %v389
        %1780 = vmatpush.msra.mxu0 %v388
        %1781 = vmatpush.msra.mxu0 %v387
        %1782 = vmatpush.msra.mxu0 %v386
        %1783 = vmatpush.msra.mxu0 %v385
        %1784 = vmatpush.msra.mxu0 %v384
        %1785 = vmatpush.msra.mxu0 %v383
        %1786 = vmatpush.msra.mxu0 %v382
        %1787 = vmatpush.msra.mxu0 %v381
        %1788 = vmatpush.msra.mxu0 %v380
        %1789 = vmatpush.msra.mxu0 %v379
        %1790 = vmatpush.msra.mxu0 %v378
        %1791 = vmatpush.msra.mxu0 %v377
        %1792 = vmatpush.msra.mxu0 %v376
        %1793 = vmatpush.msra.mxu0 %v375
        %1794 = vmatpush.msra.mxu0 %v374
        %1795 = vmatmul.f32.gmra.mxu0 %v1536
        %v1796 = vpop.f32.mrf.mxu0
        %v1797 = vadd.f32 %v1777, %v1796
        %1798 = vdwg.mxu0
        %1799 = vmatpush.msra.mxu0 %v405
        %1800 = vmatpush.msra.mxu0 %v404
        %1801 = vmatpush.msra.mxu0 %v403
        %1802 = vmatpush.msra.mxu0 %v402
        %1803 = vmatpush.msra.mxu0 %v401
        %1804 = vmatpush.msra.mxu0 %v400
        %1805 = vmatpush.msra.mxu0 %v399
        %1806 = vmatpush.msra.mxu0 %v398
        %1807 = vmatpush.msra.mxu0 %v397
        %1808 = vmatpush.msra.mxu0 %v396
        %1809 = vmatpush.msra.mxu0 %v395
        %1810 = vmatpush.msra.mxu0 %v394
        %1811 = vmatpush.msra.mxu0 %v393
        %1812 = vmatpush.msra.mxu0 %v392
        %1813 = vmatpush.msra.mxu0 %v391
        %1814 = vmatpush.msra.mxu0 %v390
        %1815 = vmatmul.f32.gmra.mxu0 %v1537
        %v1816 = vpop.f32.mrf.mxu0
        %v1817 = vadd.f32 %v1797, %v1816
        %1818 = vdwg.mxu0
        %1819 = vmatpush.msra.mxu0 %v421
        %1820 = vmatpush.msra.mxu0 %v420
        %1821 = vmatpush.msra.mxu0 %v419
        %1822 = vmatpush.msra.mxu0 %v418
        %1823 = vmatpush.msra.mxu0 %v417
        %1824 = vmatpush.msra.mxu0 %v416
        %1825 = vmatpush.msra.mxu0 %v415
        %1826 = vmatpush.msra.mxu0 %v414
        %1827 = vmatpush.msra.mxu0 %v413
        %1828 = vmatpush.msra.mxu0 %v412
        %1829 = vmatpush.msra.mxu0 %v411
        %1830 = vmatpush.msra.mxu0 %v410
        %1831 = vmatpush.msra.mxu0 %v409
        %1832 = vmatpush.msra.mxu0 %v408
        %1833 = vmatpush.msra.mxu0 %v407
        %1834 = vmatpush.msra.mxu0 %v406
        %1835 = vmatmul.f32.gmra.mxu0 %v1538
        %v1836 = vpop.f32.mrf.mxu0
        %v1837 = vadd.f32 %v1817, %v1836
        %1838 = vdwg.mxu0
        %1839 = vmatpush.msra.mxu0 %v437
        %1840 = vmatpush.msra.mxu0 %v436
        %1841 = vmatpush.msra.mxu0 %v435
        %1842 = vmatpush.msra.mxu0 %v434
        %1843 = vmatpush.msra.mxu0 %v433
        %1844 = vmatpush.msra.mxu0 %v432
        %1845 = vmatpush.msra.mxu0 %v431
        %1846 = vmatpush.msra.mxu0 %v430
        %1847 = vmatpush.msra.mxu0 %v429
        %1848 = vmatpush.msra.mxu0 %v428
        %1849 = vmatpush.msra.mxu0 %v427
        %1850 = vmatpush.msra.mxu0 %v426
        %1851 = vmatpush.msra.mxu0 %v425
        %1852 = vmatpush.msra.mxu0 %v424
        %1853 = vmatpush.msra.mxu0 %v423
        %1854 = vmatpush.msra.mxu0 %v422
        %1855 = vmatmul.f32.gmra.mxu0 %v1539
        %v1856 = vpop.f32.mrf.mxu0
        %v1857 = vadd.f32 %v1837, %v1856
        %1858 = vdwg.mxu0
        %1859 = vmatpush.msra.mxu0 %v453
        %1860 = vmatpush.msra.mxu0 %v452
        %1861 = vmatpush.msra.mxu0 %v451
        %1862 = vmatpush.msra.mxu0 %v450
        %1863 = vmatpush.msra.mxu0 %v449
        %1864 = vmatpush.msra.mxu0 %v448
        %1865 = vmatpush.msra.mxu0 %v447
        %1866 = vmatpush.msra.mxu0 %v446
        %1867 = vmatpush.msra.mxu0 %v445
        %1868 = vmatpush.msra.mxu0 %v444
        %1869 = vmatpush.msra.mxu0 %v443
        %1870 = vmatpush.msra.mxu0 %v442
        %1871 = vmatpush.msra.mxu0 %v441
        %1872 = vmatpush.msra.mxu0 %v440
        %1873 = vmatpush.msra.mxu0 %v439
        %1874 = vmatpush.msra.mxu0 %v438
        %1875 = vmatmul.f32.gmra.mxu0 %v1542
        %v1876 = vpop.f32.mrf.mxu0
        %v1877 = vadd.f32 %v1857, %v1876
        %1878 = vdwg.mxu0
        %1879 = vmatpush.msra.mxu0 %v469
        %1880 = vmatpush.msra.mxu0 %v468
        %1881 = vmatpush.msra.mxu0 %v467
        %1882 = vmatpush.msra.mxu0 %v466
        %1883 = vmatpush.msra.mxu0 %v465
        %1884 = vmatpush.msra.mxu0 %v464
        %1885 = vmatpush.msra.mxu0 %v463
        %1886 = vmatpush.msra.mxu0 %v462
        %1887 = vmatpush.msra.mxu0 %v461
        %1888 = vmatpush.msra.mxu0 %v460
        %1889 = vmatpush.msra.mxu0 %v459
        %1890 = vmatpush.msra.mxu0 %v458
        %1891 = vmatpush.msra.mxu0 %v457
        %1892 = vmatpush.msra.mxu0 %v456
        %1893 = vmatpush.msra.mxu0 %v455
        %1894 = vmatpush.msra.mxu0 %v454
        %1895 = vmatmul.f32.gmra.mxu0 %v1543
        %v1896 = vpop.f32.mrf.mxu0
        %v1897 = vadd.f32 %v1877, %v1896
        %1898 = vdwg.mxu0
        %1899 = vmatpush.msra.mxu0 %v485
        %1900 = vmatpush.msra.mxu0 %v484
        %1901 = vmatpush.msra.mxu0 %v483
        %1902 = vmatpush.msra.mxu0 %v482
        %1903 = vmatpush.msra.mxu0 %v481
        %1904 = vmatpush.msra.mxu0 %v480
        %1905 = vmatpush.msra.mxu0 %v479
        %1906 = vmatpush.msra.mxu0 %v478
        %1907 = vmatpush.msra.mxu0 %v477
        %1908 = vmatpush.msra.mxu0 %v476
        %1909 = vmatpush.msra.mxu0 %v475
        %1910 = vmatpush.msra.mxu0 %v474
        %1911 = vmatpush.msra.mxu0 %v473
        %1912 = vmatpush.msra.mxu0 %v472
        %1913 = vmatpush.msra.mxu0 %v471
        %1914 = vmatpush.msra.mxu0 %v470
        %1915 = vmatmul.f32.gmra.mxu0 %v1544
        %v1916 = vpop.f32.mrf.mxu0
        %v1917 = vadd.f32 %v1897, %v1916
        %1918 = vdwg.mxu0
        %1919 = vmatpush.msra.mxu0 %v501
        %1920 = vmatpush.msra.mxu0 %v500
        %1921 = vmatpush.msra.mxu0 %v499
        %1922 = vmatpush.msra.mxu0 %v498
        %1923 = vmatpush.msra.mxu0 %v497
        %1924 = vmatpush.msra.mxu0 %v496
        %1925 = vmatpush.msra.mxu0 %v495
        %1926 = vmatpush.msra.mxu0 %v494
        %1927 = vmatpush.msra.mxu0 %v493
        %1928 = vmatpush.msra.mxu0 %v492
        %1929 = vmatpush.msra.mxu0 %v491
        %1930 = vmatpush.msra.mxu0 %v490
        %1931 = vmatpush.msra.mxu0 %v489
        %1932 = vmatpush.msra.mxu0 %v488
        %1933 = vmatpush.msra.mxu0 %v487
        %1934 = vmatpush.msra.mxu0 %v486
        %1935 = vmatmul.f32.gmra.mxu0 %v1545
        %v1936 = vpop.f32.mrf.mxu0
        %v1937 = vadd.f32 %v1917, %v1936
        %1938 = vdwg.mxu0
        %1939 = vmatpush.msra.mxu0 %v517
        %1940 = vmatpush.msra.mxu0 %v516
        %1941 = vmatpush.msra.mxu0 %v515
        %1942 = vmatpush.msra.mxu0 %v514
        %1943 = vmatpush.msra.mxu0 %v513
        %1944 = vmatpush.msra.mxu0 %v512
        %1945 = vmatpush.msra.mxu0 %v511
        %1946 = vmatpush.msra.mxu0 %v510
        %1947 = vmatpush.msra.mxu0 %v509
        %1948 = vmatpush.msra.mxu0 %v508
        %1949 = vmatpush.msra.mxu0 %v507
        %1950 = vmatpush.msra.mxu0 %v506
        %1951 = vmatpush.msra.mxu0 %v505
        %1952 = vmatpush.msra.mxu0 %v504
        %1953 = vmatpush.msra.mxu0 %v503
        %1954 = vmatpush.msra.mxu0 %v502
        %1955 = vmatmul.f32.gmra.mxu0 %v1546
        %v1956 = vpop.f32.mrf.mxu0
        %v1957 = vadd.f32 %v1937, %v1956
        %1958 = vdwg.mxu0
        %1959 = vmatpush.msra.mxu0 %v533
        %1960 = vmatpush.msra.mxu0 %v532
        %1961 = vmatpush.msra.mxu0 %v531
        %1962 = vmatpush.msra.mxu0 %v530
        %1963 = vmatpush.msra.mxu0 %v529
        %1964 = vmatpush.msra.mxu0 %v528
        %1965 = vmatpush.msra.mxu0 %v527
        %1966 = vmatpush.msra.mxu0 %v526
        %1967 = vmatpush.msra.mxu0 %v525
        %1968 = vmatpush.msra.mxu0 %v524
        %1969 = vmatpush.msra.mxu0 %v523
        %1970 = vmatpush.msra.mxu0 %v522
        %1971 = vmatpush.msra.mxu0 %v521
        %1972 = vmatpush.msra.mxu0 %v520
        %1973 = vmatpush.msra.mxu0 %v519
        %1974 = vmatpush.msra.mxu0 %v518
        %1975 = vmatmul.f32.gmra.mxu0 %v1547
        %v1976 = vpop.f32.mrf.mxu0
        %v1977 = vadd.f32 %v1957, %v1976
        %1978 = vdwg.mxu0
        %1979 = vmatpush.msra.mxu0 %v549
        %1980 = vmatpush.msra.mxu0 %v548
        %1981 = vmatpush.msra.mxu0 %v547
        %1982 = vmatpush.msra.mxu0 %v546
        %1983 = vmatpush.msra.mxu0 %v545
        %1984 = vmatpush.msra.mxu0 %v544
        %1985 = vmatpush.msra.mxu0 %v543
        %1986 = vmatpush.msra.mxu0 %v542
        %1987 = vmatpush.msra.mxu0 %v541
        %1988 = vmatpush.msra.mxu0 %v540
        %1989 = vmatpush.msra.mxu0 %v539
        %1990 = vmatpush.msra.mxu0 %v538
        %1991 = vmatpush.msra.mxu0 %v537
        %1992 = vmatpush.msra.mxu0 %v536
        %1993 = vmatpush.msra.mxu0 %v535
        %1994 = vmatpush.msra.mxu0 %v534
        %1995 = vmatmul.f32.gmra.mxu0 %v1548
        %v1996 = vpop.f32.mrf.mxu0
        %v1997 = vadd.f32 %v1977, %v1996
        %1998 = vdwg.mxu0
        %1999 = vmatpush.msra.mxu0 %v565
        %2000 = vmatpush.msra.mxu0 %v564
        %2001 = vmatpush.msra.mxu0 %v563
        %2002 = vmatpush.msra.mxu0 %v562
        %2003 = vmatpush.msra.mxu0 %v561
        %2004 = vmatpush.msra.mxu0 %v560
        %2005 = vmatpush.msra.mxu0 %v559
        %2006 = vmatpush.msra.mxu0 %v558
        %2007 = vmatpush.msra.mxu0 %v557
        %2008 = vmatpush.msra.mxu0 %v556
        %2009 = vmatpush.msra.mxu0 %v555
        %2010 = vmatpush.msra.mxu0 %v554
        %2011 = vmatpush.msra.mxu0 %v553
        %2012 = vmatpush.msra.mxu0 %v552
        %2013 = vmatpush.msra.mxu0 %v551
        %2014 = vmatpush.msra.mxu0 %v550
        %2015 = vmatmul.f32.gmra.mxu0 %v1549
        %v2016 = vpop.f32.mrf.mxu0
        %v2017 = vadd.f32 %v1997, %v2016
        %2018 = vdwg.mxu0
        %2019 = vmatpush.msra.mxu0 %v581
        %2020 = vmatpush.msra.mxu0 %v580
        %2021 = vmatpush.msra.mxu0 %v579
        %2022 = vmatpush.msra.mxu0 %v578
        %2023 = vmatpush.msra.mxu0 %v577
        %2024 = vmatpush.msra.mxu0 %v576
        %2025 = vmatpush.msra.mxu0 %v575
        %2026 = vmatpush.msra.mxu0 %v574
        %2027 = vmatpush.msra.mxu0 %v573
        %2028 = vmatpush.msra.mxu0 %v572
        %2029 = vmatpush.msra.mxu0 %v571
        %2030 = vmatpush.msra.mxu0 %v570
        %2031 = vmatpush.msra.mxu0 %v569
        %2032 = vmatpush.msra.mxu0 %v568
        %2033 = vmatpush.msra.mxu0 %v567
        %2034 = vmatpush.msra.mxu0 %v566
        %2035 = vmatmul.f32.gmra.mxu0 %v1552
        %v2036 = vpop.f32.mrf.mxu0
        %v2037 = vadd.f32 %v2017, %v2036
        %2038 = vdwg.mxu0
        %2039 = vmatpush.msra.mxu0 %v597
        %2040 = vmatpush.msra.mxu0 %v596
        %2041 = vmatpush.msra.mxu0 %v595
        %2042 = vmatpush.msra.mxu0 %v594
        %2043 = vmatpush.msra.mxu0 %v593
        %2044 = vmatpush.msra.mxu0 %v592
        %2045 = vmatpush.msra.mxu0 %v591
        %2046 = vmatpush.msra.mxu0 %v590
        %2047 = vmatpush.msra.mxu0 %v589
        %2048 = vmatpush.msra.mxu0 %v588
        %2049 = vmatpush.msra.mxu0 %v587
        %2050 = vmatpush.msra.mxu0 %v586
        %2051 = vmatpush.msra.mxu0 %v585
        %2052 = vmatpush.msra.mxu0 %v584
        %2053 = vmatpush.msra.mxu0 %v583
        %2054 = vmatpush.msra.mxu0 %v582
        %2055 = vmatmul.f32.gmra.mxu0 %v1553
        %v2056 = vpop.f32.mrf.mxu0
        %v2057 = vadd.f32 %v2037, %v2056
        %2058 = vdwg.mxu0
        %2059 = vmatpush.msra.mxu0 %v613
        %2060 = vmatpush.msra.mxu0 %v612
        %2061 = vmatpush.msra.mxu0 %v611
        %2062 = vmatpush.msra.mxu0 %v610
        %2063 = vmatpush.msra.mxu0 %v609
        %2064 = vmatpush.msra.mxu0 %v608
        %2065 = vmatpush.msra.mxu0 %v607
        %2066 = vmatpush.msra.mxu0 %v606
        %2067 = vmatpush.msra.mxu0 %v605
        %2068 = vmatpush.msra.mxu0 %v604
        %2069 = vmatpush.msra.mxu0 %v603
        %2070 = vmatpush.msra.mxu0 %v602
        %2071 = vmatpush.msra.mxu0 %v601
        %2072 = vmatpush.msra.mxu0 %v600
        %2073 = vmatpush.msra.mxu0 %v599
        %2074 = vmatpush.msra.mxu0 %v598
        %2075 = vmatmul.f32.gmra.mxu0 %v1554
        %v2076 = vpop.f32.mrf.mxu0
        %v2077 = vadd.f32 %v2057, %v2076
        %2078 = vdwg.mxu0
        %2079 = vmatpush.msra.mxu0 %v629
        %2080 = vmatpush.msra.mxu0 %v628
        %2081 = vmatpush.msra.mxu0 %v627
        %2082 = vmatpush.msra.mxu0 %v626
        %2083 = vmatpush.msra.mxu0 %v625
        %2084 = vmatpush.msra.mxu0 %v624
        %2085 = vmatpush.msra.mxu0 %v623
        %2086 = vmatpush.msra.mxu0 %v622
        %2087 = vmatpush.msra.mxu0 %v621
        %2088 = vmatpush.msra.mxu0 %v620
        %2089 = vmatpush.msra.mxu0 %v619
        %2090 = vmatpush.msra.mxu0 %v618
        %2091 = vmatpush.msra.mxu0 %v617
        %2092 = vmatpush.msra.mxu0 %v616
        %2093 = vmatpush.msra.mxu0 %v615
        %2094 = vmatpush.msra.mxu0 %v614
        %2095 = vmatmul.f32.gmra.mxu0 %v1555
        %v2096 = vpop.f32.mrf.mxu0
        %v2097 = vadd.f32 %v2077, %v2096
        %2098 = vdwg.mxu0
        %2099 = vmatpush.msra.mxu0 %v645
        %2100 = vmatpush.msra.mxu0 %v644
        %2101 = vmatpush.msra.mxu0 %v643
        %2102 = vmatpush.msra.mxu0 %v642
        %2103 = vmatpush.msra.mxu0 %v641
        %2104 = vmatpush.msra.mxu0 %v640
        %2105 = vmatpush.msra.mxu0 %v639
        %2106 = vmatpush.msra.mxu0 %v638
        %2107 = vmatpush.msra.mxu0 %v637
        %2108 = vmatpush.msra.mxu0 %v636
        %2109 = vmatpush.msra.mxu0 %v635
        %2110 = vmatpush.msra.mxu0 %v634
        %2111 = vmatpush.msra.mxu0 %v633
        %2112 = vmatpush.msra.mxu0 %v632
        %2113 = vmatpush.msra.mxu0 %v631
        %2114 = vmatpush.msra.mxu0 %v630
        %2115 = vmatmul.f32.gmra.mxu0 %v1556
        %v2116 = vpop.f32.mrf.mxu0
        %v2117 = vadd.f32 %v2097, %v2116
        %2118 = vdwg.mxu0
        %2119 = vmatpush.msra.mxu0 %v661
        %2120 = vmatpush.msra.mxu0 %v660
        %2121 = vmatpush.msra.mxu0 %v659
        %2122 = vmatpush.msra.mxu0 %v658
        %2123 = vmatpush.msra.mxu0 %v657
        %2124 = vmatpush.msra.mxu0 %v656
        %2125 = vmatpush.msra.mxu0 %v655
        %2126 = vmatpush.msra.mxu0 %v654
        %2127 = vmatpush.msra.mxu0 %v653
        %2128 = vmatpush.msra.mxu0 %v652
        %2129 = vmatpush.msra.mxu0 %v651
        %2130 = vmatpush.msra.mxu0 %v650
        %2131 = vmatpush.msra.mxu0 %v649
        %2132 = vmatpush.msra.mxu0 %v648
        %2133 = vmatpush.msra.mxu0 %v647
        %2134 = vmatpush.msra.mxu0 %v646
        %2135 = vmatmul.f32.gmra.mxu0 %v1557
        %v2136 = vpop.f32.mrf.mxu0
        %v2137 = vadd.f32 %v2117, %v2136
        %2138 = vdwg.mxu0
        %2139 = vmatpush.msra.mxu0 %v677
        %2140 = vmatpush.msra.mxu0 %v676
        %2141 = vmatpush.msra.mxu0 %v675
        %2142 = vmatpush.msra.mxu0 %v674
        %2143 = vmatpush.msra.mxu0 %v673
        %2144 = vmatpush.msra.mxu0 %v672
        %2145 = vmatpush.msra.mxu0 %v671
        %2146 = vmatpush.msra.mxu0 %v670
        %2147 = vmatpush.msra.mxu0 %v669
        %2148 = vmatpush.msra.mxu0 %v668
        %2149 = vmatpush.msra.mxu0 %v667
        %2150 = vmatpush.msra.mxu0 %v666
        %2151 = vmatpush.msra.mxu0 %v665
        %2152 = vmatpush.msra.mxu0 %v664
        %2153 = vmatpush.msra.mxu0 %v663
        %2154 = vmatpush.msra.mxu0 %v662
        %2155 = vmatmul.f32.gmra.mxu0 %v1558
        %v2156 = vpop.f32.mrf.mxu0
        %v2157 = vadd.f32 %v2137, %v2156
        %2158 = vdwg.mxu0
        %2159 = vmatpush.msra.mxu0 %v693
        %2160 = vmatpush.msra.mxu0 %v692
        %2161 = vmatpush.msra.mxu0 %v691
        %2162 = vmatpush.msra.mxu0 %v690
        %2163 = vmatpush.msra.mxu0 %v689
        %2164 = vmatpush.msra.mxu0 %v688
        %2165 = vmatpush.msra.mxu0 %v687
        %2166 = vmatpush.msra.mxu0 %v686
        %2167 = vmatpush.msra.mxu0 %v685
        %2168 = vmatpush.msra.mxu0 %v684
        %2169 = vmatpush.msra.mxu0 %v683
        %2170 = vmatpush.msra.mxu0 %v682
        %2171 = vmatpush.msra.mxu0 %v681
        %2172 = vmatpush.msra.mxu0 %v680
        %2173 = vmatpush.msra.mxu0 %v679
        %2174 = vmatpush.msra.mxu0 %v678
        %2175 = vmatmul.f32.gmra.mxu0 %v1559
        %v2176 = vpop.f32.mrf.mxu0
        %v2177 = vadd.f32 %v2157, %v2176
        %2178 = vdwg.mxu0
        %2179 = vmatpush.msra.mxu0 %v709
        %2180 = vmatpush.msra.mxu0 %v708
        %2181 = vmatpush.msra.mxu0 %v707
        %2182 = vmatpush.msra.mxu0 %v706
        %2183 = vmatpush.msra.mxu0 %v705
        %2184 = vmatpush.msra.mxu0 %v704
        %2185 = vmatpush.msra.mxu0 %v703
        %2186 = vmatpush.msra.mxu0 %v702
        %2187 = vmatpush.msra.mxu0 %v701
        %2188 = vmatpush.msra.mxu0 %v700
        %2189 = vmatpush.msra.mxu0 %v699
        %2190 = vmatpush.msra.mxu0 %v698
        %2191 = vmatpush.msra.mxu0 %v697
        %2192 = vmatpush.msra.mxu0 %v696
        %2193 = vmatpush.msra.mxu0 %v695
        %2194 = vmatpush.msra.mxu0 %v694
        %2195 = vmatmul.f32.gmra.mxu0 %v1562
        %v2196 = vpop.f32.mrf.mxu0
        %v2197 = vadd.f32 %v2177, %v2196
        %2198 = vdwg.mxu0
        %2199 = vmatpush.msra.mxu0 %v725
        %2200 = vmatpush.msra.mxu0 %v724
        %2201 = vmatpush.msra.mxu0 %v723
        %2202 = vmatpush.msra.mxu0 %v722
        %2203 = vmatpush.msra.mxu0 %v721
        %2204 = vmatpush.msra.mxu0 %v720
        %2205 = vmatpush.msra.mxu0 %v719
        %2206 = vmatpush.msra.mxu0 %v718
        %2207 = vmatpush.msra.mxu0 %v717
        %2208 = vmatpush.msra.mxu0 %v716
        %2209 = vmatpush.msra.mxu0 %v715
        %2210 = vmatpush.msra.mxu0 %v714
        %2211 = vmatpush.msra.mxu0 %v713
        %2212 = vmatpush.msra.mxu0 %v712
        %2213 = vmatpush.msra.mxu0 %v711
        %2214 = vmatpush.msra.mxu0 %v710
        %2215 = vmatmul.f32.gmra.mxu0 %v1563
        %v2216 = vpop.f32.mrf.mxu0
        %v2217 = vadd.f32 %v2197, %v2216
        %2218 = vdwg.mxu0
        %2219 = vmatpush.msra.mxu0 %v741
        %2220 = vmatpush.msra.mxu0 %v740
        %2221 = vmatpush.msra.mxu0 %v739
        %2222 = vmatpush.msra.mxu0 %v738
        %2223 = vmatpush.msra.mxu0 %v737
        %2224 = vmatpush.msra.mxu0 %v736
        %2225 = vmatpush.msra.mxu0 %v735
        %2226 = vmatpush.msra.mxu0 %v734
        %2227 = vmatpush.msra.mxu0 %v733
        %2228 = vmatpush.msra.mxu0 %v732
        %2229 = vmatpush.msra.mxu0 %v731
        %2230 = vmatpush.msra.mxu0 %v730
        %2231 = vmatpush.msra.mxu0 %v729
        %2232 = vmatpush.msra.mxu0 %v728
        %2233 = vmatpush.msra.mxu0 %v727
        %2234 = vmatpush.msra.mxu0 %v726
        %2235 = vmatmul.f32.gmra.mxu0 %v1564
        %v2236 = vpop.f32.mrf.mxu0
        %v2237 = vadd.f32 %v2217, %v2236
        %2238 = vdwg.mxu0
        %2239 = vmatpush.msra.mxu0 %v757
        %2240 = vmatpush.msra.mxu0 %v756
        %2241 = vmatpush.msra.mxu0 %v755
        %2242 = vmatpush.msra.mxu0 %v754
        %2243 = vmatpush.msra.mxu0 %v753
        %2244 = vmatpush.msra.mxu0 %v752
        %2245 = vmatpush.msra.mxu0 %v751
        %2246 = vmatpush.msra.mxu0 %v750
        %2247 = vmatpush.msra.mxu0 %v749
        %2248 = vmatpush.msra.mxu0 %v748
        %2249 = vmatpush.msra.mxu0 %v747
        %2250 = vmatpush.msra.mxu0 %v746
        %2251 = vmatpush.msra.mxu0 %v745
        %2252 = vmatpush.msra.mxu0 %v744
        %2253 = vmatpush.msra.mxu0 %v743
        %2254 = vmatpush.msra.mxu0 %v742
        %2255 = vmatmul.f32.gmra.mxu0 %v1565
        %v2256 = vpop.f32.mrf.mxu0
        %v2257 = vadd.f32 %v2237, %v2256
        %2258 = vdwg.mxu0
        %2259 = vmatpush.msra.mxu0 %v773
        %2260 = vmatpush.msra.mxu0 %v772
        %2261 = vmatpush.msra.mxu0 %v771
        %2262 = vmatpush.msra.mxu0 %v770
        %2263 = vmatpush.msra.mxu0 %v769
        %2264 = vmatpush.msra.mxu0 %v768
        %2265 = vmatpush.msra.mxu0 %v767
        %2266 = vmatpush.msra.mxu0 %v766
        %2267 = vmatpush.msra.mxu0 %v765
        %2268 = vmatpush.msra.mxu0 %v764
        %2269 = vmatpush.msra.mxu0 %v763
        %2270 = vmatpush.msra.mxu0 %v762
        %2271 = vmatpush.msra.mxu0 %v761
        %2272 = vmatpush.msra.mxu0 %v760
        %2273 = vmatpush.msra.mxu0 %v759
        %2274 = vmatpush.msra.mxu0 %v758
        %2275 = vmatmul.f32.gmra.mxu0 %v1566
        %v2276 = vpop.f32.mrf.mxu0
        %v2277 = vadd.f32 %v2257, %v2276
        %2278 = vdwg.mxu0
        %2279 = vmatpush.msra.mxu0 %v789
        %2280 = vmatpush.msra.mxu0 %v788
        %2281 = vmatpush.msra.mxu0 %v787
        %2282 = vmatpush.msra.mxu0 %v786
        %2283 = vmatpush.msra.mxu0 %v785
        %2284 = vmatpush.msra.mxu0 %v784
        %2285 = vmatpush.msra.mxu0 %v783
        %2286 = vmatpush.msra.mxu0 %v782
        %2287 = vmatpush.msra.mxu0 %v781
        %2288 = vmatpush.msra.mxu0 %v780
        %2289 = vmatpush.msra.mxu0 %v779
        %2290 = vmatpush.msra.mxu0 %v778
        %2291 = vmatpush.msra.mxu0 %v777
        %2292 = vmatpush.msra.mxu0 %v776
        %2293 = vmatpush.msra.mxu0 %v775
        %2294 = vmatpush.msra.mxu0 %v774
        %2295 = vmatmul.f32.gmra.mxu0 %v1567
        %v2296 = vpop.f32.mrf.mxu0
        %v2297 = vadd.f32 %v2277, %v2296
        %2298 = vdwg.mxu0
        %2299 = vmatpush.msra.mxu0 %v805
        %2300 = vmatpush.msra.mxu0 %v804
        %2301 = vmatpush.msra.mxu0 %v803
        %2302 = vmatpush.msra.mxu0 %v802
        %2303 = vmatpush.msra.mxu0 %v801
        %2304 = vmatpush.msra.mxu0 %v800
        %2305 = vmatpush.msra.mxu0 %v799
        %2306 = vmatpush.msra.mxu0 %v798
        %2307 = vmatpush.msra.mxu0 %v797
        %2308 = vmatpush.msra.mxu0 %v796
        %2309 = vmatpush.msra.mxu0 %v795
        %2310 = vmatpush.msra.mxu0 %v794
        %2311 = vmatpush.msra.mxu0 %v793
        %2312 = vmatpush.msra.mxu0 %v792
        %2313 = vmatpush.msra.mxu0 %v791
        %2314 = vmatpush.msra.mxu0 %v790
        %2315 = vmatmul.f32.gmra.mxu0 %v1568
        %v2316 = vpop.f32.mrf.mxu0
        %v2317 = vadd.f32 %v2297, %v2316
        %2318 = vdwg.mxu0
        %2319 = vmatpush.msra.mxu0 %v821
        %2320 = vmatpush.msra.mxu0 %v820
        %2321 = vmatpush.msra.mxu0 %v819
        %2322 = vmatpush.msra.mxu0 %v818
        %2323 = vmatpush.msra.mxu0 %v817
        %2324 = vmatpush.msra.mxu0 %v816
        %2325 = vmatpush.msra.mxu0 %v815
        %2326 = vmatpush.msra.mxu0 %v814
        %2327 = vmatpush.msra.mxu0 %v813
        %2328 = vmatpush.msra.mxu0 %v812
        %2329 = vmatpush.msra.mxu0 %v811
        %2330 = vmatpush.msra.mxu0 %v810
        %2331 = vmatpush.msra.mxu0 %v809
        %2332 = vmatpush.msra.mxu0 %v808
        %2333 = vmatpush.msra.mxu0 %v807
        %2334 = vmatpush.msra.mxu0 %v806
        %2335 = vmatmul.f32.gmra.mxu0 %v1569
        %v2336 = vpop.f32.mrf.mxu0
        %v2337 = vadd.f32 %v2317, %v2336
        %2338 = vdwg.mxu0
        %2339 = vmatpush.msra.mxu0 %v837
        %2340 = vmatpush.msra.mxu0 %v836
        %2341 = vmatpush.msra.mxu0 %v835
        %2342 = vmatpush.msra.mxu0 %v834
        %2343 = vmatpush.msra.mxu0 %v833
        %2344 = vmatpush.msra.mxu0 %v832
        %2345 = vmatpush.msra.mxu0 %v831
        %2346 = vmatpush.msra.mxu0 %v830
        %2347 = vmatpush.msra.mxu0 %v829
        %2348 = vmatpush.msra.mxu0 %v828
        %2349 = vmatpush.msra.mxu0 %v827
        %2350 = vmatpush.msra.mxu0 %v826
        %2351 = vmatpush.msra.mxu0 %v825
        %2352 = vmatpush.msra.mxu0 %v824
        %2353 = vmatpush.msra.mxu0 %v823
        %2354 = vmatpush.msra.mxu0 %v822
        %2355 = vmatmul.f32.gmra.mxu0 %v1572
        %v2356 = vpop.f32.mrf.mxu0
        %v2357 = vadd.f32 %v2337, %v2356
        %2358 = vdwg.mxu0
        %2359 = vmatpush.msra.mxu0 %v853
        %2360 = vmatpush.msra.mxu0 %v852
        %2361 = vmatpush.msra.mxu0 %v851
        %2362 = vmatpush.msra.mxu0 %v850
        %2363 = vmatpush.msra.mxu0 %v849
        %2364 = vmatpush.msra.mxu0 %v848
        %2365 = vmatpush.msra.mxu0 %v847
        %2366 = vmatpush.msra.mxu0 %v846
        %2367 = vmatpush.msra.mxu0 %v845
        %2368 = vmatpush.msra.mxu0 %v844
        %2369 = vmatpush.msra.mxu0 %v843
        %2370 = vmatpush.msra.mxu0 %v842
        %2371 = vmatpush.msra.mxu0 %v841
        %2372 = vmatpush.msra.mxu0 %v840
        %2373 = vmatpush.msra.mxu0 %v839
        %2374 = vmatpush.msra.mxu0 %v838
        %2375 = vmatmul.f32.gmra.mxu0 %v1573
        %v2376 = vpop.f32.mrf.mxu0
        %v2377 = vadd.f32 %v2357, %v2376
        %2378 = vdwg.mxu0
        %2379 = vmatpush.msra.mxu0 %v869
        %2380 = vmatpush.msra.mxu0 %v868
        %2381 = vmatpush.msra.mxu0 %v867
        %2382 = vmatpush.msra.mxu0 %v866
        %2383 = vmatpush.msra.mxu0 %v865
        %2384 = vmatpush.msra.mxu0 %v864
        %2385 = vmatpush.msra.mxu0 %v863
        %2386 = vmatpush.msra.mxu0 %v862
        %2387 = vmatpush.msra.mxu0 %v861
        %2388 = vmatpush.msra.mxu0 %v860
        %2389 = vmatpush.msra.mxu0 %v859
        %2390 = vmatpush.msra.mxu0 %v858
        %2391 = vmatpush.msra.mxu0 %v857
        %2392 = vmatpush.msra.mxu0 %v856
        %2393 = vmatpush.msra.mxu0 %v855
        %2394 = vmatpush.msra.mxu0 %v854
        %2395 = vmatmul.f32.gmra.mxu0 %v1574
        %v2396 = vpop.f32.mrf.mxu0
        %v2397 = vadd.f32 %v2377, %v2396
        %2398 = vdwg.mxu0
        %2399 = vmatpush.msra.mxu0 %v885
        %2400 = vmatpush.msra.mxu0 %v884
        %2401 = vmatpush.msra.mxu0 %v883
        %2402 = vmatpush.msra.mxu0 %v882
        %2403 = vmatpush.msra.mxu0 %v881
        %2404 = vmatpush.msra.mxu0 %v880
        %2405 = vmatpush.msra.mxu0 %v879
        %2406 = vmatpush.msra.mxu0 %v878
        %2407 = vmatpush.msra.mxu0 %v877
        %2408 = vmatpush.msra.mxu0 %v876
        %2409 = vmatpush.msra.mxu0 %v875
        %2410 = vmatpush.msra.mxu0 %v874
        %2411 = vmatpush.msra.mxu0 %v873
        %2412 = vmatpush.msra.mxu0 %v872
        %2413 = vmatpush.msra.mxu0 %v871
        %2414 = vmatpush.msra.mxu0 %v870
        %2415 = vmatmul.f32.gmra.mxu0 %v1575
        %v2416 = vpop.f32.mrf.mxu0
        %v2417 = vadd.f32 %v2397, %v2416
        %2418 = vdwg.mxu0
        %2419 = vmatpush.msra.mxu0 %v901
        %2420 = vmatpush.msra.mxu0 %v900
        %2421 = vmatpush.msra.mxu0 %v899
        %2422 = vmatpush.msra.mxu0 %v898
        %2423 = vmatpush.msra.mxu0 %v897
        %2424 = vmatpush.msra.mxu0 %v896
        %2425 = vmatpush.msra.mxu0 %v895
        %2426 = vmatpush.msra.mxu0 %v894
        %2427 = vmatpush.msra.mxu0 %v893
        %2428 = vmatpush.msra.mxu0 %v892
        %2429 = vmatpush.msra.mxu0 %v891
        %2430 = vmatpush.msra.mxu0 %v890
        %2431 = vmatpush.msra.mxu0 %v889
        %2432 = vmatpush.msra.mxu0 %v888
        %2433 = vmatpush.msra.mxu0 %v887
        %2434 = vmatpush.msra.mxu0 %v886
        %2435 = vmatmul.f32.gmra.mxu0 %v1576
        %v2436 = vpop.f32.mrf.mxu0
        %v2437 = vadd.f32 %v2417, %v2436
        %2438 = vdwg.mxu0
        %2439 = vmatpush.msra.mxu0 %v917
        %2440 = vmatpush.msra.mxu0 %v916
        %2441 = vmatpush.msra.mxu0 %v915
        %2442 = vmatpush.msra.mxu0 %v914
        %2443 = vmatpush.msra.mxu0 %v913
        %2444 = vmatpush.msra.mxu0 %v912
        %2445 = vmatpush.msra.mxu0 %v911
        %2446 = vmatpush.msra.mxu0 %v910
        %2447 = vmatpush.msra.mxu0 %v909
        %2448 = vmatpush.msra.mxu0 %v908
        %2449 = vmatpush.msra.mxu0 %v907
        %2450 = vmatpush.msra.mxu0 %v906
        %2451 = vmatpush.msra.mxu0 %v905
        %2452 = vmatpush.msra.mxu0 %v904
        %2453 = vmatpush.msra.mxu0 %v903
        %2454 = vmatpush.msra.mxu0 %v902
        %2455 = vmatmul.f32.gmra.mxu0 %v1577
        %v2456 = vpop.f32.mrf.mxu0
        %v2457 = vadd.f32 %v2437, %v2456
        %2458 = vdwg.mxu0
        %2459 = vmatpush.msra.mxu0 %v933
        %2460 = vmatpush.msra.mxu0 %v932
        %2461 = vmatpush.msra.mxu0 %v931
        %2462 = vmatpush.msra.mxu0 %v930
        %2463 = vmatpush.msra.mxu0 %v929
        %2464 = vmatpush.msra.mxu0 %v928
        %2465 = vmatpush.msra.mxu0 %v927
        %2466 = vmatpush.msra.mxu0 %v926
        %2467 = vmatpush.msra.mxu0 %v925
        %2468 = vmatpush.msra.mxu0 %v924
        %2469 = vmatpush.msra.mxu0 %v923
        %2470 = vmatpush.msra.mxu0 %v922
        %2471 = vmatpush.msra.mxu0 %v921
        %2472 = vmatpush.msra.mxu0 %v920
        %2473 = vmatpush.msra.mxu0 %v919
        %2474 = vmatpush.msra.mxu0 %v918
        %2475 = vmatmul.f32.gmra.mxu0 %v1578
        %v2476 = vpop.f32.mrf.mxu0
        %v2477 = vadd.f32 %v2457, %v2476
        %2478 = vdwg.mxu0
        %2479 = vmatpush.msra.mxu0 %v949
        %2480 = vmatpush.msra.mxu0 %v948
        %2481 = vmatpush.msra.mxu0 %v947
        %2482 = vmatpush.msra.mxu0 %v946
        %2483 = vmatpush.msra.mxu0 %v945
        %2484 = vmatpush.msra.mxu0 %v944
        %2485 = vmatpush.msra.mxu0 %v943
        %2486 = vmatpush.msra.mxu0 %v942
        %2487 = vmatpush.msra.mxu0 %v941
        %2488 = vmatpush.msra.mxu0 %v940
        %2489 = vmatpush.msra.mxu0 %v939
        %2490 = vmatpush.msra.mxu0 %v938
        %2491 = vmatpush.msra.mxu0 %v937
        %2492 = vmatpush.msra.mxu0 %v936
        %2493 = vmatpush.msra.mxu0 %v935
        %2494 = vmatpush.msra.mxu0 %v934
        %2495 = vmatmul.f32.gmra.mxu0 %v1579
        %v2496 = vpop.f32.mrf.mxu0
        %v2497 = vadd.f32 %v2477, %v2496
        %2498 = vdwg.mxu0
        %2499 = vmatpush.msra.mxu0 %v965
        %2500 = vmatpush.msra.mxu0 %v964
        %2501 = vmatpush.msra.mxu0 %v963
        %2502 = vmatpush.msra.mxu0 %v962
        %2503 = vmatpush.msra.mxu0 %v961
        %2504 = vmatpush.msra.mxu0 %v960
        %2505 = vmatpush.msra.mxu0 %v959
        %2506 = vmatpush.msra.mxu0 %v958
        %2507 = vmatpush.msra.mxu0 %v957
        %2508 = vmatpush.msra.mxu0 %v956
        %2509 = vmatpush.msra.mxu0 %v955
        %2510 = vmatpush.msra.mxu0 %v954
        %2511 = vmatpush.msra.mxu0 %v953
        %2512 = vmatpush.msra.mxu0 %v952
        %2513 = vmatpush.msra.mxu0 %v951
        %2514 = vmatpush.msra.mxu0 %v950
        %2515 = vmatmul.f32.gmra.mxu0 %v1582
        %v2516 = vpop.f32.mrf.mxu0
        %v2517 = vadd.f32 %v2497, %v2516
        %2518 = vdwg.mxu0
        %2519 = vmatpush.msra.mxu0 %v981
        %2520 = vmatpush.msra.mxu0 %v980
        %2521 = vmatpush.msra.mxu0 %v979
        %2522 = vmatpush.msra.mxu0 %v978
        %2523 = vmatpush.msra.mxu0 %v977
        %2524 = vmatpush.msra.mxu0 %v976
        %2525 = vmatpush.msra.mxu0 %v975
        %2526 = vmatpush.msra.mxu0 %v974
        %2527 = vmatpush.msra.mxu0 %v973
        %2528 = vmatpush.msra.mxu0 %v972
        %2529 = vmatpush.msra.mxu0 %v971
        %2530 = vmatpush.msra.mxu0 %v970
        %2531 = vmatpush.msra.mxu0 %v969
        %2532 = vmatpush.msra.mxu0 %v968
        %2533 = vmatpush.msra.mxu0 %v967
        %2534 = vmatpush.msra.mxu0 %v966
        %2535 = vmatmul.f32.gmra.mxu0 %v1583
        %v2536 = vpop.f32.mrf.mxu0
        %v2537 = vadd.f32 %v2517, %v2536
        %2538 = vdwg.mxu0
        %2539 = vmatpush.msra.mxu0 %v997
        %2540 = vmatpush.msra.mxu0 %v996
        %2541 = vmatpush.msra.mxu0 %v995
        %2542 = vmatpush.msra.mxu0 %v994
        %2543 = vmatpush.msra.mxu0 %v993
        %2544 = vmatpush.msra.mxu0 %v992
        %2545 = vmatpush.msra.mxu0 %v991
        %2546 = vmatpush.msra.mxu0 %v990
        %2547 = vmatpush.msra.mxu0 %v989
        %2548 = vmatpush.msra.mxu0 %v988
        %2549 = vmatpush.msra.mxu0 %v987
        %2550 = vmatpush.msra.mxu0 %v986
        %2551 = vmatpush.msra.mxu0 %v985
        %2552 = vmatpush.msra.mxu0 %v984
        %2553 = vmatpush.msra.mxu0 %v983
        %2554 = vmatpush.msra.mxu0 %v982
        %2555 = vmatmul.f32.gmra.mxu0 %v1584
        %v2556 = vpop.f32.mrf.mxu0
        %v2557 = vadd.f32 %v2537, %v2556
        %2558 = vdwg.mxu0
        %2559 = vmatpush.msra.mxu0 %v1013
        %2560 = vmatpush.msra.mxu0 %v1012
        %2561 = vmatpush.msra.mxu0 %v1011
        %2562 = vmatpush.msra.mxu0 %v1010
        %2563 = vmatpush.msra.mxu0 %v1009
        %2564 = vmatpush.msra.mxu0 %v1008
        %2565 = vmatpush.msra.mxu0 %v1007
        %2566 = vmatpush.msra.mxu0 %v1006
        %2567 = vmatpush.msra.mxu0 %v1005
        %2568 = vmatpush.msra.mxu0 %v1004
        %2569 = vmatpush.msra.mxu0 %v1003
        %2570 = vmatpush.msra.mxu0 %v1002
        %2571 = vmatpush.msra.mxu0 %v1001
        %2572 = vmatpush.msra.mxu0 %v1000
        %2573 = vmatpush.msra.mxu0 %v999
        %2574 = vmatpush.msra.mxu0 %v998
        %2575 = vmatmul.f32.gmra.mxu0 %v1585
        %v2576 = vpop.f32.mrf.mxu0
        %v2577 = vadd.f32 %v2557, %v2576
        %2578 = vdwg.mxu0
        %2579 = vmatpush.msra.mxu0 %v1029
        %2580 = vmatpush.msra.mxu0 %v1028
        %2581 = vmatpush.msra.mxu0 %v1027
        %2582 = vmatpush.msra.mxu0 %v1026
        %2583 = vmatpush.msra.mxu0 %v1025
        %2584 = vmatpush.msra.mxu0 %v1024
        %2585 = vmatpush.msra.mxu0 %v1023
        %2586 = vmatpush.msra.mxu0 %v1022
        %2587 = vmatpush.msra.mxu0 %v1021
        %2588 = vmatpush.msra.mxu0 %v1020
        %2589 = vmatpush.msra.mxu0 %v1019
        %2590 = vmatpush.msra.mxu0 %v1018
        %2591 = vmatpush.msra.mxu0 %v1017
        %2592 = vmatpush.msra.mxu0 %v1016
        %2593 = vmatpush.msra.mxu0 %v1015
        %2594 = vmatpush.msra.mxu0 %v1014
        %2595 = vmatmul.f32.gmra.mxu0 %v1586
        %v2596 = vpop.f32.mrf.mxu0
        %v2597 = vadd.f32 %v2577, %v2596
        %2598 = vdwg.mxu0
        %2599 = vmatpush.msra.mxu0 %v1045
        %2600 = vmatpush.msra.mxu0 %v1044
        %2601 = vmatpush.msra.mxu0 %v1043
        %2602 = vmatpush.msra.mxu0 %v1042
        %2603 = vmatpush.msra.mxu0 %v1041
        %2604 = vmatpush.msra.mxu0 %v1040
        %2605 = vmatpush.msra.mxu0 %v1039
        %2606 = vmatpush.msra.mxu0 %v1038
        %2607 = vmatpush.msra.mxu0 %v1037
        %2608 = vmatpush.msra.mxu0 %v1036
        %2609 = vmatpush.msra.mxu0 %v1035
        %2610 = vmatpush.msra.mxu0 %v1034
        %2611 = vmatpush.msra.mxu0 %v1033
        %2612 = vmatpush.msra.mxu0 %v1032
        %2613 = vmatpush.msra.mxu0 %v1031
        %2614 = vmatpush.msra.mxu0 %v1030
        %2615 = vmatmul.f32.gmra.mxu0 %v1587
        %v2616 = vpop.f32.mrf.mxu0
        %v2617 = vadd.f32 %v2597, %v2616
        %2618 = vdwg.mxu0
        %2619 = vmatpush.msra.mxu0 %v1061
        %2620 = vmatpush.msra.mxu0 %v1060
        %2621 = vmatpush.msra.mxu0 %v1059
        %2622 = vmatpush.msra.mxu0 %v1058
        %2623 = vmatpush.msra.mxu0 %v1057
        %2624 = vmatpush.msra.mxu0 %v1056
        %2625 = vmatpush.msra.mxu0 %v1055
        %2626 = vmatpush.msra.mxu0 %v1054
        %2627 = vmatpush.msra.mxu0 %v1053
        %2628 = vmatpush.msra.mxu0 %v1052
        %2629 = vmatpush.msra.mxu0 %v1051
        %2630 = vmatpush.msra.mxu0 %v1050
        %2631 = vmatpush.msra.mxu0 %v1049
        %2632 = vmatpush.msra.mxu0 %v1048
        %2633 = vmatpush.msra.mxu0 %v1047
        %2634 = vmatpush.msra.mxu0 %v1046
        %2635 = vmatmul.f32.gmra.mxu0 %v1588
        %v2636 = vpop.f32.mrf.mxu0
        %v2637 = vadd.f32 %v2617, %v2636
        %2638 = vdwg.mxu0
        %2639 = vmatpush.msra.mxu0 %v1077
        %2640 = vmatpush.msra.mxu0 %v1076
        %2641 = vmatpush.msra.mxu0 %v1075
        %2642 = vmatpush.msra.mxu0 %v1074
        %2643 = vmatpush.msra.mxu0 %v1073
        %2644 = vmatpush.msra.mxu0 %v1072
        %2645 = vmatpush.msra.mxu0 %v1071
        %2646 = vmatpush.msra.mxu0 %v1070
        %2647 = vmatpush.msra.mxu0 %v1069
        %2648 = vmatpush.msra.mxu0 %v1068
        %2649 = vmatpush.msra.mxu0 %v1067
        %2650 = vmatpush.msra.mxu0 %v1066
        %2651 = vmatpush.msra.mxu0 %v1065
        %2652 = vmatpush.msra.mxu0 %v1064
        %2653 = vmatpush.msra.mxu0 %v1063
        %2654 = vmatpush.msra.mxu0 %v1062
        %2655 = vmatmul.f32.gmra.mxu0 %v1589
        %v2656 = vpop.f32.mrf.mxu0
        %v2657 = vadd.f32 %v2637, %v2656
        %2658 = vdwg.mxu0
        %2659 = vmatpush.msra.mxu0 %v1093
        %2660 = vmatpush.msra.mxu0 %v1092
        %2661 = vmatpush.msra.mxu0 %v1091
        %2662 = vmatpush.msra.mxu0 %v1090
        %2663 = vmatpush.msra.mxu0 %v1089
        %2664 = vmatpush.msra.mxu0 %v1088
        %2665 = vmatpush.msra.mxu0 %v1087
        %2666 = vmatpush.msra.mxu0 %v1086
        %2667 = vmatpush.msra.mxu0 %v1085
        %2668 = vmatpush.msra.mxu0 %v1084
        %2669 = vmatpush.msra.mxu0 %v1083
        %2670 = vmatpush.msra.mxu0 %v1082
        %2671 = vmatpush.msra.mxu0 %v1081
        %2672 = vmatpush.msra.mxu0 %v1080
        %2673 = vmatpush.msra.mxu0 %v1079
        %2674 = vmatpush.msra.mxu0 %v1078
        %2675 = vmatmul.f32.gmra.mxu0 %v1592
        %v2676 = vpop.f32.mrf.mxu0
        %v2677 = vadd.f32 %v2657, %v2676
        %2678 = vdwg.mxu0
        %2679 = vmatpush.msra.mxu0 %v1109
        %2680 = vmatpush.msra.mxu0 %v1108
        %2681 = vmatpush.msra.mxu0 %v1107
        %2682 = vmatpush.msra.mxu0 %v1106
        %2683 = vmatpush.msra.mxu0 %v1105
        %2684 = vmatpush.msra.mxu0 %v1104
        %2685 = vmatpush.msra.mxu0 %v1103
        %2686 = vmatpush.msra.mxu0 %v1102
        %2687 = vmatpush.msra.mxu0 %v1101
        %2688 = vmatpush.msra.mxu0 %v1100
        %2689 = vmatpush.msra.mxu0 %v1099
        %2690 = vmatpush.msra.mxu0 %v1098
        %2691 = vmatpush.msra.mxu0 %v1097
        %2692 = vmatpush.msra.mxu0 %v1096
        %2693 = vmatpush.msra.mxu0 %v1095
        %2694 = vmatpush.msra.mxu0 %v1094
        %2695 = vmatmul.f32.gmra.mxu0 %v1593
        %v2696 = vpop.f32.mrf.mxu0
        %v2697 = vadd.f32 %v2677, %v2696
        %2698 = vdwg.mxu0
        %2699 = vmatpush.msra.mxu0 %v1125
        %2700 = vmatpush.msra.mxu0 %v1124
        %2701 = vmatpush.msra.mxu0 %v1123
        %2702 = vmatpush.msra.mxu0 %v1122
        %2703 = vmatpush.msra.mxu0 %v1121
        %2704 = vmatpush.msra.mxu0 %v1120
        %2705 = vmatpush.msra.mxu0 %v1119
        %2706 = vmatpush.msra.mxu0 %v1118
        %2707 = vmatpush.msra.mxu0 %v1117
        %2708 = vmatpush.msra.mxu0 %v1116
        %2709 = vmatpush.msra.mxu0 %v1115
        %2710 = vmatpush.msra.mxu0 %v1114
        %2711 = vmatpush.msra.mxu0 %v1113
        %2712 = vmatpush.msra.mxu0 %v1112
        %2713 = vmatpush.msra.mxu0 %v1111
        %2714 = vmatpush.msra.mxu0 %v1110
        %2715 = vmatmul.f32.gmra.mxu0 %v1594
        %v2716 = vpop.f32.mrf.mxu0
        %v2717 = vadd.f32 %v2697, %v2716
        %2718 = vdwg.mxu0
        %2719 = vmatpush.msra.mxu0 %v1141
        %2720 = vmatpush.msra.mxu0 %v1140
        %2721 = vmatpush.msra.mxu0 %v1139
        %2722 = vmatpush.msra.mxu0 %v1138
        %2723 = vmatpush.msra.mxu0 %v1137
        %2724 = vmatpush.msra.mxu0 %v1136
        %2725 = vmatpush.msra.mxu0 %v1135
        %2726 = vmatpush.msra.mxu0 %v1134
        %2727 = vmatpush.msra.mxu0 %v1133
        %2728 = vmatpush.msra.mxu0 %v1132
        %2729 = vmatpush.msra.mxu0 %v1131
        %2730 = vmatpush.msra.mxu0 %v1130
        %2731 = vmatpush.msra.mxu0 %v1129
        %2732 = vmatpush.msra.mxu0 %v1128
        %2733 = vmatpush.msra.mxu0 %v1127
        %2734 = vmatpush.msra.mxu0 %v1126
        %2735 = vmatmul.f32.gmra.mxu0 %v1595
        %v2736 = vpop.f32.mrf.mxu0
        %v2737 = vadd.f32 %v2717, %v2736
        %2738 = vdwg.mxu0
        %2739 = vmatpush.msra.mxu0 %v1157
        %2740 = vmatpush.msra.mxu0 %v1156
        %2741 = vmatpush.msra.mxu0 %v1155
        %2742 = vmatpush.msra.mxu0 %v1154
        %2743 = vmatpush.msra.mxu0 %v1153
        %2744 = vmatpush.msra.mxu0 %v1152
        %2745 = vmatpush.msra.mxu0 %v1151
        %2746 = vmatpush.msra.mxu0 %v1150
        %2747 = vmatpush.msra.mxu0 %v1149
        %2748 = vmatpush.msra.mxu0 %v1148
        %2749 = vmatpush.msra.mxu0 %v1147
        %2750 = vmatpush.msra.mxu0 %v1146
        %2751 = vmatpush.msra.mxu0 %v1145
        %2752 = vmatpush.msra.mxu0 %v1144
        %2753 = vmatpush.msra.mxu0 %v1143
        %2754 = vmatpush.msra.mxu0 %v1142
        %2755 = vmatmul.f32.gmra.mxu0 %v1596
        %v2756 = vpop.f32.mrf.mxu0
        %v2757 = vadd.f32 %v2737, %v2756
        %2758 = vdwg.mxu0
        %2759 = vmatpush.msra.mxu0 %v1173
        %2760 = vmatpush.msra.mxu0 %v1172
        %2761 = vmatpush.msra.mxu0 %v1171
        %2762 = vmatpush.msra.mxu0 %v1170
        %2763 = vmatpush.msra.mxu0 %v1169
        %2764 = vmatpush.msra.mxu0 %v1168
        %2765 = vmatpush.msra.mxu0 %v1167
        %2766 = vmatpush.msra.mxu0 %v1166
        %2767 = vmatpush.msra.mxu0 %v1165
        %2768 = vmatpush.msra.mxu0 %v1164
        %2769 = vmatpush.msra.mxu0 %v1163
        %2770 = vmatpush.msra.mxu0 %v1162
        %2771 = vmatpush.msra.mxu0 %v1161
        %2772 = vmatpush.msra.mxu0 %v1160
        %2773 = vmatpush.msra.mxu0 %v1159
        %2774 = vmatpush.msra.mxu0 %v1158
        %2775 = vmatmul.f32.gmra.mxu0 %v1597
        %v2776 = vpop.f32.mrf.mxu0
        %v2777 = vadd.f32 %v2757, %v2776
        %2778 = vdwg.mxu0
        %2779 = vmatpush.msra.mxu0 %v1189
        %2780 = vmatpush.msra.mxu0 %v1188
        %2781 = vmatpush.msra.mxu0 %v1187
        %2782 = vmatpush.msra.mxu0 %v1186
        %2783 = vmatpush.msra.mxu0 %v1185
        %2784 = vmatpush.msra.mxu0 %v1184
        %2785 = vmatpush.msra.mxu0 %v1183
        %2786 = vmatpush.msra.mxu0 %v1182
        %2787 = vmatpush.msra.mxu0 %v1181
        %2788 = vmatpush.msra.mxu0 %v1180
        %2789 = vmatpush.msra.mxu0 %v1179
        %2790 = vmatpush.msra.mxu0 %v1178
        %2791 = vmatpush.msra.mxu0 %v1177
        %2792 = vmatpush.msra.mxu0 %v1176
        %2793 = vmatpush.msra.mxu0 %v1175
        %2794 = vmatpush.msra.mxu0 %v1174
        %2795 = vmatmul.f32.gmra.mxu0 %v1598
        %v2796 = vpop.f32.mrf.mxu0
        %v2797 = vadd.f32 %v2777, %v2796
        %2798 = vdwg.mxu0
        %2799 = vmatpush.msra.mxu0 %v1205
        %2800 = vmatpush.msra.mxu0 %v1204
        %2801 = vmatpush.msra.mxu0 %v1203
        %2802 = vmatpush.msra.mxu0 %v1202
        %2803 = vmatpush.msra.mxu0 %v1201
        %2804 = vmatpush.msra.mxu0 %v1200
        %2805 = vmatpush.msra.mxu0 %v1199
        %2806 = vmatpush.msra.mxu0 %v1198
        %2807 = vmatpush.msra.mxu0 %v1197
        %2808 = vmatpush.msra.mxu0 %v1196
        %2809 = vmatpush.msra.mxu0 %v1195
        %2810 = vmatpush.msra.mxu0 %v1194
        %2811 = vmatpush.msra.mxu0 %v1193
        %2812 = vmatpush.msra.mxu0 %v1192
        %2813 = vmatpush.msra.mxu0 %v1191
        %2814 = vmatpush.msra.mxu0 %v1190
        %2815 = vmatmul.f32.gmra.mxu0 %v1599
        %v2816 = vpop.f32.mrf.mxu0
        %v2817 = vadd.f32 %v2797, %v2816
        %2818 = vdwg.mxu0
        %2819 = vmatpush.msra.mxu0 %v1221
        %2820 = vmatpush.msra.mxu0 %v1220
        %2821 = vmatpush.msra.mxu0 %v1219
        %2822 = vmatpush.msra.mxu0 %v1218
        %2823 = vmatpush.msra.mxu0 %v1217
        %2824 = vmatpush.msra.mxu0 %v1216
        %2825 = vmatpush.msra.mxu0 %v1215
        %2826 = vmatpush.msra.mxu0 %v1214
        %2827 = vmatpush.msra.mxu0 %v1213
        %2828 = vmatpush.msra.mxu0 %v1212
        %2829 = vmatpush.msra.mxu0 %v1211
        %2830 = vmatpush.msra.mxu0 %v1210
        %2831 = vmatpush.msra.mxu0 %v1209
        %2832 = vmatpush.msra.mxu0 %v1208
        %2833 = vmatpush.msra.mxu0 %v1207
        %2834 = vmatpush.msra.mxu0 %v1206
        %2835 = vmatmul.f32.gmra.mxu0 %v1602
        %v2836 = vpop.f32.mrf.mxu0
        %v2837 = vadd.f32 %v2817, %v2836
        %2838 = vdwg.mxu0
        %2839 = vmatpush.msra.mxu0 %v1237
        %2840 = vmatpush.msra.mxu0 %v1236
        %2841 = vmatpush.msra.mxu0 %v1235
        %2842 = vmatpush.msra.mxu0 %v1234
        %2843 = vmatpush.msra.mxu0 %v1233
        %2844 = vmatpush.msra.mxu0 %v1232
        %2845 = vmatpush.msra.mxu0 %v1231
        %2846 = vmatpush.msra.mxu0 %v1230
        %2847 = vmatpush.msra.mxu0 %v1229
        %2848 = vmatpush.msra.mxu0 %v1228
        %2849 = vmatpush.msra.mxu0 %v1227
        %2850 = vmatpush.msra.mxu0 %v1226
        %2851 = vmatpush.msra.mxu0 %v1225
        %2852 = vmatpush.msra.mxu0 %v1224
        %2853 = vmatpush.msra.mxu0 %v1223
        %2854 = vmatpush.msra.mxu0 %v1222
        %2855 = vmatmul.f32.gmra.mxu0 %v1603
        %v2856 = vpop.f32.mrf.mxu0
        %v2857 = vadd.f32 %v2837, %v2856
        %2858 = vdwg.mxu0
        %2859 = vmatpush.msra.mxu0 %v1253
        %2860 = vmatpush.msra.mxu0 %v1252
        %2861 = vmatpush.msra.mxu0 %v1251
        %2862 = vmatpush.msra.mxu0 %v1250
        %2863 = vmatpush.msra.mxu0 %v1249
        %2864 = vmatpush.msra.mxu0 %v1248
        %2865 = vmatpush.msra.mxu0 %v1247
        %2866 = vmatpush.msra.mxu0 %v1246
        %2867 = vmatpush.msra.mxu0 %v1245
        %2868 = vmatpush.msra.mxu0 %v1244
        %2869 = vmatpush.msra.mxu0 %v1243
        %2870 = vmatpush.msra.mxu0 %v1242
        %2871 = vmatpush.msra.mxu0 %v1241
        %2872 = vmatpush.msra.mxu0 %v1240
        %2873 = vmatpush.msra.mxu0 %v1239
        %2874 = vmatpush.msra.mxu0 %v1238
        %2875 = vmatmul.f32.gmra.mxu0 %v1604
        %v2876 = vpop.f32.mrf.mxu0
        %v2877 = vadd.f32 %v2857, %v2876
        %2878 = vdwg.mxu0
        %2879 = vmatpush.msra.mxu0 %v1269
        %2880 = vmatpush.msra.mxu0 %v1268
        %2881 = vmatpush.msra.mxu0 %v1267
        %2882 = vmatpush.msra.mxu0 %v1266
        %2883 = vmatpush.msra.mxu0 %v1265
        %2884 = vmatpush.msra.mxu0 %v1264
        %2885 = vmatpush.msra.mxu0 %v1263
        %2886 = vmatpush.msra.mxu0 %v1262
        %2887 = vmatpush.msra.mxu0 %v1261
        %2888 = vmatpush.msra.mxu0 %v1260
        %2889 = vmatpush.msra.mxu0 %v1259
        %2890 = vmatpush.msra.mxu0 %v1258
        %2891 = vmatpush.msra.mxu0 %v1257
        %2892 = vmatpush.msra.mxu0 %v1256
        %2893 = vmatpush.msra.mxu0 %v1255
        %2894 = vmatpush.msra.mxu0 %v1254
        %2895 = vmatmul.f32.gmra.mxu0 %v1605
        %v2896 = vpop.f32.mrf.mxu0
        %v2897 = vadd.f32 %v2877, %v2896
        %2898 = vdwg.mxu0
        %2899 = vmatpush.msra.mxu0 %v1285
        %2900 = vmatpush.msra.mxu0 %v1284
        %2901 = vmatpush.msra.mxu0 %v1283
        %2902 = vmatpush.msra.mxu0 %v1282
        %2903 = vmatpush.msra.mxu0 %v1281
        %2904 = vmatpush.msra.mxu0 %v1280
        %2905 = vmatpush.msra.mxu0 %v1279
        %2906 = vmatpush.msra.mxu0 %v1278
        %2907 = vmatpush.msra.mxu0 %v1277
        %2908 = vmatpush.msra.mxu0 %v1276
        %2909 = vmatpush.msra.mxu0 %v1275
        %2910 = vmatpush.msra.mxu0 %v1274
        %2911 = vmatpush.msra.mxu0 %v1273
        %2912 = vmatpush.msra.mxu0 %v1272
        %2913 = vmatpush.msra.mxu0 %v1271
        %2914 = vmatpush.msra.mxu0 %v1270
        %2915 = vmatmul.f32.gmra.mxu0 %v1606
        %v2916 = vpop.f32.mrf.mxu0
        %v2917 = vadd.f32 %v2897, %v2916
        %2918 = vdwg.mxu0
        %2919 = vmatpush.msra.mxu0 %v1301
        %2920 = vmatpush.msra.mxu0 %v1300
        %2921 = vmatpush.msra.mxu0 %v1299
        %2922 = vmatpush.msra.mxu0 %v1298
        %2923 = vmatpush.msra.mxu0 %v1297
        %2924 = vmatpush.msra.mxu0 %v1296
        %2925 = vmatpush.msra.mxu0 %v1295
        %2926 = vmatpush.msra.mxu0 %v1294
        %2927 = vmatpush.msra.mxu0 %v1293
        %2928 = vmatpush.msra.mxu0 %v1292
        %2929 = vmatpush.msra.mxu0 %v1291
        %2930 = vmatpush.msra.mxu0 %v1290
        %2931 = vmatpush.msra.mxu0 %v1289
        %2932 = vmatpush.msra.mxu0 %v1288
        %2933 = vmatpush.msra.mxu0 %v1287
        %2934 = vmatpush.msra.mxu0 %v1286
        %2935 = vmatmul.f32.gmra.mxu0 %v1607
        %v2936 = vpop.f32.mrf.mxu0
        %v2937 = vadd.f32 %v2917, %v2936
        %2938 = vdwg.mxu0
        %2939 = vmatpush.msra.mxu0 %v1317
        %2940 = vmatpush.msra.mxu0 %v1316
        %2941 = vmatpush.msra.mxu0 %v1315
        %2942 = vmatpush.msra.mxu0 %v1314
        %2943 = vmatpush.msra.mxu0 %v1313
        %2944 = vmatpush.msra.mxu0 %v1312
        %2945 = vmatpush.msra.mxu0 %v1311
        %2946 = vmatpush.msra.mxu0 %v1310
        %2947 = vmatpush.msra.mxu0 %v1309
        %2948 = vmatpush.msra.mxu0 %v1308
        %2949 = vmatpush.msra.mxu0 %v1307
        %2950 = vmatpush.msra.mxu0 %v1306
        %2951 = vmatpush.msra.mxu0 %v1305
        %2952 = vmatpush.msra.mxu0 %v1304
        %2953 = vmatpush.msra.mxu0 %v1303
        %2954 = vmatpush.msra.mxu0 %v1302
        %2955 = vmatmul.f32.gmra.mxu0 %v1608
        %v2956 = vpop.f32.mrf.mxu0
        %v2957 = vadd.f32 %v2937, %v2956
        %2958 = vdwg.mxu0
        %2959 = vmatpush.msra.mxu0 %v1333
        %2960 = vmatpush.msra.mxu0 %v1332
        %2961 = vmatpush.msra.mxu0 %v1331
        %2962 = vmatpush.msra.mxu0 %v1330
        %2963 = vmatpush.msra.mxu0 %v1329
        %2964 = vmatpush.msra.mxu0 %v1328
        %2965 = vmatpush.msra.mxu0 %v1327
        %2966 = vmatpush.msra.mxu0 %v1326
        %2967 = vmatpush.msra.mxu0 %v1325
        %2968 = vmatpush.msra.mxu0 %v1324
        %2969 = vmatpush.msra.mxu0 %v1323
        %2970 = vmatpush.msra.mxu0 %v1322
        %2971 = vmatpush.msra.mxu0 %v1321
        %2972 = vmatpush.msra.mxu0 %v1320
        %2973 = vmatpush.msra.mxu0 %v1319
        %2974 = vmatpush.msra.mxu0 %v1318
        %2975 = vmatmul.f32.gmra.mxu0 %v1609
        %v2976 = vpop.f32.mrf.mxu0
        %v2977 = vadd.f32 %v2957, %v2976
        %2978 = vdwg.mxu0
        %2979 = vmatpush.msra.mxu0 %v1349
        %2980 = vmatpush.msra.mxu0 %v1348
        %2981 = vmatpush.msra.mxu0 %v1347
        %2982 = vmatpush.msra.mxu0 %v1346
        %2983 = vmatpush.msra.mxu0 %v1345
        %2984 = vmatpush.msra.mxu0 %v1344
        %2985 = vmatpush.msra.mxu0 %v1343
        %2986 = vmatpush.msra.mxu0 %v1342
        %2987 = vmatpush.msra.mxu0 %v1341
        %2988 = vmatpush.msra.mxu0 %v1340
        %2989 = vmatpush.msra.mxu0 %v1339
        %2990 = vmatpush.msra.mxu0 %v1338
        %2991 = vmatpush.msra.mxu0 %v1337
        %2992 = vmatpush.msra.mxu0 %v1336
        %2993 = vmatpush.msra.mxu0 %v1335
        %2994 = vmatpush.msra.mxu0 %v1334
        %2995 = vmatmul.f32.gmra.mxu0 %v1612
        %v2996 = vpop.f32.mrf.mxu0
        %v2997 = vadd.f32 %v2977, %v2996
        %2998 = vdwg.mxu0
        %2999 = vmatpush.msra.mxu0 %v1365
        %3000 = vmatpush.msra.mxu0 %v1364
        %3001 = vmatpush.msra.mxu0 %v1363
        %3002 = vmatpush.msra.mxu0 %v1362
        %3003 = vmatpush.msra.mxu0 %v1361
        %3004 = vmatpush.msra.mxu0 %v1360
        %3005 = vmatpush.msra.mxu0 %v1359
        %3006 = vmatpush.msra.mxu0 %v1358
        %3007 = vmatpush.msra.mxu0 %v1357
        %3008 = vmatpush.msra.mxu0 %v1356
        %3009 = vmatpush.msra.mxu0 %v1355
        %3010 = vmatpush.msra.mxu0 %v1354
        %3011 = vmatpush.msra.mxu0 %v1353
        %3012 = vmatpush.msra.mxu0 %v1352
        %3013 = vmatpush.msra.mxu0 %v1351
        %3014 = vmatpush.msra.mxu0 %v1350
        %3015 = vmatmul.f32.gmra.mxu0 %v1613
        %v3016 = vpop.f32.mrf.mxu0
        %v3017 = vadd.f32 %v2997, %v3016
        %3018 = vdwg.mxu0
        %3019 = vmatpush.msra.mxu0 %v1381
        %3020 = vmatpush.msra.mxu0 %v1380
        %3021 = vmatpush.msra.mxu0 %v1379
        %3022 = vmatpush.msra.mxu0 %v1378
        %3023 = vmatpush.msra.mxu0 %v1377
        %3024 = vmatpush.msra.mxu0 %v1376
        %3025 = vmatpush.msra.mxu0 %v1375
        %3026 = vmatpush.msra.mxu0 %v1374
        %3027 = vmatpush.msra.mxu0 %v1373
        %3028 = vmatpush.msra.mxu0 %v1372
        %3029 = vmatpush.msra.mxu0 %v1371
        %3030 = vmatpush.msra.mxu0 %v1370
        %3031 = vmatpush.msra.mxu0 %v1369
        %3032 = vmatpush.msra.mxu0 %v1368
        %3033 = vmatpush.msra.mxu0 %v1367
        %3034 = vmatpush.msra.mxu0 %v1366
        %3035 = vmatmul.f32.gmra.mxu0 %v1614
        %v3036 = vpop.f32.mrf.mxu0
        %v3037 = vadd.f32 %v3017, %v3036
        %3038 = vdwg.mxu0
        %3039 = vmatpush.msra.mxu0 %v1397
        %3040 = vmatpush.msra.mxu0 %v1396
        %3041 = vmatpush.msra.mxu0 %v1395
        %3042 = vmatpush.msra.mxu0 %v1394
        %3043 = vmatpush.msra.mxu0 %v1393
        %3044 = vmatpush.msra.mxu0 %v1392
        %3045 = vmatpush.msra.mxu0 %v1391
        %3046 = vmatpush.msra.mxu0 %v1390
        %3047 = vmatpush.msra.mxu0 %v1389
        %3048 = vmatpush.msra.mxu0 %v1388
        %3049 = vmatpush.msra.mxu0 %v1387
        %3050 = vmatpush.msra.mxu0 %v1386
        %3051 = vmatpush.msra.mxu0 %v1385
        %3052 = vmatpush.msra.mxu0 %v1384
        %3053 = vmatpush.msra.mxu0 %v1383
        %3054 = vmatpush.msra.mxu0 %v1382
        %3055 = vmatmul.f32.gmra.mxu0 %v1615
        %v3056 = vpop.f32.mrf.mxu0
        %v3057 = vadd.f32 %v3037, %v3056
        %3058 = vdwg.mxu0
        %3059 = vmatpush.msra.mxu0 %v1413
        %3060 = vmatpush.msra.mxu0 %v1412
        %3061 = vmatpush.msra.mxu0 %v1411
        %3062 = vmatpush.msra.mxu0 %v1410
        %3063 = vmatpush.msra.mxu0 %v1409
        %3064 = vmatpush.msra.mxu0 %v1408
        %3065 = vmatpush.msra.mxu0 %v1407
        %3066 = vmatpush.msra.mxu0 %v1406
        %3067 = vmatpush.msra.mxu0 %v1405
        %3068 = vmatpush.msra.mxu0 %v1404
        %3069 = vmatpush.msra.mxu0 %v1403
        %3070 = vmatpush.msra.mxu0 %v1402
        %3071 = vmatpush.msra.mxu0 %v1401
        %3072 = vmatpush.msra.mxu0 %v1400
        %3073 = vmatpush.msra.mxu0 %v1399
        %3074 = vmatpush.msra.mxu0 %v1398
        %3075 = vmatmul.f32.gmra.mxu0 %v1616
        %v3076 = vpop.f32.mrf.mxu0
        %v3077 = vadd.f32 %v3057, %v3076
        %3078 = vdwg.mxu0
        %3079 = vmatpush.msra.mxu0 %v1429
        %3080 = vmatpush.msra.mxu0 %v1428
        %3081 = vmatpush.msra.mxu0 %v1427
        %3082 = vmatpush.msra.mxu0 %v1426
        %3083 = vmatpush.msra.mxu0 %v1425
        %3084 = vmatpush.msra.mxu0 %v1424
        %3085 = vmatpush.msra.mxu0 %v1423
        %3086 = vmatpush.msra.mxu0 %v1422
        %3087 = vmatpush.msra.mxu0 %v1421
        %3088 = vmatpush.msra.mxu0 %v1420
        %3089 = vmatpush.msra.mxu0 %v1419
        %3090 = vmatpush.msra.mxu0 %v1418
        %3091 = vmatpush.msra.mxu0 %v1417
        %3092 = vmatpush.msra.mxu0 %v1416
        %3093 = vmatpush.msra.mxu0 %v1415
        %3094 = vmatpush.msra.mxu0 %v1414
        %3095 = vmatmul.f32.gmra.mxu0 %v1617
        %v3096 = vpop.f32.mrf.mxu0
        %v3097 = vadd.f32 %v3077, %v3096
        %3098 = vdwg.mxu0
        %3099 = vmatpush.msra.mxu0 %v1445
        %3100 = vmatpush.msra.mxu0 %v1444
        %3101 = vmatpush.msra.mxu0 %v1443
        %3102 = vmatpush.msra.mxu0 %v1442
        %3103 = vmatpush.msra.mxu0 %v1441
        %3104 = vmatpush.msra.mxu0 %v1440
        %3105 = vmatpush.msra.mxu0 %v1439
        %3106 = vmatpush.msra.mxu0 %v1438
        %3107 = vmatpush.msra.mxu0 %v1437
        %3108 = vmatpush.msra.mxu0 %v1436
        %3109 = vmatpush.msra.mxu0 %v1435
        %3110 = vmatpush.msra.mxu0 %v1434
        %3111 = vmatpush.msra.mxu0 %v1433
        %3112 = vmatpush.msra.mxu0 %v1432
        %3113 = vmatpush.msra.mxu0 %v1431
        %3114 = vmatpush.msra.mxu0 %v1430
        %3115 = vmatmul.f32.gmra.mxu0 %v1618
        %v3116 = vpop.f32.mrf.mxu0
        %v3117 = vadd.f32 %v3097, %v3116
        %3118 = vdwg.mxu0
        %3119 = vmatpush.msra.mxu0 %v1461
        %3120 = vmatpush.msra.mxu0 %v1460
        %3121 = vmatpush.msra.mxu0 %v1459
        %3122 = vmatpush.msra.mxu0 %v1458
        %3123 = vmatpush.msra.mxu0 %v1457
        %3124 = vmatpush.msra.mxu0 %v1456
        %3125 = vmatpush.msra.mxu0 %v1455
        %3126 = vmatpush.msra.mxu0 %v1454
        %3127 = vmatpush.msra.mxu0 %v1453
        %3128 = vmatpush.msra.mxu0 %v1452
        %3129 = vmatpush.msra.mxu0 %v1451
        %3130 = vmatpush.msra.mxu0 %v1450
        %3131 = vmatpush.msra.mxu0 %v1449
        %3132 = vmatpush.msra.mxu0 %v1448
        %3133 = vmatpush.msra.mxu0 %v1447
        %3134 = vmatpush.msra.mxu0 %v1446
        %3135 = vmatmul.f32.gmra.mxu0 %v1619
        %v3136 = vpop.f32.mrf.mxu0
        %v3137 = vadd.f32 %v3117, %v3136
        %3138 = vdwg.mxu0
        %3139 = vmatpush.msra.mxu0 %v1477
        %3140 = vmatpush.msra.mxu0 %v1476
        %3141 = vmatpush.msra.mxu0 %v1475
        %3142 = vmatpush.msra.mxu0 %v1474
        %3143 = vmatpush.msra.mxu0 %v1473
        %3144 = vmatpush.msra.mxu0 %v1472
        %3145 = vmatpush.msra.mxu0 %v1471
        %3146 = vmatpush.msra.mxu0 %v1470
        %3147 = vmatpush.msra.mxu0 %v1469
        %3148 = vmatpush.msra.mxu0 %v1468
        %3149 = vmatpush.msra.mxu0 %v1467
        %3150 = vmatpush.msra.mxu0 %v1466
        %3151 = vmatpush.msra.mxu0 %v1465
        %3152 = vmatpush.msra.mxu0 %v1464
        %3153 = vmatpush.msra.mxu0 %v1463
        %3154 = vmatpush.msra.mxu0 %v1462
        %3155 = vmatmul.f32.gmra.mxu0 %v1621
        %v3156 = vpop.f32.mrf.mxu0
        %v3157 = vadd.f32 %v3137, %v3156
        %3158 = vdwg.mxu0
        %3159 = vmatpush.msra.mxu0 %v1493
        %3160 = vmatpush.msra.mxu0 %v1492
        %3161 = vmatpush.msra.mxu0 %v1491
        %3162 = vmatpush.msra.mxu0 %v1490
        %3163 = vmatpush.msra.mxu0 %v1489
        %3164 = vmatpush.msra.mxu0 %v1488
        %3165 = vmatpush.msra.mxu0 %v1487
        %3166 = vmatpush.msra.mxu0 %v1486
        %3167 = vmatpush.msra.mxu0 %v1485
        %3168 = vmatpush.msra.mxu0 %v1484
        %3169 = vmatpush.msra.mxu0 %v1483
        %3170 = vmatpush.msra.mxu0 %v1482
        %3171 = vmatpush.msra.mxu0 %v1481
        %3172 = vmatpush.msra.mxu0 %v1480
        %3173 = vmatpush.msra.mxu0 %v1479
        %3174 = vmatpush.msra.mxu0 %v1478
        %3175 = vmatmul.f32.gmra.mxu0 %v1622
        %v3176 = vpop.f32.mrf.mxu0
        %v3177 = vadd.f32 %v3157, %v3176
        %3178 = vdwg.mxu0
        %3179 = vmatpush.msra.mxu0 %v1509
        %3180 = vmatpush.msra.mxu0 %v1508
        %3181 = vmatpush.msra.mxu0 %v1507
        %3182 = vmatpush.msra.mxu0 %v1506
        %3183 = vmatpush.msra.mxu0 %v1505
        %3184 = vmatpush.msra.mxu0 %v1504
        %3185 = vmatpush.msra.mxu0 %v1503
        %3186 = vmatpush.msra.mxu0 %v1502
        %3187 = vmatpush.msra.mxu0 %v1501
        %3188 = vmatpush.msra.mxu0 %v1500
        %3189 = vmatpush.msra.mxu0 %v1499
        %3190 = vmatpush.msra.mxu0 %v1498
        %3191 = vmatpush.msra.mxu0 %v1497
        %3192 = vmatpush.msra.mxu0 %v1496
        %3193 = vmatpush.msra.mxu0 %v1495
        %3194 = vmatpush.msra.mxu0 %v1494
        %3195 = vmatmul.f32.gmra.mxu0 %v1623
        %v3196 = vpop.f32.mrf.mxu0
        %v3197 = vadd.f32 %v3177, %v3196
        %3198 = vdwg.mxu0
        %v3199 = vadd.f32 %v290, %v3197
        %3200 = vst [vmem:[#allocation2] sm:$0x3] %v3199
        %p3201 = scmp.eq.s32.totalorder %s21, 2
        // Predicated region
        $region57: #{net_forward.3} parent=39 // pred_check
          %p3202 = pneg %p3201
        $region58: #{net_forward.3} parent=39 // pred_check_branch
          %3204 = sbr.rel (%p3202) target = $region60
        $region59: #{net_forward.3} parent=39 // pred_region
          %v3205 = vld [vmem:[#allocation2] sm:$0x3]
          %v3206 = vld [vmem:[#allocation6] sm:$0x1]
          %v3208 = vperm.slane %v3206, 0
          %v3210 = vadd.f32 %v3205, %v3208
          %v3211 = vmax.f32 %v3210, 0.0
          %v3212 = vld [vmem:[%s3] sm:$0xff]
          %v3213 = vld [vmem:[%s3 + $0x8] sm:$0xff]
          %v3214 = vld [vmem:[%s3 + $0x10] sm:$0xff]
          %v3215 = vld [vmem:[%s3 + $0x18] sm:$0xff]
          %v3216 = vld [vmem:[%s3 + $0x20] sm:$0xff]
          %v3217 = vld [vmem:[%s3 + $0x28] sm:$0xff]
          %v3218 = vld [vmem:[%s3 + $0x30] sm:$0xff]
          %v3219 = vld [vmem:[%s3 + $0x38] sm:$0xff]
          %v3220 = vld [vmem:[%s3 + $0x40] sm:$0xff]
          %v3221 = vld [vmem:[%s3 + $0x48] sm:$0xff]
          %v3222 = vld [vmem:[%s3 + $0x50] sm:$0xff]
          %v3223 = vld [vmem:[%s3 + $0x58] sm:$0xff]
          %v3224 = vld [vmem:[%s3 + $0x60] sm:$0xff]
          %v3225 = vld [vmem:[%s3 + $0x68] sm:$0xff]
          %v3226 = vld [vmem:[%s3 + $0x70] sm:$0xff]
          %v3227 = vld [vmem:[%s3 + $0x78] sm:$0xff]
          %v3228 = vld [vmem:[#allocation8] sm:$0x1]
          %v3230 = vperm.slane %v3228, 0
          %3232 = vmatpush.msra.mxu0 %v3227
          %3233 = vmatpush.msra.mxu0 %v3226
          %3234 = vmatpush.msra.mxu0 %v3225
          %3235 = vmatpush.msra.mxu0 %v3224
          %3236 = vmatpush.msra.mxu0 %v3223
          %3237 = vmatpush.msra.mxu0 %v3222
          %3238 = vmatpush.msra.mxu0 %v3221
          %3239 = vmatpush.msra.mxu0 %v3220
          %3240 = vmatpush.msra.mxu0 %v3219
          %3241 = vmatpush.msra.mxu0 %v3218
          %3242 = vmatpush.msra.mxu0 %v3217
          %3243 = vmatpush.msra.mxu0 %v3216
          %3244 = vmatpush.msra.mxu0 %v3215
          %3245 = vmatpush.msra.mxu0 %v3214
          %3246 = vmatpush.msra.mxu0 %v3213
          %3247 = vmatpush.msra.mxu0 %v3212
          %3248 = vmatmul.f32.gmra.mxu0 %v3211
          %v3249 = vpop.f32.mrf.mxu0
          %v3250 = vadd.f32 %v3230, %v3249
          %3251 = vdwg.mxu0
          %vm3252 = vcmask 74752
          %3253 = vst.msk [vmem:[#allocation9] sm:$0x3] %vm3252, %v3250
        $region60: #{net_forward.3} parent=39 // pred_fallthru
          _
        // Predicated region
        $region61: #{net_forward.3} parent=39 // pred_check
          %p3254 = pneg %p149
        $region62: #{net_forward.3} parent=39 // pred_check_branch
          %3256 = sbr.rel (%p3254) target = $region64
        $region63: #{net_forward.3} parent=39 // pred_region
          %3258 = vsyncadd [#allocation5], 0
          %s3260 = sshll.u32 [#allocation9], 4
          %s3261 = int_to_ptr.vmem [resolvable:$true] %s3260
          %s3262 = sshll.u32 %s5, 4
          %s3263 = int_to_ptr.hbm [resolvable:$true] %s3262
          %3265 = dma.vmem_to_hbm [thread:$0]  %s3261, 32, %s3263, [#allocation5]
        $region64: #{net_forward.3} parent=39 // pred_fallthru
          _
        // Predicated region
        $region65: #{net_forward.3} parent=39 // pred_check
          %p3266 = pneg %p149
        $region66: #{net_forward.3} parent=39 // pred_check_branch
          %3268 = sbr.rel (%p3266) target = $region68
        $region67: #{net_forward.3} parent=39 // pred_region
          %3270 = dma.done [#allocation5], 32
        $region68: #{net_forward.3} parent=39 // pred_fallthru
          _
      $region40: #{net_forward.3} parent=5 // pred_fallthru
        _
      %p3271 = scmp.le.s32.totalorder 2, %s16
      // Predicated region
      $region69: #{net_forward.3} parent=5 // pred_check
        %p3272 = pneg %p3271
      $region70: #{net_forward.3} parent=5 // pred_check_branch
        %3274 = sbr.rel (%p3272) target = $region72
      $region71: #{net_forward.3} parent=5 // pred_region
        %s3275 = ssub.s32 %s16, 2
      $region72: #{net_forward.3} parent=5 // pred_fallthru
        _
    $region6: #{net_forward.3} parent=1 // loop_footer
      %s20 = sadd.s32 1, %s16
    $region7: #{net_forward.3} parent=1 // loop_footer_branch
      %15 = sbr.rel target = $region3
    $region8: #{net_forward.3} parent=1 // loop_exit
      _
    %3276 = vsyncpa [#allocation4], 1
    %s3277 = scalar_lea.sflag [#allocation4], 1
    %3278 = vsyncpa %s3277, 1
    %3279 = vsyncpa [#allocation7], 1
    %3280 = vsyncpa [#allocation5], 1
    %s3281 = scalar_lea.sflag [#allocation5], 1
    %3282 = vsyncpa %s3281, 1

</llo_original>
